<compile_context>
chip_gen: v7x
topology: tpu7x:2x2x1
jax: 0.10.0
libtpu: 0.0.40
codegen_flags: <defaults>
</compile_context>

<pallas_src>
import functools

import jax
import jax.numpy as jnp
import numpy as np
from jax.experimental import pallas as pl
from jax.experimental.pallas import tpu as pltpu

LANE = 128                       # channel dims padded to multiples of this
TM_TARGET = 256                  # rows per M tile
TN_TARGET = 128                  # output-channel tile (multiple of 128)
TK_TARGET = 128                  # reduction (K) tile
VMEM_LIMIT = 32 * 1024 * 1024    # fits v5e/v6e scoped and v7x 64 MiB physical


def _round_up(v, m):
    return ((v + m - 1) // m) * m


def _pick_tm(m):
    return min(TM_TARGET, _round_up(m, 8))


# ----------------------------------------------------------------------------
# Kernel 1: fused matmul + BN-statistics epilogue (+ optional BN/ReLU prologue)
# ----------------------------------------------------------------------------
def _mm_bn_stats_kernel(*refs, nsteps_k, prologue, relu_in, m_real):
    """grid = (M/tm, N/tn, K/tk); K is a sequential reduction into an f32 VMEM
    accumulator.  On the last K step the raw (bf16) conv output and per-tile
    per-channel sum / sum-of-squares partials are written."""
    if prologue:
        x_ref, w_ref, s_ref, b_ref, o_ref, sum_ref, ssq_ref, acc_ref = refs
    else:
        x_ref, w_ref, o_ref, sum_ref, ssq_ref, acc_ref = refs

    k = pl.program_id(2)

    @pl.when(k == 0)
    def _():
        acc_ref[...] = jnp.zeros_like(acc_ref)

    if prologue:
        # BN(+ReLU) of the previous conv, fused into this matmul's input read.
        xv = x_ref[...].astype(jnp.float32) * s_ref[...] + b_ref[...]
        if relu_in:
            xv = jnp.maximum(xv, 0.0)
        # Zero out padded rows so they cannot pollute this conv's BN stats.
        rows = (jax.lax.broadcasted_iota(jnp.int32, xv.shape, 0)
                + pl.program_id(0) * xv.shape[0])
        xv = jnp.where(rows < m_real, xv, 0.0).astype(jnp.bfloat16)
    else:
        xv = x_ref[...]          # padded rows are already exactly zero

    acc_ref[...] += jnp.dot(xv, w_ref[...], preferred_element_type=jnp.float32)

    @pl.when(k == nsteps_k - 1)
    def _():
        acc = acc_ref[...]
        o_ref[...] = acc.astype(o_ref.dtype)
        s = jnp.sum(acc, axis=0, keepdims=True)             # (1, tn)
        q = jnp.sum(acc * acc, axis=0, keepdims=True)
        sum_ref[...] = jnp.broadcast_to(s, sum_ref.shape)   # replicated (8, tn)
        ssq_ref[...] = jnp.broadcast_to(q, ssq_ref.shape)


def conv_matmul_bn_stats(x, w, *, scale_in=None, shift_in=None, relu_in=False,
                         m_real=None):
    """x:(M,Kp) bf16, w:(Kp,Np) bf16 -> (raw (Mp,Np) bf16, psum, pssq (gm,Np) f32).
    Rows >= m_real are padding and are excluded from the BN statistics."""
    m_in, kp = x.shape
    kp2, np_ = w.shape
    assert kp == kp2 and kp % LANE == 0 and np_ % LANE == 0
    if m_real is None:
        m_real = m_in

    tm = _pick_tm(m_in)
    tk = min(TK_TARGET, kp)
    tn = min(TN_TARGET, np_)
    mp = _round_up(m_in, tm)
    if mp != m_in:
        x = jnp.pad(x, ((0, mp - m_in), (0, 0)))
    gm, gn, gk = mp // tm, np_ // tn, kp // tk

    prologue = scale_in is not None
    kernel = functools.partial(_mm_bn_stats_kernel, nsteps_k=gk,
                               prologue=prologue, relu_in=relu_in,
                               m_real=m_real)

    in_specs = [pl.BlockSpec((tm, tk), lambda i, j, k: (i, k)),
                pl.BlockSpec((tk, tn), lambda i, j, k: (k, j))]
    args = [x, w]
    if prologue:
        in_specs += [pl.BlockSpec((1, tk), lambda i, j, k: (0, k)),
                     pl.BlockSpec((1, tk), lambda i, j, k: (0, k))]
        args += [scale_in, shift_in]

    raw, psum, pssq = pl.pallas_call(
        kernel,
        out_shape=(jax.ShapeDtypeStruct((mp, np_), jnp.bfloat16),
                   jax.ShapeDtypeStruct((8 * gm, np_), jnp.float32),
                   jax.ShapeDtypeStruct((8 * gm, np_), jnp.float32)),
        grid=(gm, gn, gk),
        in_specs=in_specs,
        out_specs=(pl.BlockSpec((tm, tn), lambda i, j, k: (i, j)),
                   pl.BlockSpec((8, tn), lambda i, j, k: (i, j)),
                   pl.BlockSpec((8, tn), lambda i, j, k: (i, j))),
        scratch_shapes=[pltpu.VMEM((tm, tn), jnp.float32)],
        compiler_params=pltpu.CompilerParams(
            dimension_semantics=("parallel", "parallel", "arbitrary"),
            vmem_limit_bytes=VMEM_LIMIT),
    )(*args)
    # Partials are replicated across 8 sublanes; keep one copy per M tile.
    psum = psum.reshape(gm, 8, np_)[:, 0, :]
    pssq = pssq.reshape(gm, 8, np_)[:, 0, :]
    return raw, psum, pssq


def bn_scale_shift(psum, pssq, gamma_p, beta_p, m_real, eps=1e-5):
    """Training-mode BN (biased variance) finalize from per-tile partials.
    NOTE: var = E[x^2]-E[x]^2 in f32 (guarded >= 0); fine at these scales.
    TODO(synk): switch to a centered two-pass / Welford combine for very large
    M with large activation means."""
    mean = jnp.sum(psum, axis=0, keepdims=True) / m_real
    var = jnp.maximum(jnp.sum(pssq, axis=0, keepdims=True) / m_real - mean * mean, 0.0)
    inv = jax.lax.rsqrt(var + eps)
    scale = gamma_p * inv
    shift = beta_p - mean * scale
    return scale, shift


# ----------------------------------------------------------------------------
# Kernel 2: fused BN3 + BN_identity + residual add + ReLU
# ----------------------------------------------------------------------------
def _bn_add_relu_kernel(a_ref, b_ref, sa_ref, ba_ref, sb_ref, bb_ref, o_ref):
    a = a_ref[...].astype(jnp.float32) * sa_ref[...] + ba_ref[...]
    b = b_ref[...].astype(jnp.float32) * sb_ref[...] + bb_ref[...]
    o_ref[...] = jnp.maximum(a + b, 0.0)


def bn_add_relu(a, b, sa, ba, sb, bb):
    """relu(bn(a) + bn(b)), tiled over M with lane-dense channel blocks."""
    mp, cp = a.shape
    assert b.shape == (mp, cp)
    tm = min(TM_TARGET, mp)
    assert mp % tm == 0
    vec = pl.BlockSpec((1, cp), lambda i: (0, 0))
    return pl.pallas_call(
        _bn_add_relu_kernel,
        out_shape=jax.ShapeDtypeStruct((mp, cp), jnp.float32),
        grid=(mp // tm,),
        in_specs=[pl.BlockSpec((tm, cp), lambda i: (i, 0)),
                  pl.BlockSpec((tm, cp), lambda i: (i, 0)),
                  vec, vec, vec, vec],
        out_specs=pl.BlockSpec((tm, cp), lambda i: (i, 0)),
        compiler_params=pltpu.CompilerParams(
            dimension_semantics=("parallel",),
            vmem_limit_bytes=VMEM_LIMIT),
    )(a, b, sa, ba, sb, bb)


# ----------------------------------------------------------------------------
# JAX-level glue (layout prep done once, im2col gather for the 3x3 conv)
# ----------------------------------------------------------------------------
def prepare_params(params, downsample):
    """One-time weight/param layout prep (outside the hot path): 1x1 convs ->
    (Cin_p, Cout_p), 3x3 conv -> (9*Cin_p, Cout_p) in (kh, kw, cin) order, all
    bf16 with channel dims padded to multiples of 128; gamma/beta -> (1, C_p) f32."""
    mid, cin = params["w1"].shape[:2]
    cout = params["w3"].shape[0]
    cin_p, mid_p, cout_p = (_round_up(c, LANE) for c in (cin, mid, cout))

    def mat(w, kp, np_):                        # (O, I, 1, 1) -> padded (I_p, O_p)
        o, i = w.shape[:2]
        return jnp.pad(w.reshape(o, i).T,
                       ((0, kp - i), (0, np_ - o))).astype(jnp.bfloat16)

    def vec(v, cp):
        return jnp.pad(v.reshape(1, -1),
                       ((0, 0), (0, cp - v.shape[0]))).astype(jnp.float32)

    w2 = jnp.transpose(params["w2"], (2, 3, 1, 0))          # (kh, kw, cin, cout)
    w2 = jnp.pad(w2, ((0, 0), (0, 0), (0, mid_p - mid), (0, mid_p - mid)))
    prep = {
        "w1": mat(params["w1"], cin_p, mid_p),
        "w2": w2.reshape(9 * mid_p, mid_p).astype(jnp.bfloat16),
        "w3": mat(params["w3"], mid_p, cout_p),
        "g1": vec(params["g1"], mid_p), "b1": vec(params["b1"], mid_p),
        "g2": vec(params["g2"], mid_p), "b2": vec(params["b2"], mid_p),
        "g3": vec(params["g3"], cout_p), "b3": vec(params["b3"], cout_p),
    }
    if downsample:
        prep["wd"] = mat(params["wd"], cin_p, cout_p)
        prep["gd"] = vec(params["gd"], cout_p)
        prep["bd"] = vec(params["bd"], cout_p)
    return prep


def _im2col_3x3(x_nhwc, stride):
    """3x3 / pad=1 / stride=s im2col -> (N*Ho*Wo, 9*C), (kh, kw, c) order."""
    N, H, W, C = x_nhwc.shape
    xp = jnp.pad(x_nhwc, ((0, 0), (1, 1), (1, 1), (0, 0)))
    Ho = (H - 1) // stride + 1
    Wo = (W - 1) // stride + 1
    cols = [xp[:, kh:kh + (Ho - 1) * stride + 1:stride,
                  kw:kw + (Wo - 1) * stride + 1:stride, :]
            for kh in range(3) for kw in range(3)]
    return jnp.stack(cols, axis=3).reshape(N * Ho * Wo, 9 * C)


@functools.partial(jax.jit, static_argnames=("stride", "downsample", "out_channels"))
def bottleneck_forward(x_nchw, prep, *, stride, downsample, out_channels):
    """Pallas implementation of BottleneckBlock.forward (NCHW in / NCHW out)."""
    N, cin, H, W = x_nchw.shape
    cin_p, mid_p = prep["w1"].shape
    cout_p = prep["w3"].shape[1]

    # NCHW -> NHWC, pad channels to a lane-dense multiple of 128, cast to bf16.
    x = jnp.transpose(x_nchw, (0, 2, 3, 1))
    x = jnp.pad(x, ((0, 0), (0, 0), (0, 0), (0, cin_p - cin))).astype(jnp.bfloat16)

    Ho = (H - 1) // stride + 1
    Wo = (W - 1) // stride + 1
    M1 = N * H * W
    M2 = N * Ho * Wo

    # ---- conv1 (1x1) with BN1 statistics fused into the matmul epilogue ----
    raw1, s1, q1 = conv_matmul_bn_stats(x.reshape(M1, cin_p), prep["w1"])
    scale1, shift1 = bn_scale_shift(s1, q1, prep["g1"], prep["b1"], float(M1))

    # ---- BN1-normalize + ReLU + zero-pad + im2col (one XLA fusion, bf16) ----
    # TODO(synk): fold this 3x3 gather into the conv2 kernel (kh/kw grid axis
    # with shifted-window DMAs) so the 9x patch buffer never hits HBM.
    act1 = jnp.maximum(raw1[:M1].astype(jnp.float32) * scale1 + shift1, 0.0)
    act1 = act1.astype(jnp.bfloat16).reshape(N, H, W, mid_p)
    patches = _im2col_3x3(act1, stride)                        # (M2, 9*mid_p)

    # ---- conv2 (3x3 as matmul) + BN2 statistics ----
    raw2, s2, q2 = conv_matmul_bn_stats(patches, prep["w2"])
    scale2, shift2 = bn_scale_shift(s2, q2, prep["g2"], prep["b2"], float(M2))

    # ---- conv3 (1x1) with BN2-normalize+ReLU fused as its prologue ----
    raw3, s3, q3 = conv_matmul_bn_stats(raw2, prep["w3"], scale_in=scale2,
                                        shift_in=shift2, relu_in=True,
                                        m_real=M2)
    scale3, shift3 = bn_scale_shift(s3, q3, prep["g3"], prep["b3"], float(M2))

    # ---- identity / downsample branch ----
    if downsample:
        # 1x1 stride-s conv == matmul on the spatially sub-sampled input.
        xs = x[:, ::stride, ::stride, :].reshape(M2, cin_p)
        rawd, sd, qd = conv_matmul_bn_stats(xs, prep["wd"])
        scale_i, shift_i = bn_scale_shift(sd, qd, prep["gd"], prep["bd"], float(M2))
        ident = rawd
    else:
        assert cin == out_channels and stride == 1, (
            "identity path requires cin == cout and stride == 1")
        ident = jnp.pad(x.reshape(M1, cin_p),
                        ((0, raw3.shape[0] - M1), (0, 0)))
        scale_i = jnp.ones((1, cout_p), jnp.float32)
        shift_i = jnp.zeros((1, cout_p), jnp.float32)

    # ---- fused BN3 + BN_identity + residual add + ReLU ----
    y = bn_add_relu(raw3, ident, scale3, shift3, scale_i, shift_i)
    y = y[:M2, :out_channels].reshape(N, Ho, Wo, out_channels)
    return jnp.transpose(y, (0, 3, 1, 2))       # back to NCHW (PyTorch layout)


# ----------------------------------------------------------------------------
# Pure-JAX reference (sanity check only)
# ----------------------------------------------------------------------------
def reference_forward(x, params, *, stride, downsample, eps=1e-5):
    def conv(x, w, s, pad):
        return jax.lax.conv_general_dilated(
            x, w, window_strides=(s, s), padding=pad,
            dimension_numbers=("NCHW", "OIHW", "NCHW"),
            precision=jax.lax.Precision.HIGHEST)

    def bn(x, g, b):
        mean = jnp.mean(x, axis=(0, 2, 3), keepdims=True)
        var = jnp.mean((x - mean) ** 2, axis=(0, 2, 3), keepdims=True)
        return ((x - mean) / jnp.sqrt(var + eps)
                * g.reshape(1, -1, 1, 1) + b.reshape(1, -1, 1, 1))

    out = jax.nn.relu(bn(conv(x, params["w1"], 1, "VALID"),
                         params["g1"], params["b1"]))
    out = jax.nn.relu(bn(conv(out, params["w2"], stride, ((1, 1), (1, 1))),
                         params["g2"], params["b2"]))
    out = bn(conv(out, params["w3"], 1, "VALID"), params["g3"], params["b3"])
    ident = x
    if downsample:
        ident = bn(conv(x, params["wd"], stride, "VALID"),
                   params["gd"], params["bd"])
    return jax.nn.relu(out + ident)


# ----------------------------------------------------------------------------
# Main
# ----------------------------------------------------------------------------
def make_params(key, in_ch, mid_ch, out_ch, downsample):
    ks = jax.random.split(key, 12)
    p = {
        "w1": 0.1 * jax.random.normal(ks[0], (mid_ch, in_ch, 1, 1), jnp.float32),
        "g1": 1.0 + 0.1 * jax.random.normal(ks[1], (mid_ch,), jnp.float32),
        "b1": 0.1 * jax.random.normal(ks[2], (mid_ch,), jnp.float32),
        "w2": 0.1 * jax.random.normal(ks[3], (mid_ch, mid_ch, 3, 3), jnp.float32),
        "g2": 1.0 + 0.1 * jax.random.normal(ks[4], (mid_ch,), jnp.float32),
        "b2": 0.1 * jax.random.normal(ks[5], (mid_ch,), jnp.float32),
        "w3": 0.1 * jax.random.normal(ks[6], (out_ch, mid_ch, 1, 1), jnp.float32),
        "g3": 1.0 + 0.1 * jax.random.normal(ks[7], (out_ch,), jnp.float32),
        "b3": 0.1 * jax.random.normal(ks[8], (out_ch,), jnp.float32),
    }
    if downsample:
        p["wd"] = 0.1 * jax.random.normal(ks[9], (out_ch, in_ch, 1, 1), jnp.float32)
        p["gd"] = 1.0 + 0.1 * jax.random.normal(ks[10], (out_ch,), jnp.float32)
        p["bd"] = 0.1 * jax.random.normal(ks[11], (out_ch,), jnp.float32)
    return p


if __name__ == "__main__":
    # BottleneckBlock(in_channels=4, mid_channels=4, out_channels=16,
    #                 stride=2, downsample=True)
    in_ch, mid_ch, out_ch, stride, downsample = 4, 4, 16, 2, True

    key = jax.random.PRNGKey(0)
    kx, kp = jax.random.split(key)
    x = jax.random.normal(kx, (2, in_ch, 16, 16), jnp.float32)   # NCHW
    params = make_params(kp, in_ch, mid_ch, out_ch, downsample)
    prep = prepare_params(params, downsample)   # one-time layout/pad/bf16 prep

    y = bottleneck_forward(x, prep, stride=stride, downsample=downsample,
                           out_channels=out_ch)
    y = jax.block_until_ready(y)

    assert y.shape == (2, out_ch, 8, 8), y.shape
    assert bool(jnp.all(y >= 0.0))  # final ReLU

    y_ref = jax.block_until_ready(
        reference_forward(x, params, stride=stride, downsample=downsample))
    np.testing.assert_allclose(np.asarray(y), np.asarray(y_ref),
                               atol=5e-2, rtol=5e-2)

    print("KERNEL_OK")
</pallas_src>

<mosaic_0001>
module attributes {stable_mosaic.version = 11 : i64} {
  func.func @_mm_bn_stats_kernel(%arg0: i32, %arg1: i32, %arg2: i32, %arg3: memref<128x128xbf16, #tpu.memory_space<vmem>>, %arg4: memref<128x128xbf16, #tpu.memory_space<vmem>>, %arg5: memref<128x128xbf16, #tpu.memory_space<vmem>>, %arg6: memref<8x128xf32, #tpu.memory_space<vmem>>, %arg7: memref<8x128xf32, #tpu.memory_space<vmem>>, %arg8: memref<128x128xf32, #tpu.memory_space<vmem>>) attributes {dimension_semantics = [#tpu.dimension_semantics<parallel>, #tpu.dimension_semantics<parallel>, #tpu.dimension_semantics<arbitrary>], iteration_bounds = array<i64: 1, 1, 1>, scalar_prefetch = 0 : i64, scratch_operands = 1 : i64, tpu.core_type = #tpu.core_type<tc>, window_params = [{transform_indices = @transform_0, window_bounds = array<i64: 128, 128>}, {transform_indices = @transform_1, window_bounds = array<i64: 128, 128>}, {transform_indices = @transform_2, window_bounds = array<i64: 128, 128>}, {transform_indices = @transform_3, window_bounds = array<i64: 8, 128>}, {transform_indices = @transform_4, window_bounds = array<i64: 8, 128>}]} {
    %c0_i32 = arith.constant 0 : i32
    %0 = arith.cmpi eq, %arg2, %c0_i32 : i32
    %1 = arith.extui %0 : i1 to i32
    %c0_i32_0 = arith.constant 0 : i32
    %2 = arith.cmpi ne, %1, %c0_i32_0 : i32
    scf.if %2 {
      %cst_10 = arith.constant 0.000000e+00 : f32
      %12 = vector.broadcast %cst_10 : f32 to vector<128x128xf32>
      %c0_11 = arith.constant 0 : index
      %c0_12 = arith.constant 0 : index
      %13 = vector.load %arg8[%c0_11, %c0_12] : memref<128x128xf32, #tpu.memory_space<vmem>>, vector<128x128xf32>
      tpu.vector_store %arg8[%c0_11, %c0_12], %12 {strides = array<i32>} : memref<128x128xf32, #tpu.memory_space<vmem>>, vector<128x128xf32>,
    } else {
    }
    %c0 = arith.constant 0 : index
    %c0_1 = arith.constant 0 : index
    %3 = vector.load %arg3[%c0, %c0_1] : memref<128x128xbf16, #tpu.memory_space<vmem>>, vector<128x128xbf16>
    %c0_2 = arith.constant 0 : index
    %c0_3 = arith.constant 0 : index
    %4 = vector.load %arg8[%c0_2, %c0_3] : memref<128x128xf32, #tpu.memory_space<vmem>>, vector<128x128xf32>
    %c0_4 = arith.constant 0 : index
    %c0_5 = arith.constant 0 : index
    %5 = vector.load %arg4[%c0_4, %c0_5] : memref<128x128xbf16, #tpu.memory_space<vmem>>, vector<128x128xbf16>
    %cst = arith.constant dense<0.000000e+00> : vector<128x128xf32>
    %6 = tpu.matmul %3, %5, %cst {dimension_numbers = #tpu.dot_dimension_numbers<[1], [0], [0], [1], [0, 0, 1, 1], [], []>} : vector<128x128xbf16>, vector<128x128xbf16>, vector<128x128xf32> -> vector<128x128xf32>
    %7 = arith.addf %4, %6 : vector<128x128xf32>
    %c0_6 = arith.constant 0 : index
    %c0_7 = arith.constant 0 : index
    %8 = vector.load %arg8[%c0_6, %c0_7] : memref<128x128xf32, #tpu.memory_space<vmem>>, vector<128x128xf32>
    tpu.vector_store %arg8[%c0_6, %c0_7], %7 {strides = array<i32>} : memref<128x128xf32, #tpu.memory_space<vmem>>, vector<128x128xf32>,
    %c0_i32_8 = arith.constant 0 : i32
    %9 = arith.cmpi eq, %arg2, %c0_i32_8 : i32
    %10 = arith.extui %9 : i1 to i32
    %c0_i32_9 = arith.constant 0 : i32
    %11 = arith.cmpi ne, %10, %c0_i32_9 : i32
    scf.if %11 {
      %c0_10 = arith.constant 0 : index
      %c0_11 = arith.constant 0 : index
      %12 = vector.load %arg8[%c0_10, %c0_11] : memref<128x128xf32, #tpu.memory_space<vmem>>, vector<128x128xf32>
      %13 = arith.truncf %12 : vector<128x128xf32> to vector<128x128xbf16>
      %c0_12 = arith.constant 0 : index
      %c0_13 = arith.constant 0 : index
      %14 = vector.load %arg5[%c0_12, %c0_13] : memref<128x128xbf16, #tpu.memory_space<vmem>>, vector<128x128xbf16>
      tpu.vector_store %arg5[%c0_12, %c0_13], %13 {strides = array<i32>} : memref<128x128xbf16, #tpu.memory_space<vmem>>, vector<128x128xbf16>,
      %cst_14 = arith.constant dense<0.000000e+00> : vector<128xf32>
      %15 = vector.multi_reduction <add>, %12, %cst_14 [0] : vector<128x128xf32> to vector<128xf32>
      %16 = vector.shape_cast %15 : vector<128xf32> to vector<1x128xf32>
      %17 = arith.mulf %12, %12 : vector<128x128xf32>
      %cst_15 = arith.constant dense<0.000000e+00> : vector<128xf32>
      %18 = vector.multi_reduction <add>, %17, %cst_15 [0] : vector<128x128xf32> to vector<128xf32>
      %19 = vector.shape_cast %18 : vector<128xf32> to vector<1x128xf32>
      %20 = vector.shape_cast %16 : vector<1x128xf32> to vector<1x128xf32>
      %21 = vector.broadcast %20 : vector<1x128xf32> to vector<8x128xf32>
      %c0_16 = arith.constant 0 : index
      %c0_17 = arith.constant 0 : index
      %22 = vector.load %arg6[%c0_16, %c0_17] : memref<8x128xf32, #tpu.memory_space<vmem>>, vector<8x128xf32>
      tpu.vector_store %arg6[%c0_16, %c0_17], %21 {strides = array<i32>} : memref<8x128xf32, #tpu.memory_space<vmem>>, vector<8x128xf32>,
      %23 = vector.shape_cast %19 : vector<1x128xf32> to vector<1x128xf32>
      %24 = vector.broadcast %23 : vector<1x128xf32> to vector<8x128xf32>
      %c0_18 = arith.constant 0 : index
      %c0_19 = arith.constant 0 : index
      %25 = vector.load %arg7[%c0_18, %c0_19] : memref<8x128xf32, #tpu.memory_space<vmem>>, vector<8x128xf32>
      tpu.vector_store %arg7[%c0_18, %c0_19], %24 {strides = array<i32>} : memref<8x128xf32, #tpu.memory_space<vmem>>, vector<8x128xf32>,
    } else {
    }
    return
  }
  func.func @transform_0(%arg0: i32, %arg1: i32, %arg2: i32) -> (i32, i32) {
    %c0_i32 = arith.constant 0 : i32
    return %arg0, %arg2 : i32, i32
  }
  func.func @transform_1(%arg0: i32, %arg1: i32, %arg2: i32) -> (i32, i32) {
    %c0_i32 = arith.constant 0 : i32
    return %arg2, %arg1 : i32, i32
  }
  func.func @transform_2(%arg0: i32, %arg1: i32, %arg2: i32) -> (i32, i32) {
    %c0_i32 = arith.constant 0 : i32
    return %arg0, %arg1 : i32, i32
  }
  func.func @transform_3(%arg0: i32, %arg1: i32, %arg2: i32) -> (i32, i32) {
    %c0_i32 = arith.constant 0 : i32
    return %arg0, %arg1 : i32, i32
  }
  func.func @transform_4(%arg0: i32, %arg1: i32, %arg2: i32) -> (i32, i32) {
    %c0_i32 = arith.constant 0 : i32
    return %arg0, %arg1 : i32, i32
  }
}

module attributes {stable_mosaic.version = 11 : i64} {
  func.func @_mm_bn_stats_kernel(%arg0: i32, %arg1: i32, %arg2: i32, %arg3: memref<256x128xbf16, #tpu.memory_space<vmem>>, %arg4: memref<128x128xbf16, #tpu.memory_space<vmem>>, %arg5: memref<256x128xbf16, #tpu.memory_space<vmem>>, %arg6: memref<8x128xf32, #tpu.memory_space<vmem>>, %arg7: memref<8x128xf32, #tpu.memory_space<vmem>>, %arg8: memref<256x128xf32, #tpu.memory_space<vmem>>) attributes {dimension_semantics = [#tpu.dimension_semantics<parallel>, #tpu.dimension_semantics<parallel>, #tpu.dimension_semantics<arbitrary>], iteration_bounds = array<i64: 2, 1, 1>, scalar_prefetch = 0 : i64, scratch_operands = 1 : i64, tpu.core_type = #tpu.core_type<tc>, window_params = [{transform_indices = @transform_0, window_bounds = array<i64: 256, 128>}, {transform_indices = @transform_1, window_bounds = array<i64: 128, 128>}, {transform_indices = @transform_2, window_bounds = array<i64: 256, 128>}, {transform_indices = @transform_3, window_bounds = array<i64: 8, 128>}, {transform_indices = @transform_4, window_bounds = array<i64: 8, 128>}]} {
    %c0_i32 = arith.constant 0 : i32
    %0 = arith.cmpi eq, %arg2, %c0_i32 : i32
    %1 = arith.extui %0 : i1 to i32
    %c0_i32_0 = arith.constant 0 : i32
    %2 = arith.cmpi ne, %1, %c0_i32_0 : i32
    scf.if %2 {
      %cst_10 = arith.constant 0.000000e+00 : f32
      %12 = vector.broadcast %cst_10 : f32 to vector<256x128xf32>
      %c0_11 = arith.constant 0 : index
      %c0_12 = arith.constant 0 : index
      %13 = vector.load %arg8[%c0_11, %c0_12] : memref<256x128xf32, #tpu.memory_space<vmem>>, vector<256x128xf32>
      tpu.vector_store %arg8[%c0_11, %c0_12], %12 {strides = array<i32>} : memref<256x128xf32, #tpu.memory_space<vmem>>, vector<256x128xf32>,
    } else {
    }
    %c0 = arith.constant 0 : index
    %c0_1 = arith.constant 0 : index
    %3 = vector.load %arg3[%c0, %c0_1] : memref<256x128xbf16, #tpu.memory_space<vmem>>, vector<256x128xbf16>
    %c0_2 = arith.constant 0 : index
    %c0_3 = arith.constant 0 : index
    %4 = vector.load %arg8[%c0_2, %c0_3] : memref<256x128xf32, #tpu.memory_space<vmem>>, vector<256x128xf32>
    %c0_4 = arith.constant 0 : index
    %c0_5 = arith.constant 0 : index
    %5 = vector.load %arg4[%c0_4, %c0_5] : memref<128x128xbf16, #tpu.memory_space<vmem>>, vector<128x128xbf16>
    %cst = arith.constant dense<0.000000e+00> : vector<256x128xf32>
    %6 = tpu.matmul %3, %5, %cst {dimension_numbers = #tpu.dot_dimension_numbers<[1], [0], [0], [1], [0, 0, 1, 1], [], []>} : vector<256x128xbf16>, vector<128x128xbf16>, vector<256x128xf32> -> vector<256x128xf32>
    %7 = arith.addf %4, %6 : vector<256x128xf32>
    %c0_6 = arith.constant 0 : index
    %c0_7 = arith.constant 0 : index
    %8 = vector.load %arg8[%c0_6, %c0_7] : memref<256x128xf32, #tpu.memory_space<vmem>>, vector<256x128xf32>
    tpu.vector_store %arg8[%c0_6, %c0_7], %7 {strides = array<i32>} : memref<256x128xf32, #tpu.memory_space<vmem>>, vector<256x128xf32>,
    %c0_i32_8 = arith.constant 0 : i32
    %9 = arith.cmpi eq, %arg2, %c0_i32_8 : i32
    %10 = arith.extui %9 : i1 to i32
    %c0_i32_9 = arith.constant 0 : i32
    %11 = arith.cmpi ne, %10, %c0_i32_9 : i32
    scf.if %11 {
      %c0_10 = arith.constant 0 : index
      %c0_11 = arith.constant 0 : index
      %12 = vector.load %arg8[%c0_10, %c0_11] : memref<256x128xf32, #tpu.memory_space<vmem>>, vector<256x128xf32>
      %13 = arith.truncf %12 : vector<256x128xf32> to vector<256x128xbf16>
      %c0_12 = arith.constant 0 : index
      %c0_13 = arith.constant 0 : index
      %14 = vector.load %arg5[%c0_12, %c0_13] : memref<256x128xbf16, #tpu.memory_space<vmem>>, vector<256x128xbf16>
      tpu.vector_store %arg5[%c0_12, %c0_13], %13 {strides = array<i32>} : memref<256x128xbf16, #tpu.memory_space<vmem>>, vector<256x128xbf16>,
      %cst_14 = arith.constant dense<0.000000e+00> : vector<128xf32>
      %15 = vector.multi_reduction <add>, %12, %cst_14 [0] : vector<256x128xf32> to vector<128xf32>
      %16 = vector.shape_cast %15 : vector<128xf32> to vector<1x128xf32>
      %17 = arith.mulf %12, %12 : vector<256x128xf32>
      %cst_15 = arith.constant dense<0.000000e+00> : vector<128xf32>
      %18 = vector.multi_reduction <add>, %17, %cst_15 [0] : vector<256x128xf32> to vector<128xf32>
      %19 = vector.shape_cast %18 : vector<128xf32> to vector<1x128xf32>
      %20 = vector.shape_cast %16 : vector<1x128xf32> to vector<1x128xf32>
      %21 = vector.broadcast %20 : vector<1x128xf32> to vector<8x128xf32>
      %c0_16 = arith.constant 0 : index
      %c0_17 = arith.constant 0 : index
      %22 = vector.load %arg6[%c0_16, %c0_17] : memref<8x128xf32, #tpu.memory_space<vmem>>, vector<8x128xf32>
      tpu.vector_store %arg6[%c0_16, %c0_17], %21 {strides = array<i32>} : memref<8x128xf32, #tpu.memory_space<vmem>>, vector<8x128xf32>,
      %23 = vector.shape_cast %19 : vector<1x128xf32> to vector<1x128xf32>
      %24 = vector.broadcast %23 : vector<1x128xf32> to vector<8x128xf32>
      %c0_18 = arith.constant 0 : index
      %c0_19 = arith.constant 0 : index
      %25 = vector.load %arg7[%c0_18, %c0_19] : memref<8x128xf32, #tpu.memory_space<vmem>>, vector<8x128xf32>
      tpu.vector_store %arg7[%c0_18, %c0_19], %24 {strides = array<i32>} : memref<8x128xf32, #tpu.memory_space<vmem>>, vector<8x128xf32>,
    } else {
    }
    return
  }
  func.func @transform_0(%arg0: i32, %arg1: i32, %arg2: i32) -> (i32, i32) {
    %c0_i32 = arith.constant 0 : i32
    return %arg0, %arg2 : i32, i32
  }
  func.func @transform_1(%arg0: i32, %arg1: i32, %arg2: i32) -> (i32, i32) {
    %c0_i32 = arith.constant 0 : i32
    return %arg2, %arg1 : i32, i32
  }
  func.func @transform_2(%arg0: i32, %arg1: i32, %arg2: i32) -> (i32, i32) {
    %c0_i32 = arith.constant 0 : i32
    return %arg0, %arg1 : i32, i32
  }
  func.func @transform_3(%arg0: i32, %arg1: i32, %arg2: i32) -> (i32, i32) {
    %c0_i32 = arith.constant 0 : i32
    return %arg0, %arg1 : i32, i32
  }
  func.func @transform_4(%arg0: i32, %arg1: i32, %arg2: i32) -> (i32, i32) {
    %c0_i32 = arith.constant 0 : i32
    return %arg0, %arg1 : i32, i32
  }
}

module attributes {stable_mosaic.version = 11 : i64} {
  func.func @_bn_add_relu_kernel(%arg0: i32, %arg1: memref<128x128xbf16, #tpu.memory_space<vmem>>, %arg2: memref<128x128xbf16, #tpu.memory_space<vmem>>, %arg3: memref<1x128xf32, #tpu.memory_space<vmem>>, %arg4: memref<1x128xf32, #tpu.memory_space<vmem>>, %arg5: memref<1x128xf32, #tpu.memory_space<vmem>>, %arg6: memref<1x128xf32, #tpu.memory_space<vmem>>, %arg7: memref<128x128xf32, #tpu.memory_space<vmem>>) attributes {dimension_semantics = [#tpu.dimension_semantics<parallel>], iteration_bounds = array<i64: 1>, scalar_prefetch = 0 : i64, scratch_operands = 0 : i64, tpu.core_type = #tpu.core_type<tc>, window_params = [{transform_indices = @transform_0, window_bounds = array<i64: 128, 128>}, {transform_indices = @transform_1, window_bounds = array<i64: 128, 128>}, {pipeline_mode = #tpu.pipeline_mode<synchronous>, transform_indices = @transform_2, window_bounds = array<i64: 1, 128>}, {pipeline_mode = #tpu.pipeline_mode<synchronous>, transform_indices = @transform_3, window_bounds = array<i64: 1, 128>}, {pipeline_mode = #tpu.pipeline_mode<synchronous>, transform_indices = @transform_4, window_bounds = array<i64: 1, 128>}, {pipeline_mode = #tpu.pipeline_mode<synchronous>, transform_indices = @transform_5, window_bounds = array<i64: 1, 128>}, {transform_indices = @transform_6, window_bounds = array<i64: 128, 128>}]} {
    %c0 = arith.constant 0 : index
    %c0_0 = arith.constant 0 : index
    %0 = vector.load %arg1[%c0, %c0_0] : memref<128x128xbf16, #tpu.memory_space<vmem>>, vector<128x128xbf16>
    %1 = arith.extf %0 : vector<128x128xbf16> to vector<128x128xf32>
    %c0_1 = arith.constant 0 : index
    %c0_2 = arith.constant 0 : index
    %2 = vector.load %arg3[%c0_1, %c0_2] : memref<1x128xf32, #tpu.memory_space<vmem>>, vector<1x128xf32>
    %3 = vector.broadcast %2 : vector<1x128xf32> to vector<128x128xf32>
    %4 = arith.mulf %1, %3 : vector<128x128xf32>
    %c0_3 = arith.constant 0 : index
    %c0_4 = arith.constant 0 : index
    %5 = vector.load %arg4[%c0_3, %c0_4] : memref<1x128xf32, #tpu.memory_space<vmem>>, vector<1x128xf32>
    %6 = vector.broadcast %5 : vector<1x128xf32> to vector<128x128xf32>
    %7 = arith.addf %4, %6 : vector<128x128xf32>
    %c0_5 = arith.constant 0 : index
    %c0_6 = arith.constant 0 : index
    %8 = vector.load %arg2[%c0_5, %c0_6] : memref<128x128xbf16, #tpu.memory_space<vmem>>, vector<128x128xbf16>
    %9 = arith.extf %8 : vector<128x128xbf16> to vector<128x128xf32>
    %c0_7 = arith.constant 0 : index
    %c0_8 = arith.constant 0 : index
    %10 = vector.load %arg5[%c0_7, %c0_8] : memref<1x128xf32, #tpu.memory_space<vmem>>, vector<1x128xf32>
    %11 = vector.broadcast %10 : vector<1x128xf32> to vector<128x128xf32>
    %12 = arith.mulf %9, %11 : vector<128x128xf32>
    %c0_9 = arith.constant 0 : index
    %c0_10 = arith.constant 0 : index
    %13 = vector.load %arg6[%c0_9, %c0_10] : memref<1x128xf32, #tpu.memory_space<vmem>>, vector<1x128xf32>
    %14 = vector.broadcast %13 : vector<1x128xf32> to vector<128x128xf32>
    %15 = arith.addf %12, %14 : vector<128x128xf32>
    %16 = arith.addf %7, %15 : vector<128x128xf32>
    %cst = arith.constant 0.000000e+00 : f32
    %17 = vector.broadcast %cst : f32 to vector<128x128xf32>
    %18 = arith.maximumf %16, %17 : vector<128x128xf32>
    %c0_11 = arith.constant 0 : index
    %c0_12 = arith.constant 0 : index
    %19 = vector.load %arg7[%c0_11, %c0_12] : memref<128x128xf32, #tpu.memory_space<vmem>>, vector<128x128xf32>
    tpu.vector_store %arg7[%c0_11, %c0_12], %18 {strides = array<i32>} : memref<128x128xf32, #tpu.memory_space<vmem>>, vector<128x128xf32>,
    return
  }
  func.func @transform_0(%arg0: i32) -> (i32, i32) {
    %c0_i32 = arith.constant 0 : i32
    %c0_i32_0 = arith.constant 0 : i32
    return %arg0, %c0_i32 : i32, i32
  }
  func.func @transform_1(%arg0: i32) -> (i32, i32) {
    %c0_i32 = arith.constant 0 : i32
    %c0_i32_0 = arith.constant 0 : i32
    return %arg0, %c0_i32 : i32, i32
  }
  func.func @transform_2(%arg0: i32) -> (i32, i32) {
    %c0_i32 = arith.constant 0 : i32
    %c0_i32_0 = arith.constant 0 : i32
    %c0_i32_1 = arith.constant 0 : i32
    return %c0_i32, %c0_i32_0 : i32, i32
  }
  func.func @transform_3(%arg0: i32) -> (i32, i32) {
    %c0_i32 = arith.constant 0 : i32
    %c0_i32_0 = arith.constant 0 : i32
    %c0_i32_1 = arith.constant 0 : i32
    return %c0_i32, %c0_i32_0 : i32, i32
  }
  func.func @transform_4(%arg0: i32) -> (i32, i32) {
    %c0_i32 = arith.constant 0 : i32
    %c0_i32_0 = arith.constant 0 : i32
    %c0_i32_1 = arith.constant 0 : i32
    return %c0_i32, %c0_i32_0 : i32, i32
  }
  func.func @transform_5(%arg0: i32) -> (i32, i32) {
    %c0_i32 = arith.constant 0 : i32
    %c0_i32_0 = arith.constant 0 : i32
    %c0_i32_1 = arith.constant 0 : i32
    return %c0_i32, %c0_i32_0 : i32, i32
  }
  func.func @transform_6(%arg0: i32) -> (i32, i32) {
    %c0_i32 = arith.constant 0 : i32
    %c0_i32_0 = arith.constant 0 : i32
    return %arg0, %c0_i32 : i32, i32
  }
}

module attributes {stable_mosaic.version = 11 : i64} {
  func.func @_mm_bn_stats_kernel(%arg0: i32, %arg1: i32, %arg2: i32, %arg3: memref<128x128xbf16, #tpu.memory_space<vmem>>, %arg4: memref<128x128xbf16, #tpu.memory_space<vmem>>, %arg5: memref<1x128xf32, #tpu.memory_space<vmem>>, %arg6: memref<1x128xf32, #tpu.memory_space<vmem>>, %arg7: memref<128x128xbf16, #tpu.memory_space<vmem>>, %arg8: memref<8x128xf32, #tpu.memory_space<vmem>>, %arg9: memref<8x128xf32, #tpu.memory_space<vmem>>, %arg10: memref<128x128xf32, #tpu.memory_space<vmem>>) attributes {dimension_semantics = [#tpu.dimension_semantics<parallel>, #tpu.dimension_semantics<parallel>, #tpu.dimension_semantics<arbitrary>], iteration_bounds = array<i64: 1, 1, 1>, scalar_prefetch = 0 : i64, scratch_operands = 1 : i64, tpu.core_type = #tpu.core_type<tc>, window_params = [{transform_indices = @transform_0, window_bounds = array<i64: 128, 128>}, {transform_indices = @transform_1, window_bounds = array<i64: 128, 128>}, {transform_indices = @transform_2, window_bounds = array<i64: 1, 128>}, {transform_indices = @transform_3, window_bounds = array<i64: 1, 128>}, {transform_indices = @transform_4, window_bounds = array<i64: 128, 128>}, {transform_indices = @transform_5, window_bounds = array<i64: 8, 128>}, {transform_indices = @transform_6, window_bounds = array<i64: 8, 128>}]} {
    %c0_i32 = arith.constant 0 : i32
    %0 = arith.cmpi eq, %arg2, %c0_i32 : i32
    %1 = arith.extui %0 : i1 to i32
    %c0_i32_0 = arith.constant 0 : i32
    %2 = arith.cmpi ne, %1, %c0_i32_0 : i32
    scf.if %2 {
      %cst_17 = arith.constant 0.000000e+00 : f32
      %30 = vector.broadcast %cst_17 : f32 to vector<128x128xf32>
      %c0_18 = arith.constant 0 : index
      %c0_19 = arith.constant 0 : index
      %31 = vector.load %arg10[%c0_18, %c0_19] : memref<128x128xf32, #tpu.memory_space<vmem>>, vector<128x128xf32>
      tpu.vector_store %arg10[%c0_18, %c0_19], %30 {strides = array<i32>} : memref<128x128xf32, #tpu.memory_space<vmem>>, vector<128x128xf32>,
    } else {
    }
    %c0 = arith.constant 0 : index
    %c0_1 = arith.constant 0 : index
    %3 = vector.load %arg3[%c0, %c0_1] : memref<128x128xbf16, #tpu.memory_space<vmem>>, vector<128x128xbf16>
    %4 = arith.extf %3 : vector<128x128xbf16> to vector<128x128xf32>
    %c0_2 = arith.constant 0 : index
    %c0_3 = arith.constant 0 : index
    %5 = vector.load %arg5[%c0_2, %c0_3] : memref<1x128xf32, #tpu.memory_space<vmem>>, vector<1x128xf32>
    %6 = vector.broadcast %5 : vector<1x128xf32> to vector<128x128xf32>
    %7 = arith.mulf %4, %6 : vector<128x128xf32>
    %c0_4 = arith.constant 0 : index
    %c0_5 = arith.constant 0 : index
    %8 = vector.load %arg6[%c0_4, %c0_5] : memref<1x128xf32, #tpu.memory_space<vmem>>, vector<1x128xf32>
    %9 = vector.broadcast %8 : vector<1x128xf32> to vector<128x128xf32>
    %10 = arith.addf %7, %9 : vector<128x128xf32>
    %cst = arith.constant 0.000000e+00 : f32
    %11 = vector.broadcast %cst : f32 to vector<128x128xf32>
    %12 = arith.maximumf %10, %11 : vector<128x128xf32>
    %13 = tpu.iota {dimensions = array<i32: 0>} : vector<128x128xi32>
    %c128_i32 = arith.constant 128 : i32
    %14 = arith.muli %arg0, %c128_i32 : i32
    %15 = vector.broadcast %14 : i32 to vector<128x128xi32>
    %16 = arith.addi %13, %15 : vector<128x128xi32>
    %c128_i32_6 = arith.constant 128 : i32
    %17 = vector.broadcast %c128_i32_6 : i32 to vector<128x128xi32>
    %18 = arith.cmpi slt, %16, %17 : vector<128x128xi32>
    %cst_7 = arith.constant 0.000000e+00 : f32
    %19 = vector.broadcast %cst_7 : f32 to vector<128x128xf32>
    %20 = arith.select %18, %12, %19 : vector<128x128xi1>, vector<128x128xf32>
    %21 = arith.truncf %20 : vector<128x128xf32> to vector<128x128xbf16>
    %c0_8 = arith.constant 0 : index
    %c0_9 = arith.constant 0 : index
    %22 = vector.load %arg10[%c0_8, %c0_9] : memref<128x128xf32, #tpu.memory_space<vmem>>, vector<128x128xf32>
    %c0_10 = arith.constant 0 : index
    %c0_11 = arith.constant 0 : index
    %23 = vector.load %arg4[%c0_10, %c0_11] : memref<128x128xbf16, #tpu.memory_space<vmem>>, vector<128x128xbf16>
    %cst_12 = arith.constant dense<0.000000e+00> : vector<128x128xf32>
    %24 = tpu.matmul %21, %23, %cst_12 {dimension_numbers = #tpu.dot_dimension_numbers<[1], [0], [0], [1], [0, 0, 1, 1], [], []>} : vector<128x128xbf16>, vector<128x128xbf16>, vector<128x128xf32> -> vector<128x128xf32>
    %25 = arith.addf %22, %24 : vector<128x128xf32>
    %c0_13 = arith.constant 0 : index
    %c0_14 = arith.constant 0 : index
    %26 = vector.load %arg10[%c0_13, %c0_14] : memref<128x128xf32, #tpu.memory_space<vmem>>, vector<128x128xf32>
    tpu.vector_store %arg10[%c0_13, %c0_14], %25 {strides = array<i32>} : memref<128x128xf32, #tpu.memory_space<vmem>>, vector<128x128xf32>,
    %c0_i32_15 = arith.constant 0 : i32
    %27 = arith.cmpi eq, %arg2, %c0_i32_15 : i32
    %28 = arith.extui %27 : i1 to i32
    %c0_i32_16 = arith.constant 0 : i32
    %29 = arith.cmpi ne, %28, %c0_i32_16 : i32
    scf.if %29 {
      %c0_17 = arith.constant 0 : index
      %c0_18 = arith.constant 0 : index
      %30 = vector.load %arg10[%c0_17, %c0_18] : memref<128x128xf32, #tpu.memory_space<vmem>>, vector<128x128xf32>
      %31 = arith.truncf %30 : vector<128x128xf32> to vector<128x128xbf16>
      %c0_19 = arith.constant 0 : index
      %c0_20 = arith.constant 0 : index
      %32 = vector.load %arg7[%c0_19, %c0_20] : memref<128x128xbf16, #tpu.memory_space<vmem>>, vector<128x128xbf16>
      tpu.vector_store %arg7[%c0_19, %c0_20], %31 {strides = array<i32>} : memref<128x128xbf16, #tpu.memory_space<vmem>>, vector<128x128xbf16>,
      %cst_21 = arith.constant dense<0.000000e+00> : vector<128xf32>
      %33 = vector.multi_reduction <add>, %30, %cst_21 [0] : vector<128x128xf32> to vector<128xf32>
      %34 = vector.shape_cast %33 : vector<128xf32> to vector<1x128xf32>
      %35 = arith.mulf %30, %30 : vector<128x128xf32>
      %cst_22 = arith.constant dense<0.000000e+00> : vector<128xf32>
      %36 = vector.multi_reduction <add>, %35, %cst_22 [0] : vector<128x128xf32> to vector<128xf32>
      %37 = vector.shape_cast %36 : vector<128xf32> to vector<1x128xf32>
      %38 = vector.shape_cast %34 : vector<1x128xf32> to vector<1x128xf32>
      %39 = vector.broadcast %38 : vector<1x128xf32> to vector<8x128xf32>
      %c0_23 = arith.constant 0 : index
      %c0_24 = arith.constant 0 : index
      %40 = vector.load %arg8[%c0_23, %c0_24] : memref<8x128xf32, #tpu.memory_space<vmem>>, vector<8x128xf32>
      tpu.vector_store %arg8[%c0_23, %c0_24], %39 {strides = array<i32>} : memref<8x128xf32, #tpu.memory_space<vmem>>, vector<8x128xf32>,
      %41 = vector.shape_cast %37 : vector<1x128xf32> to vector<1x128xf32>
      %42 = vector.broadcast %41 : vector<1x128xf32> to vector<8x128xf32>
      %c0_25 = arith.constant 0 : index
      %c0_26 = arith.constant 0 : index
      %43 = vector.load %arg9[%c0_25, %c0_26] : memref<8x128xf32, #tpu.memory_space<vmem>>, vector<8x128xf32>
      tpu.vector_store %arg9[%c0_25, %c0_26], %42 {strides = array<i32>} : memref<8x128xf32, #tpu.memory_space<vmem>>, vector<8x128xf32>,
    } else {
    }
    return
  }
  func.func @transform_0(%arg0: i32, %arg1: i32, %arg2: i32) -> (i32, i32) {
    %c0_i32 = arith.constant 0 : i32
    return %arg0, %arg2 : i32, i32
  }
  func.func @transform_1(%arg0: i32, %arg1: i32, %arg2: i32) -> (i32, i32) {
    %c0_i32 = arith.constant 0 : i32
    return %arg2, %arg1 : i32, i32
  }
  func.func @transform_2(%arg0: i32, %arg1: i32, %arg2: i32) -> (i32, i32) {
    %c0_i32 = arith.constant 0 : i32
    %c0_i32_0 = arith.constant 0 : i32
    return %c0_i32, %arg2 : i32, i32
  }
  func.func @transform_3(%arg0: i32, %arg1: i32, %arg2: i32) -> (i32, i32) {
    %c0_i32 = arith.constant 0 : i32
    %c0_i32_0 = arith.constant 0 : i32
    return %c0_i32, %arg2 : i32, i32
  }
  func.func @transform_4(%arg0: i32, %arg1: i32, %arg2: i32) -> (i32, i32) {
    %c0_i32 = arith.constant 0 : i32
    return %arg0, %arg1 : i32, i32
  }
  func.func @transform_5(%arg0: i32, %arg1: i32, %arg2: i32) -> (i32, i32) {
    %c0_i32 = arith.constant 0 : i32
    return %arg0, %arg1 : i32, i32
  }
  func.func @transform_6(%arg0: i32, %arg1: i32, %arg2: i32) -> (i32, i32) {
    %c0_i32 = arith.constant 0 : i32
    return %arg0, %arg1 : i32, i32
  }
}

module attributes {stable_mosaic.version = 11 : i64} {
  func.func @_mm_bn_stats_kernel(%arg0: i32, %arg1: i32, %arg2: i32, %arg3: memref<128x128xbf16, #tpu.memory_space<vmem>>, %arg4: memref<128x128xbf16, #tpu.memory_space<vmem>>, %arg5: memref<128x128xbf16, #tpu.memory_space<vmem>>, %arg6: memref<8x128xf32, #tpu.memory_space<vmem>>, %arg7: memref<8x128xf32, #tpu.memory_space<vmem>>, %arg8: memref<128x128xf32, #tpu.memory_space<vmem>>) attributes {dimension_semantics = [#tpu.dimension_semantics<parallel>, #tpu.dimension_semantics<parallel>, #tpu.dimension_semantics<arbitrary>], iteration_bounds = array<i64: 1, 1, 9>, scalar_prefetch = 0 : i64, scratch_operands = 1 : i64, tpu.core_type = #tpu.core_type<tc>, window_params = [{transform_indices = @transform_0, window_bounds = array<i64: 128, 128>}, {transform_indices = @transform_1, window_bounds = array<i64: 128, 128>}, {transform_indices = @transform_2, window_bounds = array<i64: 128, 128>}, {transform_indices = @transform_3, window_bounds = array<i64: 8, 128>}, {transform_indices = @transform_4, window_bounds = array<i64: 8, 128>}]} {
    %c0_i32 = arith.constant 0 : i32
    %0 = arith.cmpi eq, %arg2, %c0_i32 : i32
    %1 = arith.extui %0 : i1 to i32
    %c0_i32_0 = arith.constant 0 : i32
    %2 = arith.cmpi ne, %1, %c0_i32_0 : i32
    scf.if %2 {
      %cst_9 = arith.constant 0.000000e+00 : f32
      %12 = vector.broadcast %cst_9 : f32 to vector<128x128xf32>
      %c0_10 = arith.constant 0 : index
      %c0_11 = arith.constant 0 : index
      %13 = vector.load %arg8[%c0_10, %c0_11] : memref<128x128xf32, #tpu.memory_space<vmem>>, vector<128x128xf32>
      tpu.vector_store %arg8[%c0_10, %c0_11], %12 {strides = array<i32>} : memref<128x128xf32, #tpu.memory_space<vmem>>, vector<128x128xf32>,
    } else {
    }
    %c0 = arith.constant 0 : index
    %c0_1 = arith.constant 0 : index
    %3 = vector.load %arg3[%c0, %c0_1] : memref<128x128xbf16, #tpu.memory_space<vmem>>, vector<128x128xbf16>
    %c0_2 = arith.constant 0 : index
    %c0_3 = arith.constant 0 : index
    %4 = vector.load %arg8[%c0_2, %c0_3] : memref<128x128xf32, #tpu.memory_space<vmem>>, vector<128x128xf32>
    %c0_4 = arith.constant 0 : index
    %c0_5 = arith.constant 0 : index
    %5 = vector.load %arg4[%c0_4, %c0_5] : memref<128x128xbf16, #tpu.memory_space<vmem>>, vector<128x128xbf16>
    %cst = arith.constant dense<0.000000e+00> : vector<128x128xf32>
    %6 = tpu.matmul %3, %5, %cst {dimension_numbers = #tpu.dot_dimension_numbers<[1], [0], [0], [1], [0, 0, 1, 1], [], []>} : vector<128x128xbf16>, vector<128x128xbf16>, vector<128x128xf32> -> vector<128x128xf32>
    %7 = arith.addf %4, %6 : vector<128x128xf32>
    %c0_6 = arith.constant 0 : index
    %c0_7 = arith.constant 0 : index
    %8 = vector.load %arg8[%c0_6, %c0_7] : memref<128x128xf32, #tpu.memory_space<vmem>>, vector<128x128xf32>
    tpu.vector_store %arg8[%c0_6, %c0_7], %7 {strides = array<i32>} : memref<128x128xf32, #tpu.memory_space<vmem>>, vector<128x128xf32>,
    %c8_i32 = arith.constant 8 : i32
    %9 = arith.cmpi eq, %arg2, %c8_i32 : i32
    %10 = arith.extui %9 : i1 to i32
    %c0_i32_8 = arith.constant 0 : i32
    %11 = arith.cmpi ne, %10, %c0_i32_8 : i32
    scf.if %11 {
      %c0_9 = arith.constant 0 : index
      %c0_10 = arith.constant 0 : index
      %12 = vector.load %arg8[%c0_9, %c0_10] : memref<128x128xf32, #tpu.memory_space<vmem>>, vector<128x128xf32>
      %13 = arith.truncf %12 : vector<128x128xf32> to vector<128x128xbf16>
      %c0_11 = arith.constant 0 : index
      %c0_12 = arith.constant 0 : index
      %14 = vector.load %arg5[%c0_11, %c0_12] : memref<128x128xbf16, #tpu.memory_space<vmem>>, vector<128x128xbf16>
      tpu.vector_store %arg5[%c0_11, %c0_12], %13 {strides = array<i32>} : memref<128x128xbf16, #tpu.memory_space<vmem>>, vector<128x128xbf16>,
      %cst_13 = arith.constant dense<0.000000e+00> : vector<128xf32>
      %15 = vector.multi_reduction <add>, %12, %cst_13 [0] : vector<128x128xf32> to vector<128xf32>
      %16 = vector.shape_cast %15 : vector<128xf32> to vector<1x128xf32>
      %17 = arith.mulf %12, %12 : vector<128x128xf32>
      %cst_14 = arith.constant dense<0.000000e+00> : vector<128xf32>
      %18 = vector.multi_reduction <add>, %17, %cst_14 [0] : vector<128x128xf32> to vector<128xf32>
      %19 = vector.shape_cast %18 : vector<128xf32> to vector<1x128xf32>
      %20 = vector.shape_cast %16 : vector<1x128xf32> to vector<1x128xf32>
      %21 = vector.broadcast %20 : vector<1x128xf32> to vector<8x128xf32>
      %c0_15 = arith.constant 0 : index
      %c0_16 = arith.constant 0 : index
      %22 = vector.load %arg6[%c0_15, %c0_16] : memref<8x128xf32, #tpu.memory_space<vmem>>, vector<8x128xf32>
      tpu.vector_store %arg6[%c0_15, %c0_16], %21 {strides = array<i32>} : memref<8x128xf32, #tpu.memory_space<vmem>>, vector<8x128xf32>,
      %23 = vector.shape_cast %19 : vector<1x128xf32> to vector<1x128xf32>
      %24 = vector.broadcast %23 : vector<1x128xf32> to vector<8x128xf32>
      %c0_17 = arith.constant 0 : index
      %c0_18 = arith.constant 0 : index
      %25 = vector.load %arg7[%c0_17, %c0_18] : memref<8x128xf32, #tpu.memory_space<vmem>>, vector<8x128xf32>
      tpu.vector_store %arg7[%c0_17, %c0_18], %24 {strides = array<i32>} : memref<8x128xf32, #tpu.memory_space<vmem>>, vector<8x128xf32>,
    } else {
    }
    return
  }
  func.func @transform_0(%arg0: i32, %arg1: i32, %arg2: i32) -> (i32, i32) {
    %c0_i32 = arith.constant 0 : i32
    return %arg0, %arg2 : i32, i32
  }
  func.func @transform_1(%arg0: i32, %arg1: i32, %arg2: i32) -> (i32, i32) {
    %c0_i32 = arith.constant 0 : i32
    return %arg2, %arg1 : i32, i32
  }
  func.func @transform_2(%arg0: i32, %arg1: i32, %arg2: i32) -> (i32, i32) {
    %c0_i32 = arith.constant 0 : i32
    return %arg0, %arg1 : i32, i32
  }
  func.func @transform_3(%arg0: i32, %arg1: i32, %arg2: i32) -> (i32, i32) {
    %c0_i32 = arith.constant 0 : i32
    return %arg0, %arg1 : i32, i32
  }
  func.func @transform_4(%arg0: i32, %arg1: i32, %arg2: i32) -> (i32, i32) {
    %c0_i32 = arith.constant 0 : i32
    return %arg0, %arg1 : i32, i32
  }
}

</mosaic_0001>

<llo_original>
// kernel: bottleneck_forward.8
$region0: #{bottleneck_forward.8}
  #allocation0 [shape = 'u32[]', space=smem, size = 0x4, offset = 0x4, fixed_abs, tag = 'smem constant byte address 0x4 - core index']
  #allocation1 [shape = 'u32[144,128]{1,0:T(1,128)}', space=vmem, size = 0x12000, scoped, tag = 'internal scratch']
  #allocation2 [shape = 'f32[128,128]{1,0:T(8,128)}', space=vmem, size = 0x10000, scoped, tag = 'scratch operand']
  %s0 = inlined_call_operand.vmem [shape: bf16[128,128], index: 0, kind: input, shape index: {}]
  %s1 = inlined_call_operand.vmem [shape: bf16[128,128], index: 1, kind: input, shape index: {}]
  %s2 = inlined_call_operand.vmem [shape: bf16[128,128], index: 2, kind: output, shape index: {0}]
  %s3 = inlined_call_operand.vmem [shape: f32[8,128], index: 3, kind: output, shape index: {1}]
  %s4 = inlined_call_operand.vmem [shape: f32[8,128], index: 4, kind: output, shape index: {2}]
  %5 = xla_tuple %s2, %s3, %s4
  %s6 = sld [smem:[#allocation0]]
  $region42: #{bottleneck_forward.8} parent=0
    _
  %s8 = ssub.s32 1, %s6
  %s9 = scalar_select 0, %s8, %s6
  // Predicated region
  $region2: #{bottleneck_forward.8} parent=0 // pred_check
    _
  $region3: #{bottleneck_forward.8} parent=0 // pred_check_branch
    %11 = sbr.rel (0) target = $region5
  $region4: #{bottleneck_forward.8} parent=0 // pred_region
    _
  $region5: #{bottleneck_forward.8} parent=0 // pred_fallthru
    _
  // Predicated region
  $region6: #{bottleneck_forward.8} parent=0 // pred_check
    _
  $region7: #{bottleneck_forward.8} parent=0 // pred_check_branch
    %13 = sbr.rel (0) target = $region9
  $region8: #{bottleneck_forward.8} parent=0 // pred_region
    _
  $region9: #{bottleneck_forward.8} parent=0 // pred_fallthru
    _
  %p15 = scmp.eq.s32.totalorder 0, 0
  // Predicated region
  $region10: #{bottleneck_forward.8} parent=0 // pred_check
    %p16 = pneg %p15
  $region11: #{bottleneck_forward.8} parent=0 // pred_check_branch
    %18 = sbr.rel (%p16) target = $region13
  $region12: #{bottleneck_forward.8} parent=0 // pred_region
    %19 = vst [vmem:[#allocation2] sm:$0xff] 0.0
    %20 = vst [vmem:[#allocation2 + $0x8] sm:$0xff] 0.0
    %21 = vst [vmem:[#allocation2 + $0x10] sm:$0xff] 0.0
    %22 = vst [vmem:[#allocation2 + $0x18] sm:$0xff] 0.0
    %23 = vst [vmem:[#allocation2 + $0x20] sm:$0xff] 0.0
    %24 = vst [vmem:[#allocation2 + $0x28] sm:$0xff] 0.0
    %25 = vst [vmem:[#allocation2 + $0x30] sm:$0xff] 0.0
    %26 = vst [vmem:[#allocation2 + $0x38] sm:$0xff] 0.0
    %27 = vst [vmem:[#allocation2 + $0x40] sm:$0xff] 0.0
    %28 = vst [vmem:[#allocation2 + $0x48] sm:$0xff] 0.0
    %29 = vst [vmem:[#allocation2 + $0x50] sm:$0xff] 0.0
    %30 = vst [vmem:[#allocation2 + $0x58] sm:$0xff] 0.0
    %31 = vst [vmem:[#allocation2 + $0x60] sm:$0xff] 0.0
    %32 = vst [vmem:[#allocation2 + $0x68] sm:$0xff] 0.0
    %33 = vst [vmem:[#allocation2 + $0x70] sm:$0xff] 0.0
    %34 = vst [vmem:[#allocation2 + $0x78] sm:$0xff] 0.0
  $region13: #{bottleneck_forward.8} parent=0 // pred_fallthru
    _
  %v35 = vld [vmem:[%s0] sm:$0xf]
  %v36 = vld [vmem:[%s0 + $0x4] sm:$0xf]
  %v37 = vld [vmem:[%s0 + $0x8] sm:$0xf]
  %v38 = vld [vmem:[%s0 + $0xc] sm:$0xf]
  %v39 = vld [vmem:[%s0 + $0x10] sm:$0xf]
  %v40 = vld [vmem:[%s0 + $0x14] sm:$0xf]
  %v41 = vld [vmem:[%s0 + $0x18] sm:$0xf]
  %v42 = vld [vmem:[%s0 + $0x1c] sm:$0xf]
  %v43 = vld [vmem:[%s0 + $0x20] sm:$0xf]
  %v44 = vld [vmem:[%s0 + $0x24] sm:$0xf]
  %v45 = vld [vmem:[%s0 + $0x28] sm:$0xf]
  %v46 = vld [vmem:[%s0 + $0x2c] sm:$0xf]
  %v47 = vld [vmem:[%s0 + $0x30] sm:$0xf]
  %v48 = vld [vmem:[%s0 + $0x34] sm:$0xf]
  %v49 = vld [vmem:[%s0 + $0x38] sm:$0xf]
  %v50 = vld [vmem:[%s0 + $0x3c] sm:$0xf]
  %v51 = vld [vmem:[#allocation2] sm:$0xff]
  %v52 = vld [vmem:[#allocation2 + $0x8] sm:$0xff]
  %v53 = vld [vmem:[#allocation2 + $0x10] sm:$0xff]
  %v54 = vld [vmem:[#allocation2 + $0x18] sm:$0xff]
  %v55 = vld [vmem:[#allocation2 + $0x20] sm:$0xff]
  %v56 = vld [vmem:[#allocation2 + $0x28] sm:$0xff]
  %v57 = vld [vmem:[#allocation2 + $0x30] sm:$0xff]
  %v58 = vld [vmem:[#allocation2 + $0x38] sm:$0xff]
  %v59 = vld [vmem:[#allocation2 + $0x40] sm:$0xff]
  %v60 = vld [vmem:[#allocation2 + $0x48] sm:$0xff]
  %v61 = vld [vmem:[#allocation2 + $0x50] sm:$0xff]
  %v62 = vld [vmem:[#allocation2 + $0x58] sm:$0xff]
  %v63 = vld [vmem:[#allocation2 + $0x60] sm:$0xff]
  %v64 = vld [vmem:[#allocation2 + $0x68] sm:$0xff]
  %v65 = vld [vmem:[#allocation2 + $0x70] sm:$0xff]
  %v66 = vld [vmem:[#allocation2 + $0x78] sm:$0xff]
  %v67 = vld [vmem:[%s1] sm:$0xf]
  %v68 = vld [vmem:[%s1 + $0x4] sm:$0xf]
  %v69 = vld [vmem:[%s1 + $0x8] sm:$0xf]
  %v70 = vld [vmem:[%s1 + $0xc] sm:$0xf]
  %v71 = vld [vmem:[%s1 + $0x10] sm:$0xf]
  %v72 = vld [vmem:[%s1 + $0x14] sm:$0xf]
  %v73 = vld [vmem:[%s1 + $0x18] sm:$0xf]
  %v74 = vld [vmem:[%s1 + $0x1c] sm:$0xf]
  %v75 = vld [vmem:[%s1 + $0x20] sm:$0xf]
  %v76 = vld [vmem:[%s1 + $0x24] sm:$0xf]
  %v77 = vld [vmem:[%s1 + $0x28] sm:$0xf]
  %v78 = vld [vmem:[%s1 + $0x2c] sm:$0xf]
  %v79 = vld [vmem:[%s1 + $0x30] sm:$0xf]
  %v80 = vld [vmem:[%s1 + $0x34] sm:$0xf]
  %v81 = vld [vmem:[%s1 + $0x38] sm:$0xf]
  %v82 = vld [vmem:[%s1 + $0x3c] sm:$0xf]
  %v99 = vunpack.c.l.b16 %v35
  %v100 = vunpack.c.l.b16 %v36
  %v101 = vunpack.c.l.b16 %v37
  %v102 = vunpack.c.l.b16 %v38
  %v103 = vunpack.c.l.b16 %v39
  %v104 = vunpack.c.l.b16 %v40
  %v105 = vunpack.c.l.b16 %v41
  %v106 = vunpack.c.l.b16 %v42
  %v107 = vunpack.c.l.b16 %v43
  %v108 = vunpack.c.l.b16 %v44
  %v109 = vunpack.c.l.b16 %v45
  %v110 = vunpack.c.l.b16 %v46
  %v111 = vunpack.c.l.b16 %v47
  %v112 = vunpack.c.l.b16 %v48
  %v113 = vunpack.c.l.b16 %v49
  %v114 = vunpack.c.l.b16 %v50
  %v115 = vpack.c.b16 %v100, %v99
  %v116 = vpack.c.b16 %v102, %v101
  %v117 = vpack.c.b16 %v104, %v103
  %v118 = vpack.c.b16 %v106, %v105
  %v119 = vpack.c.b16 %v108, %v107
  %v120 = vpack.c.b16 %v110, %v109
  %v121 = vpack.c.b16 %v112, %v111
  %v122 = vpack.c.b16 %v114, %v113
  %v147 = vunpack.c.l.b16 %v67
  %v148 = vunpack.c.l.b16 %v68
  %v149 = vunpack.c.l.b16 %v69
  %v150 = vunpack.c.l.b16 %v70
  %v151 = vunpack.c.l.b16 %v71
  %v152 = vunpack.c.l.b16 %v72
  %v153 = vunpack.c.l.b16 %v73
  %v154 = vunpack.c.l.b16 %v74
  %v155 = vunpack.c.l.b16 %v75
  %v156 = vunpack.c.l.b16 %v76
  %v157 = vunpack.c.l.b16 %v77
  %v158 = vunpack.c.l.b16 %v78
  %v159 = vunpack.c.l.b16 %v79
  %v160 = vunpack.c.l.b16 %v80
  %v161 = vunpack.c.l.b16 %v81
  %v162 = vunpack.c.l.b16 %v82
  %v163 = vpack.c.b16 %v148, %v147
  %v164 = vpack.c.b16 %v150, %v149
  %v165 = vpack.c.b16 %v152, %v151
  %v166 = vpack.c.b16 %v154, %v153
  %v167 = vpack.c.b16 %v156, %v155
  %v168 = vpack.c.b16 %v158, %v157
  %v169 = vpack.c.b16 %v160, %v159
  %v170 = vpack.c.b16 %v162, %v161
  %179 = vmatprep.subr.bf16.mxu0 0
  %180 = vmatpush1.bf16.msra.mxu0 %v163
  %181 = vmatprep.subr.bf16.mxu0 0
  %182 = vmatpush1.bf16.msra.mxu0 %v164
  %183 = vmatprep.subr.bf16.mxu0 0
  %184 = vmatpush1.bf16.msra.mxu0 %v165
  %185 = vmatprep.subr.bf16.mxu0 0
  %186 = vmatpush1.bf16.msra.mxu0 %v166
  %187 = vmatprep.subr.bf16.mxu0 0
  %188 = vmatpush1.bf16.msra.mxu0 %v167
  %189 = vmatprep.subr.bf16.mxu0 0
  %190 = vmatpush1.bf16.msra.mxu0 %v168
  %191 = vmatprep.subr.bf16.mxu0 0
  %192 = vmatpush1.bf16.msra.mxu0 %v169
  %193 = vmatprep.subr.bf16.mxu0 0
  %194 = vmatpush1.bf16.msra.mxu0 %v170
  %195 = vmatprep.subr.bf16.mxu0 0
  %196 = vmatpush1.bf16.msra.mxu0 0
  %197 = vmatprep.subr.bf16.mxu0 0
  %198 = vmatpush1.bf16.msra.mxu0 0
  %199 = vmatprep.subr.bf16.mxu0 0
  %200 = vmatpush1.bf16.msra.mxu0 0
  %201 = vmatprep.subr.bf16.mxu0 0
  %202 = vmatpush1.bf16.msra.mxu0 0
  %203 = vmatprep.subr.bf16.mxu0 0
  %204 = vmatpush1.bf16.msra.mxu0 0
  %205 = vmatprep.subr.bf16.mxu0 0
  %206 = vmatpush1.bf16.msra.mxu0 0
  %207 = vmatprep.subr.bf16.mxu0 0
  %208 = vmatpush1.bf16.msra.mxu0 0
  %209 = vmatprep.subr.bf16.mxu0 0
  %210 = vmatpush1.bf16.msra.mxu0 0
  %211 = vmatprep.mubr.bf16.mxu0 0
  %212 = vmatmul.mubr.bf16.gmra.mrb[0].mxu0 %v115
  %v213 = vpop.f32.mrb[0].mxu0
  %v214 = vadd.f32 0.0, %v213
  %v215 = vpop.f32.mrb[0].mxu0
  %v216 = vpop.f32.mrb[0].mxu0
  %v217 = vadd.f32 0.0, %v216
  %v218 = vpop.f32.mrb[0].mxu0
  %219 = vmatprep.mubr.bf16.mxu0 0
  %220 = vmatmul.mubr.bf16.gmra.mrb[0].mxu0 %v116
  %v221 = vpop.f32.mrb[0].mxu0
  %v222 = vadd.f32 0.0, %v221
  %v223 = vpop.f32.mrb[0].mxu0
  %v224 = vpop.f32.mrb[0].mxu0
  %v225 = vadd.f32 0.0, %v224
  %v226 = vpop.f32.mrb[0].mxu0
  %227 = vmatprep.mubr.bf16.mxu0 0
  %228 = vmatmul.mubr.bf16.gmra.mrb[0].mxu0 %v117
  %v229 = vpop.f32.mrb[0].mxu0
  %v230 = vadd.f32 0.0, %v229
  %v231 = vpop.f32.mrb[0].mxu0
  %v232 = vpop.f32.mrb[0].mxu0
  %v233 = vadd.f32 0.0, %v232
  %v234 = vpop.f32.mrb[0].mxu0
  %235 = vmatprep.mubr.bf16.mxu0 0
  %236 = vmatmul.mubr.bf16.gmra.mrb[0].mxu0 %v118
  %v237 = vpop.f32.mrb[0].mxu0
  %v238 = vadd.f32 0.0, %v237
  %v239 = vpop.f32.mrb[0].mxu0
  %v240 = vpop.f32.mrb[0].mxu0
  %v241 = vadd.f32 0.0, %v240
  %v242 = vpop.f32.mrb[0].mxu0
  %243 = vmatprep.mubr.bf16.mxu0 0
  %244 = vmatmul.mubr.bf16.gmra.mrb[0].mxu0 %v119
  %v245 = vpop.f32.mrb[0].mxu0
  %v246 = vadd.f32 0.0, %v245
  %v247 = vpop.f32.mrb[0].mxu0
  %v248 = vpop.f32.mrb[0].mxu0
  %v249 = vadd.f32 0.0, %v248
  %v250 = vpop.f32.mrb[0].mxu0
  %251 = vmatprep.mubr.bf16.mxu0 0
  %252 = vmatmul.mubr.bf16.gmra.mrb[0].mxu0 %v120
  %v253 = vpop.f32.mrb[0].mxu0
  %v254 = vadd.f32 0.0, %v253
  %v255 = vpop.f32.mrb[0].mxu0
  %v256 = vpop.f32.mrb[0].mxu0
  %v257 = vadd.f32 0.0, %v256
  %v258 = vpop.f32.mrb[0].mxu0
  %259 = vmatprep.mubr.bf16.mxu0 0
  %260 = vmatmul.mubr.bf16.gmra.mrb[0].mxu0 %v121
  %v261 = vpop.f32.mrb[0].mxu0
  %v262 = vadd.f32 0.0, %v261
  %v263 = vpop.f32.mrb[0].mxu0
  %v264 = vpop.f32.mrb[0].mxu0
  %v265 = vadd.f32 0.0, %v264
  %v266 = vpop.f32.mrb[0].mxu0
  %267 = vmatprep.mubr.bf16.mxu0 0
  %268 = vmatmul.mubr.bf16.gmra.mrb[0].mxu0 %v122
  %v269 = vpop.f32.mrb[0].mxu0
  %v270 = vadd.f32 0.0, %v269
  %v271 = vpop.f32.mrb[0].mxu0
  %v272 = vpop.f32.mrb[0].mxu0
  %v273 = vadd.f32 0.0, %v272
  %v274 = vpop.f32.mrb[0].mxu0
  %275 = vdwg.mxu0
  %v276 = vadd.f32 %v51, %v214
  %v277 = vadd.f32 %v52, %v217
  %v278 = vadd.f32 %v53, %v222
  %v279 = vadd.f32 %v54, %v225
  %v280 = vadd.f32 %v55, %v230
  %v281 = vadd.f32 %v56, %v233
  %v282 = vadd.f32 %v57, %v238
  %v283 = vadd.f32 %v58, %v241
  %v284 = vadd.f32 %v59, %v246
  %v285 = vadd.f32 %v60, %v249
  %v286 = vadd.f32 %v61, %v254
  %v287 = vadd.f32 %v62, %v257
  %v288 = vadd.f32 %v63, %v262
  %v289 = vadd.f32 %v64, %v265
  %v290 = vadd.f32 %v65, %v270
  %v291 = vadd.f32 %v66, %v273
  %292 = vst [vmem:[#allocation2] sm:$0xff] %v276
  %293 = vst [vmem:[#allocation2 + $0x8] sm:$0xff] %v277
  %294 = vst [vmem:[#allocation2 + $0x10] sm:$0xff] %v278
  %295 = vst [vmem:[#allocation2 + $0x18] sm:$0xff] %v279
  %296 = vst [vmem:[#allocation2 + $0x20] sm:$0xff] %v280
  %297 = vst [vmem:[#allocation2 + $0x28] sm:$0xff] %v281
  %298 = vst [vmem:[#allocation2 + $0x30] sm:$0xff] %v282
  %299 = vst [vmem:[#allocation2 + $0x38] sm:$0xff] %v283
  %300 = vst [vmem:[#allocation2 + $0x40] sm:$0xff] %v284
  %301 = vst [vmem:[#allocation2 + $0x48] sm:$0xff] %v285
  %302 = vst [vmem:[#allocation2 + $0x50] sm:$0xff] %v286
  %303 = vst [vmem:[#allocation2 + $0x58] sm:$0xff] %v287
  %304 = vst [vmem:[#allocation2 + $0x60] sm:$0xff] %v288
  %305 = vst [vmem:[#allocation2 + $0x68] sm:$0xff] %v289
  %306 = vst [vmem:[#allocation2 + $0x70] sm:$0xff] %v290
  %307 = vst [vmem:[#allocation2 + $0x78] sm:$0xff] %v291
  // Predicated region
  $region14: #{bottleneck_forward.8} parent=0 // pred_check
    %p308 = pneg %p15
  $region15: #{bottleneck_forward.8} parent=0 // pred_check_branch
    %310 = sbr.rel (%p308) target = $region17
  $region16: #{bottleneck_forward.8} parent=0 // pred_region
    %v311 = vld [vmem:[#allocation2] sm:$0xff]
    %v312 = vld [vmem:[#allocation2 + $0x8] sm:$0xff]
    %v313 = vld [vmem:[#allocation2 + $0x10] sm:$0xff]
    %v314 = vld [vmem:[#allocation2 + $0x18] sm:$0xff]
    %v315 = vld [vmem:[#allocation2 + $0x20] sm:$0xff]
    %v316 = vld [vmem:[#allocation2 + $0x28] sm:$0xff]
    %v317 = vld [vmem:[#allocation2 + $0x30] sm:$0xff]
    %v318 = vld [vmem:[#allocation2 + $0x38] sm:$0xff]
    %v319 = vld [vmem:[#allocation2 + $0x40] sm:$0xff]
    %v320 = vld [vmem:[#allocation2 + $0x48] sm:$0xff]
    %v321 = vld [vmem:[#allocation2 + $0x50] sm:$0xff]
    %v322 = vld [vmem:[#allocation2 + $0x58] sm:$0xff]
    %v323 = vld [vmem:[#allocation2 + $0x60] sm:$0xff]
    %v324 = vld [vmem:[#allocation2 + $0x68] sm:$0xff]
    %v325 = vld [vmem:[#allocation2 + $0x70] sm:$0xff]
    %v326 = vld [vmem:[#allocation2 + $0x78] sm:$0xff]
    %v327 = vpack.c.bf16 %v312, %v311
    %v328 = vpack.c.bf16 %v314, %v313
    %v329 = vpack.c.bf16 %v316, %v315
    %v330 = vpack.c.bf16 %v318, %v317
    %v331 = vpack.c.bf16 %v320, %v319
    %v332 = vpack.c.bf16 %v322, %v321
    %v333 = vpack.c.bf16 %v324, %v323
    %v334 = vpack.c.bf16 %v326, %v325
    %v343 = vunpack.c.l.b16 %v327
    %v344 = vunpack.c.h.b16 %v327
    %v345 = vunpack.c.l.b16 %v328
    %v346 = vunpack.c.h.b16 %v328
    %v347 = vunpack.c.l.b16 %v329
    %v348 = vunpack.c.h.b16 %v329
    %v349 = vunpack.c.l.b16 %v330
    %v350 = vunpack.c.h.b16 %v330
    %v351 = vunpack.c.l.b16 %v331
    %v352 = vunpack.c.h.b16 %v331
    %v353 = vunpack.c.l.b16 %v332
    %v354 = vunpack.c.h.b16 %v332
    %v355 = vunpack.c.l.b16 %v333
    %v356 = vunpack.c.h.b16 %v333
    %v357 = vunpack.c.l.b16 %v334
    %v358 = vunpack.c.h.b16 %v334
    %v359 = vpack.c.b16 %v343, %v343
    %v360 = vpack.c.b16 %v344, %v344
    %v361 = vpack.c.b16 %v345, %v345
    %v362 = vpack.c.b16 %v346, %v346
    %v363 = vpack.c.b16 %v347, %v347
    %v364 = vpack.c.b16 %v348, %v348
    %v365 = vpack.c.b16 %v349, %v349
    %v366 = vpack.c.b16 %v350, %v350
    %v367 = vpack.c.b16 %v351, %v351
    %v368 = vpack.c.b16 %v352, %v352
    %v369 = vpack.c.b16 %v353, %v353
    %v370 = vpack.c.b16 %v354, %v354
    %v371 = vpack.c.b16 %v355, %v355
    %v372 = vpack.c.b16 %v356, %v356
    %v373 = vpack.c.b16 %v357, %v357
    %v374 = vpack.c.b16 %v358, %v358
    %391 = vst [vmem:[%s2] sm:$0xf] %v359
    %392 = vst [vmem:[%s2 + $0x4] sm:$0xf] %v360
    %393 = vst [vmem:[%s2 + $0x8] sm:$0xf] %v361
    %394 = vst [vmem:[%s2 + $0xc] sm:$0xf] %v362
    %395 = vst [vmem:[%s2 + $0x10] sm:$0xf] %v363
    %396 = vst [vmem:[%s2 + $0x14] sm:$0xf] %v364
    %397 = vst [vmem:[%s2 + $0x18] sm:$0xf] %v365
    %398 = vst [vmem:[%s2 + $0x1c] sm:$0xf] %v366
    %399 = vst [vmem:[%s2 + $0x20] sm:$0xf] %v367
    %400 = vst [vmem:[%s2 + $0x24] sm:$0xf] %v368
    %401 = vst [vmem:[%s2 + $0x28] sm:$0xf] %v369
    %402 = vst [vmem:[%s2 + $0x2c] sm:$0xf] %v370
    %403 = vst [vmem:[%s2 + $0x30] sm:$0xf] %v371
    %404 = vst [vmem:[%s2 + $0x34] sm:$0xf] %v372
    %405 = vst [vmem:[%s2 + $0x38] sm:$0xf] %v373
    %406 = vst [vmem:[%s2 + $0x3c] sm:$0xf] %v374
    %v407 = vadd.f32 %v311, %v312
    %v408 = vadd.f32 %v407, %v313
    %v409 = vadd.f32 %v408, %v314
    %v410 = vadd.f32 %v409, %v315
    %v411 = vadd.f32 %v410, %v316
    %v412 = vadd.f32 %v411, %v317
    %v413 = vadd.f32 %v412, %v318
    %v414 = vadd.f32 %v413, %v319
    %v415 = vadd.f32 %v414, %v320
    %v416 = vadd.f32 %v415, %v321
    %v417 = vadd.f32 %v416, %v322
    %v418 = vadd.f32 %v417, %v323
    %v419 = vadd.f32 %v418, %v324
    %v420 = vadd.f32 %v419, %v325
    %v421 = vadd.f32 %v420, %v326
    %v422 = vrot.slane %v421, 4
    %v423 = vadd.f32 %v421, %v422
    %v424 = vrot.slane %v423, 2
    %v425 = vadd.f32 %v423, %v424
    %v426 = vrot.slane %v425, 1
    %v427 = vadd.f32 %v425, %v426
    %v428 = vmul.f32 %v311, %v311
    %v429 = vmul.f32 %v312, %v312
    %v430 = vmul.f32 %v313, %v313
    %v431 = vmul.f32 %v314, %v314
    %v432 = vmul.f32 %v315, %v315
    %v433 = vmul.f32 %v316, %v316
    %v434 = vmul.f32 %v317, %v317
    %v435 = vmul.f32 %v318, %v318
    %v436 = vmul.f32 %v319, %v319
    %v437 = vmul.f32 %v320, %v320
    %v438 = vmul.f32 %v321, %v321
    %v439 = vmul.f32 %v322, %v322
    %v440 = vmul.f32 %v323, %v323
    %v441 = vmul.f32 %v324, %v324
    %v442 = vmul.f32 %v325, %v325
    %v443 = vmul.f32 %v326, %v326
    %v444 = vadd.f32 %v428, %v429
    %v445 = vadd.f32 %v444, %v430
    %v446 = vadd.f32 %v445, %v431
    %v447 = vadd.f32 %v446, %v432
    %v448 = vadd.f32 %v447, %v433
    %v449 = vadd.f32 %v448, %v434
    %v450 = vadd.f32 %v449, %v435
    %v451 = vadd.f32 %v450, %v436
    %v452 = vadd.f32 %v451, %v437
    %v453 = vadd.f32 %v452, %v438
    %v454 = vadd.f32 %v453, %v439
    %v455 = vadd.f32 %v454, %v440
    %v456 = vadd.f32 %v455, %v441
    %v457 = vadd.f32 %v456, %v442
    %v458 = vadd.f32 %v457, %v443
    %v459 = vrot.slane %v458, 4
    %v460 = vadd.f32 %v458, %v459
    %v461 = vrot.slane %v460, 2
    %v462 = vadd.f32 %v460, %v461
    %v463 = vrot.slane %v462, 1
    %v464 = vadd.f32 %v462, %v463
    %465 = vst [vmem:[%s3] sm:$0xff] %v427
    %466 = vst [vmem:[%s4] sm:$0xff] %v464
  $region17: #{bottleneck_forward.8} parent=0 // pred_fallthru
    _
  // Predicated region
  $region18: #{bottleneck_forward.8} parent=0 // pred_check
    _
  $region19: #{bottleneck_forward.8} parent=0 // pred_check_branch
    %468 = sbr.rel (0) target = $region21
  $region20: #{bottleneck_forward.8} parent=0 // pred_region
    _
  $region21: #{bottleneck_forward.8} parent=0 // pred_fallthru
    _
  // Predicated region
  $region22: #{bottleneck_forward.8} parent=0 // pred_check
    _
  $region23: #{bottleneck_forward.8} parent=0 // pred_check_branch
    %470 = sbr.rel (0) target = $region25
  $region24: #{bottleneck_forward.8} parent=0 // pred_region
    _
  $region25: #{bottleneck_forward.8} parent=0 // pred_fallthru
    _
  // Predicated region
  $region26: #{bottleneck_forward.8} parent=0 // pred_check
    _
  $region27: #{bottleneck_forward.8} parent=0 // pred_check_branch
    %472 = sbr.rel (0) target = $region29
  $region28: #{bottleneck_forward.8} parent=0 // pred_region
    _
  $region29: #{bottleneck_forward.8} parent=0 // pred_fallthru
    _
  // Predicated region
  $region30: #{bottleneck_forward.8} parent=0 // pred_check
    _
  $region31: #{bottleneck_forward.8} parent=0 // pred_check_branch
    %474 = sbr.rel (0) target = $region33
  $region32: #{bottleneck_forward.8} parent=0 // pred_region
    _
  $region33: #{bottleneck_forward.8} parent=0 // pred_fallthru
    _
  // Predicated region
  $region34: #{bottleneck_forward.8} parent=0 // pred_check
    _
  $region35: #{bottleneck_forward.8} parent=0 // pred_check_branch
    %476 = sbr.rel (0) target = $region37
  $region36: #{bottleneck_forward.8} parent=0 // pred_region
    _
  $region37: #{bottleneck_forward.8} parent=0 // pred_fallthru
    _
  // Predicated region
  $region38: #{bottleneck_forward.8} parent=0 // pred_check
    _
  $region39: #{bottleneck_forward.8} parent=0 // pred_check_branch
    %478 = sbr.rel (0) target = $region41
  $region40: #{bottleneck_forward.8} parent=0 // pred_region
    _
  $region41: #{bottleneck_forward.8} parent=0 // pred_fallthru
    _

// kernel: bottleneck_forward.5
$region0: #{bottleneck_forward.5}
  #allocation0 [shape = 'u32[]', space=smem, size = 0x4, offset = 0x4, fixed_abs, tag = 'smem constant byte address 0x4 - core index']
  #allocation1 [shape = 'u32[144,128]{1,0:T(1,128)}', space=vmem, size = 0x12000, scoped, tag = 'internal scratch']
  #allocation2 [shape = 'f32[256,128]{1,0:T(8,128)}', space=vmem, size = 0x20000, scoped, tag = 'scratch operand']
  %s0 = inlined_call_operand.vmem [shape: bf16[512,128], index: 0, kind: input, shape index: {}]
  %s1 = inlined_call_operand.vmem [shape: bf16[128,128], index: 1, kind: input, shape index: {}]
  %s2 = inlined_call_operand.vmem [shape: bf16[512,128], index: 2, kind: output, shape index: {0}]
  %s3 = inlined_call_operand.vmem [shape: f32[16,128], index: 3, kind: output, shape index: {1}]
  %s4 = inlined_call_operand.vmem [shape: f32[16,128], index: 4, kind: output, shape index: {2}]
  %5 = xla_tuple %s2, %s3, %s4
  %s6 = sld [smem:[#allocation0]]
  $region65: #{bottleneck_forward.5} parent=0
    _
  %s8 = ssub.s32 1, %s6
  %s9 = scalar_select 0, %s8, %s6
  loop: start=0, step=1, limit=4
  $region2: #{bottleneck_forward.5} parent=0 // loop_pre_header
    _
  $region3: #{bottleneck_forward.5} parent=0 // loop_header
    %s11 = sphi 0, %s15
    %p12 = scmp.ge.s32.totalorder %s11, 4
    %s18 = sphi 0, %s37
    %s19 = sphi 0, %s33
    %s20 = sphi 0, %s29
    %s21 = sphi 0, %s18
    %s22 = sphi 0, %s19
    %s23 = sphi 0, %s20
    %s24 = sphi 0, %s21
    %s25 = sphi 0, %s22
    %s26 = sphi 0, %s23
    %s42 = sphi 0, %s44
    %s45 = sphi 0, %s42
    %s46 = sphi 0, %s45
    %s62 = sphi 0, %s46
    %s70 = sphi 0, %s72
    %s73 = sphi 0, %s70
    %s74 = sphi 0, %s73
    %s90 = sphi 0, %s74
    %s98 = sphi 0, %s100
    %s101 = sphi 0, %s98
    %s102 = sphi 0, %s101
    %s118 = sphi 0, %s102
    %s126 = sphi 0, %s128
    %s129 = sphi 0, %s126
    %s130 = sphi 0, %s129
    %s146 = sphi 0, %s130
    %s154 = sphi 0, %s156
    %s157 = sphi 0, %s154
    %s158 = sphi 0, %s157
    %s174 = sphi 0, %s158
  $region4: #{bottleneck_forward.5} parent=0 // loop_header_branch
    %14 = sbr.rel (%p12) target = $region8
  $region5: #{bottleneck_forward.5} parent=0 // loop_body
    %s16 = ssub.s32 %s11, 1
    %s17 = ssub.s32 %s11, 2
    %s27 = sadd.s32 1, %s20
    %p28 = scmp.ge.s32.totalorder %s27, 1
    %s29 = scalar_select %p28, 0, %s27
    %s30 = sadd.s32 1, %s19
    %s31 = scalar_select %p28, %s30, %s19
    %p32 = scmp.ge.s32.totalorder %s31, 1
    %s33 = scalar_select %p32, 0, %s31
    %s34 = sadd.s32 1, %s18
    %s35 = scalar_select %p32, %s34, %s18
    %p36 = scmp.ge.s32.totalorder %s35, 2
    %s37 = scalar_select %p36, 0, %s35
    %s38 = ssub.s32 %s18, %s37
    %s39 = ssub.s32 %s20, %s29
    %s40 = sor.u32 %s38, %s39
    %p41 = scmp.eq.s32.totalorder %s40, 0
    %s43 = sadd.s32 %s42, 1
    %s44 = scalar_select %p41, %s42, %s43
    %p47 = pneg %p41
    %p48 = scmp.eq.s32.totalorder %s11, 1
    %p49 = por %p47, %p48
    %p50 = scmp.ne.s32.totalorder %s42, %s45
    %p51 = scmp.eq.s32.totalorder %s11, 0
    %p52 = por %p50, %p51
    %p53 = scmp.ne.s32.totalorder %s42, %s45
    %p54 = scmp.eq.s32.totalorder %s16, 1
    %p55 = por %p53, %p54
    %p56 = scmp.ne.s32.totalorder %s45, %s46
    %p57 = scmp.eq.s32.totalorder %s16, 0
    %p58 = por %p56, %p57
    %p59 = scmp.ne.s32.totalorder %s45, %s46
    %p60 = scmp.eq.s32.totalorder %s17, 1
    %p61 = por %p59, %p60
    %p63 = scmp.ne.s32.totalorder %s46, %s62
    %p64 = scmp.eq.s32.totalorder %s17, 0
    %p65 = por %p63, %p64
    %s66 = ssub.s32 %s20, %s29
    %s67 = ssub.s32 %s19, %s33
    %s68 = sor.u32 %s66, %s67
    %p69 = scmp.eq.s32.totalorder %s68, 0
    %s71 = sadd.s32 %s70, 1
    %s72 = scalar_select %p69, %s70, %s71
    %p75 = pneg %p69
    %p76 = scmp.eq.s32.totalorder %s11, 1
    %p77 = por %p75, %p76
    %p78 = scmp.ne.s32.totalorder %s70, %s73
    %p79 = scmp.eq.s32.totalorder %s11, 0
    %p80 = por %p78, %p79
    %p81 = scmp.ne.s32.totalorder %s70, %s73
    %p82 = scmp.eq.s32.totalorder %s16, 1
    %p83 = por %p81, %p82
    %p84 = scmp.ne.s32.totalorder %s73, %s74
    %p85 = scmp.eq.s32.totalorder %s16, 0
    %p86 = por %p84, %p85
    %p87 = scmp.ne.s32.totalorder %s73, %s74
    %p88 = scmp.eq.s32.totalorder %s17, 1
    %p89 = por %p87, %p88
    %p91 = scmp.ne.s32.totalorder %s74, %s90
    %p92 = scmp.eq.s32.totalorder %s17, 0
    %p93 = por %p91, %p92
    %s94 = ssub.s32 %s18, %s37
    %s95 = ssub.s32 %s19, %s33
    %s96 = sor.u32 %s94, %s95
    %p97 = scmp.eq.s32.totalorder %s96, 0
    %s99 = sadd.s32 %s98, 1
    %s100 = scalar_select %p97, %s98, %s99
    %p103 = pneg %p97
    %p104 = scmp.eq.s32.totalorder %s11, 1
    %p105 = por %p103, %p104
    %p106 = scmp.ne.s32.totalorder %s98, %s101
    %p107 = scmp.eq.s32.totalorder %s11, 0
    %p108 = por %p106, %p107
    %p109 = scmp.ne.s32.totalorder %s98, %s101
    %p110 = scmp.eq.s32.totalorder %s16, 1
    %p111 = por %p109, %p110
    %p112 = scmp.ne.s32.totalorder %s101, %s102
    %p113 = scmp.eq.s32.totalorder %s16, 0
    %p114 = por %p112, %p113
    %p115 = scmp.ne.s32.totalorder %s101, %s102
    %p116 = scmp.eq.s32.totalorder %s17, 1
    %p117 = por %p115, %p116
    %p119 = scmp.ne.s32.totalorder %s102, %s118
    %p120 = scmp.eq.s32.totalorder %s17, 0
    %p121 = por %p119, %p120
    %s122 = ssub.s32 %s18, %s37
    %s123 = ssub.s32 %s19, %s33
    %s124 = sor.u32 %s122, %s123
    %p125 = scmp.eq.s32.totalorder %s124, 0
    %s127 = sadd.s32 %s126, 1
    %s128 = scalar_select %p125, %s126, %s127
    %p131 = pneg %p125
    %p132 = scmp.eq.s32.totalorder %s11, 1
    %p133 = por %p131, %p132
    %p134 = scmp.ne.s32.totalorder %s126, %s129
    %p135 = scmp.eq.s32.totalorder %s11, 0
    %p136 = por %p134, %p135
    %p137 = scmp.ne.s32.totalorder %s126, %s129
    %p138 = scmp.eq.s32.totalorder %s16, 1
    %p139 = por %p137, %p138
    %p140 = scmp.ne.s32.totalorder %s129, %s130
    %p141 = scmp.eq.s32.totalorder %s16, 0
    %p142 = por %p140, %p141
    %p143 = scmp.ne.s32.totalorder %s129, %s130
    %p144 = scmp.eq.s32.totalorder %s17, 1
    %p145 = por %p143, %p144
    %p147 = scmp.ne.s32.totalorder %s130, %s146
    %p148 = scmp.eq.s32.totalorder %s17, 0
    %p149 = por %p147, %p148
    %s150 = ssub.s32 %s18, %s37
    %s151 = ssub.s32 %s19, %s33
    %s152 = sor.u32 %s150, %s151
    %p153 = scmp.eq.s32.totalorder %s152, 0
    %s155 = sadd.s32 %s154, 1
    %s156 = scalar_select %p153, %s154, %s155
    %p159 = pneg %p153
    %p160 = scmp.eq.s32.totalorder %s11, 1
    %p161 = por %p159, %p160
    %p162 = scmp.ne.s32.totalorder %s154, %s157
    %p163 = scmp.eq.s32.totalorder %s11, 0
    %p164 = por %p162, %p163
    %p165 = scmp.ne.s32.totalorder %s154, %s157
    %p166 = scmp.eq.s32.totalorder %s16, 1
    %p167 = por %p165, %p166
    %p168 = scmp.ne.s32.totalorder %s157, %s158
    %p169 = scmp.eq.s32.totalorder %s16, 0
    %p170 = por %p168, %p169
    %p171 = scmp.ne.s32.totalorder %s157, %s158
    %p172 = scmp.eq.s32.totalorder %s17, 1
    %p173 = por %p171, %p172
    %p175 = scmp.ne.s32.totalorder %s158, %s174
    %p176 = scmp.eq.s32.totalorder %s17, 0
    %p177 = por %p175, %p176
    %p178 = scmp.le.s32.totalorder 1, %s11
    %p179 = scmp.lt.s32.totalorder %s11, 3
    %p180 = pnand %p178, %p179
    %p181 = pneg %p180
    // Predicated region
    $region9: #{bottleneck_forward.5} parent=5 // pred_check
      _
    $region10: #{bottleneck_forward.5} parent=5 // pred_check_branch
      %183 = sbr.rel (%p180) target = $region12
    $region11: #{bottleneck_forward.5} parent=5 // pred_region
      %s184 = ssub.s32 %s11, 1
      // Predicated region
      $region13: #{bottleneck_forward.5} parent=11 // pred_check
        %p185 = pneg %p86
      $region14: #{bottleneck_forward.5} parent=11 // pred_check_branch
        %187 = sbr.rel (%p185) target = $region16
      $region15: #{bottleneck_forward.5} parent=11 // pred_region
        %s188 = smul.u32 16, %s23
        %p189 = scmp.lt.s32.totalorder %s188, 15
        %s190 = scalar_select %p189, %s188, 15
        %p191 = scmp.lt.s32.totalorder %s22, 0
        %s192 = scalar_select %p191, %s22, 0
        %s193 = sadd.s32 %s192, %s190
        %s194 = smul.addr %s193, 4
        %s195 = scalar_lea.vmem %s1, %s194
        %s196 = smul.u32 16, %s23
      $region16: #{bottleneck_forward.5} parent=11 // pred_fallthru
        _
    $region12: #{bottleneck_forward.5} parent=5 // pred_fallthru
      _
    %p197 = scmp.lt.s32.totalorder %s11, 2
    // Predicated region
    $region17: #{bottleneck_forward.5} parent=5 // pred_check
      %p198 = pneg %p197
    $region18: #{bottleneck_forward.5} parent=5 // pred_check_branch
      %200 = sbr.rel (%p198) target = $region20
    $region19: #{bottleneck_forward.5} parent=5 // pred_region
      // Predicated region
      $region21: #{bottleneck_forward.5} parent=19 // pred_check
        %p201 = pneg %p52
      $region22: #{bottleneck_forward.5} parent=19 // pred_check_branch
        %203 = sbr.rel (%p201) target = $region24
      $region23: #{bottleneck_forward.5} parent=19 // pred_region
        %s204 = smul.u32 32, %s18
        %p205 = scmp.lt.s32.totalorder %s204, 63
        %s206 = scalar_select %p205, %s204, 63
        %p207 = scmp.lt.s32.totalorder %s20, 0
        %s208 = scalar_select %p207, %s20, 0
        %s209 = sadd.s32 %s208, %s206
        %s210 = smul.addr %s209, 4
        %s211 = scalar_lea.vmem %s0, %s210
        %s212 = smul.u32 32, %s18
      $region24: #{bottleneck_forward.5} parent=19 // pred_fallthru
        _
    $region20: #{bottleneck_forward.5} parent=5 // pred_fallthru
      _
    %p213 = scmp.le.s32.totalorder 1, %s11
    %p214 = scmp.lt.s32.totalorder %s11, 3
    %p215 = pnand %p213, %p214
    %p216 = pneg %p215
    // Predicated region
    $region25: #{bottleneck_forward.5} parent=5 // pred_check
      _
    $region26: #{bottleneck_forward.5} parent=5 // pred_check_branch
      %218 = sbr.rel (%p215) target = $region28
    $region27: #{bottleneck_forward.5} parent=5 // pred_region
      %s219 = ssub.s32 %s11, 1
      %s220 = smul.u32 32, %s21
      %p221 = scmp.lt.s32.totalorder %s220, 63
      %s222 = scalar_select %p221, %s220, 63
      %p223 = scmp.lt.s32.totalorder %s23, 0
      %s224 = scalar_select %p223, %s23, 0
      %s225 = sadd.s32 %s224, %s222
      %s226 = smul.addr %s225, 4
      %s227 = scalar_lea.vmem %s0, %s226
      %p228 = pneg %p58
      %p229 = pneg %p55
      %s230 = smul.u32 16, %s23
      %p231 = scmp.lt.s32.totalorder %s230, 15
      %s232 = scalar_select %p231, %s230, 15
      %p233 = scmp.lt.s32.totalorder %s22, 0
      %s234 = scalar_select %p233, %s22, 0
      %s235 = sadd.s32 %s234, %s232
      %s236 = smul.addr %s235, 4
      %s237 = scalar_lea.vmem %s1, %s236
      %p238 = pneg %p86
      %p239 = pneg %p83
      %p240 = pneg %p114
      %p241 = pneg %p111
      %s242 = smul.u32 32, %s21
      %p243 = scmp.lt.s32.totalorder %s242, 63
      %s244 = scalar_select %p243, %s242, 63
      %p245 = scmp.lt.s32.totalorder %s22, 0
      %s246 = scalar_select %p245, %s22, 0
      %s247 = sadd.s32 %s246, %s244
      %s248 = smul.addr %s247, 4
      %s249 = scalar_lea.vmem %s2, %s248
      %p250 = pneg %p142
      %p251 = pneg %p139
      %p252 = scmp.lt.s32.totalorder %s21, 1
      %s253 = scalar_select %p252, %s21, 1
      %p254 = scmp.lt.s32.totalorder %s22, 0
      %s255 = scalar_select %p254, %s22, 0
      %s256 = sadd.s32 %s255, %s253
      %s257 = smul.addr %s256, 8
      %s258 = scalar_lea.vmem %s3, %s257
      %p259 = pneg %p170
      %p260 = pneg %p167
      %p261 = scmp.lt.s32.totalorder %s21, 1
      %s262 = scalar_select %p261, %s21, 1
      %p263 = scmp.lt.s32.totalorder %s22, 0
      %s264 = scalar_select %p263, %s22, 0
      %s265 = sadd.s32 %s264, %s262
      %s266 = smul.addr %s265, 8
      %s267 = scalar_lea.vmem %s4, %s266
      %s268 = smul.u32 32, %s21
      %p269 = scmp.lt.s32.totalorder %s268, 63
      %s270 = scalar_select %p269, %s268, 63
      %p271 = scmp.lt.s32.totalorder %s23, 0
      %s272 = scalar_select %p271, %s23, 0
      %s273 = sadd.s32 %s272, %s270
      %s274 = smul.addr %s273, 4
      %s275 = scalar_lea.vmem %s0, %s274
      %s276 = smul.u32 32, %s21
      %s277 = smul.u32 16, %s23
      %p278 = scmp.lt.s32.totalorder %s277, 15
      %s279 = scalar_select %p278, %s277, 15
      %p280 = scmp.lt.s32.totalorder %s22, 0
      %s281 = scalar_select %p280, %s22, 0
      %s282 = sadd.s32 %s281, %s279
      %s283 = smul.addr %s282, 4
      %s284 = scalar_lea.vmem %s1, %s283
      %s285 = smul.u32 16, %s23
      %s286 = smul.u32 32, %s21
      %p287 = scmp.lt.s32.totalorder %s286, 63
      %s288 = scalar_select %p287, %s286, 63
      %p289 = scmp.lt.s32.totalorder %s22, 0
      %s290 = scalar_select %p289, %s22, 0
      %s291 = sadd.s32 %s290, %s288
      %s292 = smul.addr %s291, 4
      %s293 = scalar_lea.vmem %s2, %s292
      %s294 = smul.u32 32, %s21
      %p295 = scmp.lt.s32.totalorder %s21, 1
      %s296 = scalar_select %p295, %s21, 1
      %p297 = scmp.lt.s32.totalorder %s22, 0
      %s298 = scalar_select %p297, %s22, 0
      %s299 = sadd.s32 %s298, %s296
      %s300 = smul.addr %s299, 8
      %s301 = scalar_lea.vmem %s3, %s300
      %p302 = scmp.lt.s32.totalorder %s21, 1
      %s303 = scalar_select %p302, %s21, 1
      %p304 = scmp.lt.s32.totalorder %s22, 0
      %s305 = scalar_select %p304, %s22, 0
      %s306 = sadd.s32 %s305, %s303
      %s307 = smul.addr %s306, 8
      %s308 = scalar_lea.vmem %s4, %s307
      %p310 = scmp.eq.s32.totalorder %s23, 0
      // Predicated region
      $region29: #{bottleneck_forward.5} parent=27 // pred_check
        %p311 = pneg %p310
      $region30: #{bottleneck_forward.5} parent=27 // pred_check_branch
        %313 = sbr.rel (%p311) target = $region32
      $region31: #{bottleneck_forward.5} parent=27 // pred_region
        %314 = vst [vmem:[#allocation2] sm:$0xff] 0.0
        %315 = vst [vmem:[#allocation2 + $0x8] sm:$0xff] 0.0
        %316 = vst [vmem:[#allocation2 + $0x10] sm:$0xff] 0.0
        %317 = vst [vmem:[#allocation2 + $0x18] sm:$0xff] 0.0
        %318 = vst [vmem:[#allocation2 + $0x20] sm:$0xff] 0.0
        %319 = vst [vmem:[#allocation2 + $0x28] sm:$0xff] 0.0
        %320 = vst [vmem:[#allocation2 + $0x30] sm:$0xff] 0.0
        %321 = vst [vmem:[#allocation2 + $0x38] sm:$0xff] 0.0
        %322 = vst [vmem:[#allocation2 + $0x40] sm:$0xff] 0.0
        %323 = vst [vmem:[#allocation2 + $0x48] sm:$0xff] 0.0
        %324 = vst [vmem:[#allocation2 + $0x50] sm:$0xff] 0.0
        %325 = vst [vmem:[#allocation2 + $0x58] sm:$0xff] 0.0
        %326 = vst [vmem:[#allocation2 + $0x60] sm:$0xff] 0.0
        %327 = vst [vmem:[#allocation2 + $0x68] sm:$0xff] 0.0
        %328 = vst [vmem:[#allocation2 + $0x70] sm:$0xff] 0.0
        %329 = vst [vmem:[#allocation2 + $0x78] sm:$0xff] 0.0
        %330 = vst [vmem:[#allocation2 + $0x80] sm:$0xff] 0.0
        %331 = vst [vmem:[#allocation2 + $0x88] sm:$0xff] 0.0
        %332 = vst [vmem:[#allocation2 + $0x90] sm:$0xff] 0.0
        %333 = vst [vmem:[#allocation2 + $0x98] sm:$0xff] 0.0
        %334 = vst [vmem:[#allocation2 + $0xa0] sm:$0xff] 0.0
        %335 = vst [vmem:[#allocation2 + $0xa8] sm:$0xff] 0.0
        %336 = vst [vmem:[#allocation2 + $0xb0] sm:$0xff] 0.0
        %337 = vst [vmem:[#allocation2 + $0xb8] sm:$0xff] 0.0
        %338 = vst [vmem:[#allocation2 + $0xc0] sm:$0xff] 0.0
        %339 = vst [vmem:[#allocation2 + $0xc8] sm:$0xff] 0.0
        %340 = vst [vmem:[#allocation2 + $0xd0] sm:$0xff] 0.0
        %341 = vst [vmem:[#allocation2 + $0xd8] sm:$0xff] 0.0
        %342 = vst [vmem:[#allocation2 + $0xe0] sm:$0xff] 0.0
        %343 = vst [vmem:[#allocation2 + $0xe8] sm:$0xff] 0.0
        %344 = vst [vmem:[#allocation2 + $0xf0] sm:$0xff] 0.0
        %345 = vst [vmem:[#allocation2 + $0xf8] sm:$0xff] 0.0
      $region32: #{bottleneck_forward.5} parent=27 // pred_fallthru
        _
      %v346 = vld [vmem:[%s275] sm:$0xf]
      %v347 = vld [vmem:[%s275 + $0x4] sm:$0xf]
      %v348 = vld [vmem:[%s275 + $0x8] sm:$0xf]
      %v349 = vld [vmem:[%s275 + $0xc] sm:$0xf]
      %v350 = vld [vmem:[%s275 + $0x10] sm:$0xf]
      %v351 = vld [vmem:[%s275 + $0x14] sm:$0xf]
      %v352 = vld [vmem:[%s275 + $0x18] sm:$0xf]
      %v353 = vld [vmem:[%s275 + $0x1c] sm:$0xf]
      %v354 = vld [vmem:[%s275 + $0x20] sm:$0xf]
      %v355 = vld [vmem:[%s275 + $0x24] sm:$0xf]
      %v356 = vld [vmem:[%s275 + $0x28] sm:$0xf]
      %v357 = vld [vmem:[%s275 + $0x2c] sm:$0xf]
      %v358 = vld [vmem:[%s275 + $0x30] sm:$0xf]
      %v359 = vld [vmem:[%s275 + $0x34] sm:$0xf]
      %v360 = vld [vmem:[%s275 + $0x38] sm:$0xf]
      %v361 = vld [vmem:[%s275 + $0x3c] sm:$0xf]
      %v362 = vld [vmem:[%s275 + $0x40] sm:$0xf]
      %v363 = vld [vmem:[%s275 + $0x44] sm:$0xf]
      %v364 = vld [vmem:[%s275 + $0x48] sm:$0xf]
      %v365 = vld [vmem:[%s275 + $0x4c] sm:$0xf]
      %v366 = vld [vmem:[%s275 + $0x50] sm:$0xf]
      %v367 = vld [vmem:[%s275 + $0x54] sm:$0xf]
      %v368 = vld [vmem:[%s275 + $0x58] sm:$0xf]
      %v369 = vld [vmem:[%s275 + $0x5c] sm:$0xf]
      %v370 = vld [vmem:[%s275 + $0x60] sm:$0xf]
      %v371 = vld [vmem:[%s275 + $0x64] sm:$0xf]
      %v372 = vld [vmem:[%s275 + $0x68] sm:$0xf]
      %v373 = vld [vmem:[%s275 + $0x6c] sm:$0xf]
      %v374 = vld [vmem:[%s275 + $0x70] sm:$0xf]
      %v375 = vld [vmem:[%s275 + $0x74] sm:$0xf]
      %v376 = vld [vmem:[%s275 + $0x78] sm:$0xf]
      %v377 = vld [vmem:[%s275 + $0x7c] sm:$0xf]
      %v378 = vld [vmem:[#allocation2] sm:$0xff]
      %v379 = vld [vmem:[#allocation2 + $0x8] sm:$0xff]
      %v380 = vld [vmem:[#allocation2 + $0x10] sm:$0xff]
      %v381 = vld [vmem:[#allocation2 + $0x18] sm:$0xff]
      %v382 = vld [vmem:[#allocation2 + $0x20] sm:$0xff]
      %v383 = vld [vmem:[#allocation2 + $0x28] sm:$0xff]
      %v384 = vld [vmem:[#allocation2 + $0x30] sm:$0xff]
      %v385 = vld [vmem:[#allocation2 + $0x38] sm:$0xff]
      %v386 = vld [vmem:[#allocation2 + $0x40] sm:$0xff]
      %v387 = vld [vmem:[#allocation2 + $0x48] sm:$0xff]
      %v388 = vld [vmem:[#allocation2 + $0x50] sm:$0xff]
      %v389 = vld [vmem:[#allocation2 + $0x58] sm:$0xff]
      %v390 = vld [vmem:[#allocation2 + $0x60] sm:$0xff]
      %v391 = vld [vmem:[#allocation2 + $0x68] sm:$0xff]
      %v392 = vld [vmem:[#allocation2 + $0x70] sm:$0xff]
      %v393 = vld [vmem:[#allocation2 + $0x78] sm:$0xff]
      %v394 = vld [vmem:[#allocation2 + $0x80] sm:$0xff]
      %v395 = vld [vmem:[#allocation2 + $0x88] sm:$0xff]
      %v396 = vld [vmem:[#allocation2 + $0x90] sm:$0xff]
      %v397 = vld [vmem:[#allocation2 + $0x98] sm:$0xff]
      %v398 = vld [vmem:[#allocation2 + $0xa0] sm:$0xff]
      %v399 = vld [vmem:[#allocation2 + $0xa8] sm:$0xff]
      %v400 = vld [vmem:[#allocation2 + $0xb0] sm:$0xff]
      %v401 = vld [vmem:[#allocation2 + $0xb8] sm:$0xff]
      %v402 = vld [vmem:[#allocation2 + $0xc0] sm:$0xff]
      %v403 = vld [vmem:[#allocation2 + $0xc8] sm:$0xff]
      %v404 = vld [vmem:[#allocation2 + $0xd0] sm:$0xff]
      %v405 = vld [vmem:[#allocation2 + $0xd8] sm:$0xff]
      %v406 = vld [vmem:[#allocation2 + $0xe0] sm:$0xff]
      %v407 = vld [vmem:[#allocation2 + $0xe8] sm:$0xff]
      %v408 = vld [vmem:[#allocation2 + $0xf0] sm:$0xff]
      %v409 = vld [vmem:[#allocation2 + $0xf8] sm:$0xff]
      %v410 = vld [vmem:[%s284] sm:$0xf]
      %v411 = vld [vmem:[%s284 + $0x4] sm:$0xf]
      %v412 = vld [vmem:[%s284 + $0x8] sm:$0xf]
      %v413 = vld [vmem:[%s284 + $0xc] sm:$0xf]
      %v414 = vld [vmem:[%s284 + $0x10] sm:$0xf]
      %v415 = vld [vmem:[%s284 + $0x14] sm:$0xf]
      %v416 = vld [vmem:[%s284 + $0x18] sm:$0xf]
      %v417 = vld [vmem:[%s284 + $0x1c] sm:$0xf]
      %v418 = vld [vmem:[%s284 + $0x20] sm:$0xf]
      %v419 = vld [vmem:[%s284 + $0x24] sm:$0xf]
      %v420 = vld [vmem:[%s284 + $0x28] sm:$0xf]
      %v421 = vld [vmem:[%s284 + $0x2c] sm:$0xf]
      %v422 = vld [vmem:[%s284 + $0x30] sm:$0xf]
      %v423 = vld [vmem:[%s284 + $0x34] sm:$0xf]
      %v424 = vld [vmem:[%s284 + $0x38] sm:$0xf]
      %v425 = vld [vmem:[%s284 + $0x3c] sm:$0xf]
      %v458 = vunpack.c.l.b16 %v346
      %v459 = vunpack.c.l.b16 %v347
      %v460 = vunpack.c.l.b16 %v348
      %v461 = vunpack.c.l.b16 %v349
      %v462 = vunpack.c.l.b16 %v350
      %v463 = vunpack.c.l.b16 %v351
      %v464 = vunpack.c.l.b16 %v352
      %v465 = vunpack.c.l.b16 %v353
      %v466 = vunpack.c.l.b16 %v354
      %v467 = vunpack.c.l.b16 %v355
      %v468 = vunpack.c.l.b16 %v356
      %v469 = vunpack.c.l.b16 %v357
      %v470 = vunpack.c.l.b16 %v358
      %v471 = vunpack.c.l.b16 %v359
      %v472 = vunpack.c.l.b16 %v360
      %v473 = vunpack.c.l.b16 %v361
      %v474 = vunpack.c.l.b16 %v362
      %v475 = vunpack.c.l.b16 %v363
      %v476 = vunpack.c.l.b16 %v364
      %v477 = vunpack.c.l.b16 %v365
      %v478 = vunpack.c.l.b16 %v366
      %v479 = vunpack.c.l.b16 %v367
      %v480 = vunpack.c.l.b16 %v368
      %v481 = vunpack.c.l.b16 %v369
      %v482 = vunpack.c.l.b16 %v370
      %v483 = vunpack.c.l.b16 %v371
      %v484 = vunpack.c.l.b16 %v372
      %v485 = vunpack.c.l.b16 %v373
      %v486 = vunpack.c.l.b16 %v374
      %v487 = vunpack.c.l.b16 %v375
      %v488 = vunpack.c.l.b16 %v376
      %v489 = vunpack.c.l.b16 %v377
      %v490 = vpack.c.b16 %v459, %v458
      %v491 = vpack.c.b16 %v461, %v460
      %v492 = vpack.c.b16 %v463, %v462
      %v493 = vpack.c.b16 %v465, %v464
      %v494 = vpack.c.b16 %v467, %v466
      %v495 = vpack.c.b16 %v469, %v468
      %v496 = vpack.c.b16 %v471, %v470
      %v497 = vpack.c.b16 %v473, %v472
      %v498 = vpack.c.b16 %v475, %v474
      %v499 = vpack.c.b16 %v477, %v476
      %v500 = vpack.c.b16 %v479, %v478
      %v501 = vpack.c.b16 %v481, %v480
      %v502 = vpack.c.b16 %v483, %v482
      %v503 = vpack.c.b16 %v485, %v484
      %v504 = vpack.c.b16 %v487, %v486
      %v505 = vpack.c.b16 %v489, %v488
      %v538 = vunpack.c.l.b16 %v410
      %v539 = vunpack.c.l.b16 %v411
      %v540 = vunpack.c.l.b16 %v412
      %v541 = vunpack.c.l.b16 %v413
      %v542 = vunpack.c.l.b16 %v414
      %v543 = vunpack.c.l.b16 %v415
      %v544 = vunpack.c.l.b16 %v416
      %v545 = vunpack.c.l.b16 %v417
      %v546 = vunpack.c.l.b16 %v418
      %v547 = vunpack.c.l.b16 %v419
      %v548 = vunpack.c.l.b16 %v420
      %v549 = vunpack.c.l.b16 %v421
      %v550 = vunpack.c.l.b16 %v422
      %v551 = vunpack.c.l.b16 %v423
      %v552 = vunpack.c.l.b16 %v424
      %v553 = vunpack.c.l.b16 %v425
      %v554 = vpack.c.b16 %v539, %v538
      %v555 = vpack.c.b16 %v541, %v540
      %v556 = vpack.c.b16 %v543, %v542
      %v557 = vpack.c.b16 %v545, %v544
      %v558 = vpack.c.b16 %v547, %v546
      %v559 = vpack.c.b16 %v549, %v548
      %v560 = vpack.c.b16 %v551, %v550
      %v561 = vpack.c.b16 %v553, %v552
      %570 = vmatprep.subr.bf16.mxu0 0
      %571 = vmatpush1.bf16.msra.mxu0 %v554
      %572 = vmatprep.subr.bf16.mxu0 0
      %573 = vmatpush1.bf16.msra.mxu0 %v555
      %574 = vmatprep.subr.bf16.mxu0 0
      %575 = vmatpush1.bf16.msra.mxu0 %v556
      %576 = vmatprep.subr.bf16.mxu0 0
      %577 = vmatpush1.bf16.msra.mxu0 %v557
      %578 = vmatprep.subr.bf16.mxu0 0
      %579 = vmatpush1.bf16.msra.mxu0 %v558
      %580 = vmatprep.subr.bf16.mxu0 0
      %581 = vmatpush1.bf16.msra.mxu0 %v559
      %582 = vmatprep.subr.bf16.mxu0 0
      %583 = vmatpush1.bf16.msra.mxu0 %v560
      %584 = vmatprep.subr.bf16.mxu0 0
      %585 = vmatpush1.bf16.msra.mxu0 %v561
      %586 = vmatprep.subr.bf16.mxu0 0
      %587 = vmatpush1.bf16.msra.mxu0 0
      %588 = vmatprep.subr.bf16.mxu0 0
      %589 = vmatpush1.bf16.msra.mxu0 0
      %590 = vmatprep.subr.bf16.mxu0 0
      %591 = vmatpush1.bf16.msra.mxu0 0
      %592 = vmatprep.subr.bf16.mxu0 0
      %593 = vmatpush1.bf16.msra.mxu0 0
      %594 = vmatprep.subr.bf16.mxu0 0
      %595 = vmatpush1.bf16.msra.mxu0 0
      %596 = vmatprep.subr.bf16.mxu0 0
      %597 = vmatpush1.bf16.msra.mxu0 0
      %598 = vmatprep.subr.bf16.mxu0 0
      %599 = vmatpush1.bf16.msra.mxu0 0
      %600 = vmatprep.subr.bf16.mxu0 0
      %601 = vmatpush1.bf16.msra.mxu0 0
      %602 = vmatprep.mubr.bf16.mxu0 0
      %603 = vmatmul.mubr.bf16.gmra.mrb[0].mxu0 %v490
      %v604 = vpop.f32.mrb[0].mxu0
      %v605 = vadd.f32 0.0, %v604
      %v606 = vpop.f32.mrb[0].mxu0
      %v607 = vpop.f32.mrb[0].mxu0
      %v608 = vadd.f32 0.0, %v607
      %v609 = vpop.f32.mrb[0].mxu0
      %610 = vmatprep.mubr.bf16.mxu0 0
      %611 = vmatmul.mubr.bf16.gmra.mrb[0].mxu0 %v491
      %v612 = vpop.f32.mrb[0].mxu0
      %v613 = vadd.f32 0.0, %v612
      %v614 = vpop.f32.mrb[0].mxu0
      %v615 = vpop.f32.mrb[0].mxu0
      %v616 = vadd.f32 0.0, %v615
      %v617 = vpop.f32.mrb[0].mxu0
      %618 = vmatprep.mubr.bf16.mxu0 0
      %619 = vmatmul.mubr.bf16.gmra.mrb[0].mxu0 %v492
      %v620 = vpop.f32.mrb[0].mxu0
      %v621 = vadd.f32 0.0, %v620
      %v622 = vpop.f32.mrb[0].mxu0
      %v623 = vpop.f32.mrb[0].mxu0
      %v624 = vadd.f32 0.0, %v623
      %v625 = vpop.f32.mrb[0].mxu0
      %626 = vmatprep.mubr.bf16.mxu0 0
      %627 = vmatmul.mubr.bf16.gmra.mrb[0].mxu0 %v493
      %v628 = vpop.f32.mrb[0].mxu0
      %v629 = vadd.f32 0.0, %v628
      %v630 = vpop.f32.mrb[0].mxu0
      %v631 = vpop.f32.mrb[0].mxu0
      %v632 = vadd.f32 0.0, %v631
      %v633 = vpop.f32.mrb[0].mxu0
      %634 = vmatprep.mubr.bf16.mxu0 0
      %635 = vmatmul.mubr.bf16.gmra.mrb[0].mxu0 %v494
      %v636 = vpop.f32.mrb[0].mxu0
      %v637 = vadd.f32 0.0, %v636
      %v638 = vpop.f32.mrb[0].mxu0
      %v639 = vpop.f32.mrb[0].mxu0
      %v640 = vadd.f32 0.0, %v639
      %v641 = vpop.f32.mrb[0].mxu0
      %642 = vmatprep.mubr.bf16.mxu0 0
      %643 = vmatmul.mubr.bf16.gmra.mrb[0].mxu0 %v495
      %v644 = vpop.f32.mrb[0].mxu0
      %v645 = vadd.f32 0.0, %v644
      %v646 = vpop.f32.mrb[0].mxu0
      %v647 = vpop.f32.mrb[0].mxu0
      %v648 = vadd.f32 0.0, %v647
      %v649 = vpop.f32.mrb[0].mxu0
      %650 = vmatprep.mubr.bf16.mxu0 0
      %651 = vmatmul.mubr.bf16.gmra.mrb[0].mxu0 %v496
      %v652 = vpop.f32.mrb[0].mxu0
      %v653 = vadd.f32 0.0, %v652
      %v654 = vpop.f32.mrb[0].mxu0
      %v655 = vpop.f32.mrb[0].mxu0
      %v656 = vadd.f32 0.0, %v655
      %v657 = vpop.f32.mrb[0].mxu0
      %658 = vmatprep.mubr.bf16.mxu0 0
      %659 = vmatmul.mubr.bf16.gmra.mrb[0].mxu0 %v497
      %v660 = vpop.f32.mrb[0].mxu0
      %v661 = vadd.f32 0.0, %v660
      %v662 = vpop.f32.mrb[0].mxu0
      %v663 = vpop.f32.mrb[0].mxu0
      %v664 = vadd.f32 0.0, %v663
      %v665 = vpop.f32.mrb[0].mxu0
      %666 = vmatprep.mubr.bf16.mxu0 0
      %667 = vmatmul.mubr.bf16.gmra.mrb[0].mxu0 %v498
      %v668 = vpop.f32.mrb[0].mxu0
      %v669 = vadd.f32 0.0, %v668
      %v670 = vpop.f32.mrb[0].mxu0
      %v671 = vpop.f32.mrb[0].mxu0
      %v672 = vadd.f32 0.0, %v671
      %v673 = vpop.f32.mrb[0].mxu0
      %674 = vmatprep.mubr.bf16.mxu0 0
      %675 = vmatmul.mubr.bf16.gmra.mrb[0].mxu0 %v499
      %v676 = vpop.f32.mrb[0].mxu0
      %v677 = vadd.f32 0.0, %v676
      %v678 = vpop.f32.mrb[0].mxu0
      %v679 = vpop.f32.mrb[0].mxu0
      %v680 = vadd.f32 0.0, %v679
      %v681 = vpop.f32.mrb[0].mxu0
      %682 = vmatprep.mubr.bf16.mxu0 0
      %683 = vmatmul.mubr.bf16.gmra.mrb[0].mxu0 %v500
      %v684 = vpop.f32.mrb[0].mxu0
      %v685 = vadd.f32 0.0, %v684
      %v686 = vpop.f32.mrb[0].mxu0
      %v687 = vpop.f32.mrb[0].mxu0
      %v688 = vadd.f32 0.0, %v687
      %v689 = vpop.f32.mrb[0].mxu0
      %690 = vmatprep.mubr.bf16.mxu0 0
      %691 = vmatmul.mubr.bf16.gmra.mrb[0].mxu0 %v501
      %v692 = vpop.f32.mrb[0].mxu0
      %v693 = vadd.f32 0.0, %v692
      %v694 = vpop.f32.mrb[0].mxu0
      %v695 = vpop.f32.mrb[0].mxu0
      %v696 = vadd.f32 0.0, %v695
      %v697 = vpop.f32.mrb[0].mxu0
      %698 = vmatprep.mubr.bf16.mxu0 0
      %699 = vmatmul.mubr.bf16.gmra.mrb[0].mxu0 %v502
      %v700 = vpop.f32.mrb[0].mxu0
      %v701 = vadd.f32 0.0, %v700
      %v702 = vpop.f32.mrb[0].mxu0
      %v703 = vpop.f32.mrb[0].mxu0
      %v704 = vadd.f32 0.0, %v703
      %v705 = vpop.f32.mrb[0].mxu0
      %706 = vmatprep.mubr.bf16.mxu0 0
      %707 = vmatmul.mubr.bf16.gmra.mrb[0].mxu0 %v503
      %v708 = vpop.f32.mrb[0].mxu0
      %v709 = vadd.f32 0.0, %v708
      %v710 = vpop.f32.mrb[0].mxu0
      %v711 = vpop.f32.mrb[0].mxu0
      %v712 = vadd.f32 0.0, %v711
      %v713 = vpop.f32.mrb[0].mxu0
      %714 = vmatprep.mubr.bf16.mxu0 0
      %715 = vmatmul.mubr.bf16.gmra.mrb[0].mxu0 %v504
      %v716 = vpop.f32.mrb[0].mxu0
      %v717 = vadd.f32 0.0, %v716
      %v718 = vpop.f32.mrb[0].mxu0
      %v719 = vpop.f32.mrb[0].mxu0
      %v720 = vadd.f32 0.0, %v719
      %v721 = vpop.f32.mrb[0].mxu0
      %722 = vmatprep.mubr.bf16.mxu0 0
      %723 = vmatmul.mubr.bf16.gmra.mrb[0].mxu0 %v505
      %v724 = vpop.f32.mrb[0].mxu0
      %v725 = vadd.f32 0.0, %v724
      %v726 = vpop.f32.mrb[0].mxu0
      %v727 = vpop.f32.mrb[0].mxu0
      %v728 = vadd.f32 0.0, %v727
      %v729 = vpop.f32.mrb[0].mxu0
      %730 = vdwg.mxu0
      %v731 = vadd.f32 %v378, %v605
      %v732 = vadd.f32 %v379, %v608
      %v733 = vadd.f32 %v380, %v613
      %v734 = vadd.f32 %v381, %v616
      %v735 = vadd.f32 %v382, %v621
      %v736 = vadd.f32 %v383, %v624
      %v737 = vadd.f32 %v384, %v629
      %v738 = vadd.f32 %v385, %v632
      %v739 = vadd.f32 %v386, %v637
      %v740 = vadd.f32 %v387, %v640
      %v741 = vadd.f32 %v388, %v645
      %v742 = vadd.f32 %v389, %v648
      %v743 = vadd.f32 %v390, %v653
      %v744 = vadd.f32 %v391, %v656
      %v745 = vadd.f32 %v392, %v661
      %v746 = vadd.f32 %v393, %v664
      %v747 = vadd.f32 %v394, %v669
      %v748 = vadd.f32 %v395, %v672
      %v749 = vadd.f32 %v396, %v677
      %v750 = vadd.f32 %v397, %v680
      %v751 = vadd.f32 %v398, %v685
      %v752 = vadd.f32 %v399, %v688
      %v753 = vadd.f32 %v400, %v693
      %v754 = vadd.f32 %v401, %v696
      %v755 = vadd.f32 %v402, %v701
      %v756 = vadd.f32 %v403, %v704
      %v757 = vadd.f32 %v404, %v709
      %v758 = vadd.f32 %v405, %v712
      %v759 = vadd.f32 %v406, %v717
      %v760 = vadd.f32 %v407, %v720
      %v761 = vadd.f32 %v408, %v725
      %v762 = vadd.f32 %v409, %v728
      %763 = vst [vmem:[#allocation2] sm:$0xff] %v731
      %764 = vst [vmem:[#allocation2 + $0x8] sm:$0xff] %v732
      %765 = vst [vmem:[#allocation2 + $0x10] sm:$0xff] %v733
      %766 = vst [vmem:[#allocation2 + $0x18] sm:$0xff] %v734
      %767 = vst [vmem:[#allocation2 + $0x20] sm:$0xff] %v735
      %768 = vst [vmem:[#allocation2 + $0x28] sm:$0xff] %v736
      %769 = vst [vmem:[#allocation2 + $0x30] sm:$0xff] %v737
      %770 = vst [vmem:[#allocation2 + $0x38] sm:$0xff] %v738
      %771 = vst [vmem:[#allocation2 + $0x40] sm:$0xff] %v739
      %772 = vst [vmem:[#allocation2 + $0x48] sm:$0xff] %v740
      %773 = vst [vmem:[#allocation2 + $0x50] sm:$0xff] %v741
      %774 = vst [vmem:[#allocation2 + $0x58] sm:$0xff] %v742
      %775 = vst [vmem:[#allocation2 + $0x60] sm:$0xff] %v743
      %776 = vst [vmem:[#allocation2 + $0x68] sm:$0xff] %v744
      %777 = vst [vmem:[#allocation2 + $0x70] sm:$0xff] %v745
      %778 = vst [vmem:[#allocation2 + $0x78] sm:$0xff] %v746
      %779 = vst [vmem:[#allocation2 + $0x80] sm:$0xff] %v747
      %780 = vst [vmem:[#allocation2 + $0x88] sm:$0xff] %v748
      %781 = vst [vmem:[#allocation2 + $0x90] sm:$0xff] %v749
      %782 = vst [vmem:[#allocation2 + $0x98] sm:$0xff] %v750
      %783 = vst [vmem:[#allocation2 + $0xa0] sm:$0xff] %v751
      %784 = vst [vmem:[#allocation2 + $0xa8] sm:$0xff] %v752
      %785 = vst [vmem:[#allocation2 + $0xb0] sm:$0xff] %v753
      %786 = vst [vmem:[#allocation2 + $0xb8] sm:$0xff] %v754
      %787 = vst [vmem:[#allocation2 + $0xc0] sm:$0xff] %v755
      %788 = vst [vmem:[#allocation2 + $0xc8] sm:$0xff] %v756
      %789 = vst [vmem:[#allocation2 + $0xd0] sm:$0xff] %v757
      %790 = vst [vmem:[#allocation2 + $0xd8] sm:$0xff] %v758
      %791 = vst [vmem:[#allocation2 + $0xe0] sm:$0xff] %v759
      %792 = vst [vmem:[#allocation2 + $0xe8] sm:$0xff] %v760
      %793 = vst [vmem:[#allocation2 + $0xf0] sm:$0xff] %v761
      %794 = vst [vmem:[#allocation2 + $0xf8] sm:$0xff] %v762
      // Predicated region
      $region33: #{bottleneck_forward.5} parent=27 // pred_check
        %p795 = pneg %p310
      $region34: #{bottleneck_forward.5} parent=27 // pred_check_branch
        %797 = sbr.rel (%p795) target = $region36
      $region35: #{bottleneck_forward.5} parent=27 // pred_region
        %v798 = vld [vmem:[#allocation2] sm:$0xff]
        %v799 = vld [vmem:[#allocation2 + $0x8] sm:$0xff]
        %v800 = vld [vmem:[#allocation2 + $0x10] sm:$0xff]
        %v801 = vld [vmem:[#allocation2 + $0x18] sm:$0xff]
        %v802 = vld [vmem:[#allocation2 + $0x20] sm:$0xff]
        %v803 = vld [vmem:[#allocation2 + $0x28] sm:$0xff]
        %v804 = vld [vmem:[#allocation2 + $0x30] sm:$0xff]
        %v805 = vld [vmem:[#allocation2 + $0x38] sm:$0xff]
        %v806 = vld [vmem:[#allocation2 + $0x40] sm:$0xff]
        %v807 = vld [vmem:[#allocation2 + $0x48] sm:$0xff]
        %v808 = vld [vmem:[#allocation2 + $0x50] sm:$0xff]
        %v809 = vld [vmem:[#allocation2 + $0x58] sm:$0xff]
        %v810 = vld [vmem:[#allocation2 + $0x60] sm:$0xff]
        %v811 = vld [vmem:[#allocation2 + $0x68] sm:$0xff]
        %v812 = vld [vmem:[#allocation2 + $0x70] sm:$0xff]
        %v813 = vld [vmem:[#allocation2 + $0x78] sm:$0xff]
        %v814 = vld [vmem:[#allocation2 + $0x80] sm:$0xff]
        %v815 = vld [vmem:[#allocation2 + $0x88] sm:$0xff]
        %v816 = vld [vmem:[#allocation2 + $0x90] sm:$0xff]
        %v817 = vld [vmem:[#allocation2 + $0x98] sm:$0xff]
        %v818 = vld [vmem:[#allocation2 + $0xa0] sm:$0xff]
        %v819 = vld [vmem:[#allocation2 + $0xa8] sm:$0xff]
        %v820 = vld [vmem:[#allocation2 + $0xb0] sm:$0xff]
        %v821 = vld [vmem:[#allocation2 + $0xb8] sm:$0xff]
        %v822 = vld [vmem:[#allocation2 + $0xc0] sm:$0xff]
        %v823 = vld [vmem:[#allocation2 + $0xc8] sm:$0xff]
        %v824 = vld [vmem:[#allocation2 + $0xd0] sm:$0xff]
        %v825 = vld [vmem:[#allocation2 + $0xd8] sm:$0xff]
        %v826 = vld [vmem:[#allocation2 + $0xe0] sm:$0xff]
        %v827 = vld [vmem:[#allocation2 + $0xe8] sm:$0xff]
        %v828 = vld [vmem:[#allocation2 + $0xf0] sm:$0xff]
        %v829 = vld [vmem:[#allocation2 + $0xf8] sm:$0xff]
        %v830 = vpack.c.bf16 %v799, %v798
        %v831 = vpack.c.bf16 %v801, %v800
        %v832 = vpack.c.bf16 %v803, %v802
        %v833 = vpack.c.bf16 %v805, %v804
        %v834 = vpack.c.bf16 %v807, %v806
        %v835 = vpack.c.bf16 %v809, %v808
        %v836 = vpack.c.bf16 %v811, %v810
        %v837 = vpack.c.bf16 %v813, %v812
        %v838 = vpack.c.bf16 %v815, %v814
        %v839 = vpack.c.bf16 %v817, %v816
        %v840 = vpack.c.bf16 %v819, %v818
        %v841 = vpack.c.bf16 %v821, %v820
        %v842 = vpack.c.bf16 %v823, %v822
        %v843 = vpack.c.bf16 %v825, %v824
        %v844 = vpack.c.bf16 %v827, %v826
        %v845 = vpack.c.bf16 %v829, %v828
        %v862 = vunpack.c.l.b16 %v830
        %v863 = vunpack.c.h.b16 %v830
        %v864 = vunpack.c.l.b16 %v831
        %v865 = vunpack.c.h.b16 %v831
        %v866 = vunpack.c.l.b16 %v832
        %v867 = vunpack.c.h.b16 %v832
        %v868 = vunpack.c.l.b16 %v833
        %v869 = vunpack.c.h.b16 %v833
        %v870 = vunpack.c.l.b16 %v834
        %v871 = vunpack.c.h.b16 %v834
        %v872 = vunpack.c.l.b16 %v835
        %v873 = vunpack.c.h.b16 %v835
        %v874 = vunpack.c.l.b16 %v836
        %v875 = vunpack.c.h.b16 %v836
        %v876 = vunpack.c.l.b16 %v837
        %v877 = vunpack.c.h.b16 %v837
        %v878 = vunpack.c.l.b16 %v838
        %v879 = vunpack.c.h.b16 %v838
        %v880 = vunpack.c.l.b16 %v839
        %v881 = vunpack.c.h.b16 %v839
        %v882 = vunpack.c.l.b16 %v840
        %v883 = vunpack.c.h.b16 %v840
        %v884 = vunpack.c.l.b16 %v841
        %v885 = vunpack.c.h.b16 %v841
        %v886 = vunpack.c.l.b16 %v842
        %v887 = vunpack.c.h.b16 %v842
        %v888 = vunpack.c.l.b16 %v843
        %v889 = vunpack.c.h.b16 %v843
        %v890 = vunpack.c.l.b16 %v844
        %v891 = vunpack.c.h.b16 %v844
        %v892 = vunpack.c.l.b16 %v845
        %v893 = vunpack.c.h.b16 %v845
        %v894 = vpack.c.b16 %v862, %v862
        %v895 = vpack.c.b16 %v863, %v863
        %v896 = vpack.c.b16 %v864, %v864
        %v897 = vpack.c.b16 %v865, %v865
        %v898 = vpack.c.b16 %v866, %v866
        %v899 = vpack.c.b16 %v867, %v867
        %v900 = vpack.c.b16 %v868, %v868
        %v901 = vpack.c.b16 %v869, %v869
        %v902 = vpack.c.b16 %v870, %v870
        %v903 = vpack.c.b16 %v871, %v871
        %v904 = vpack.c.b16 %v872, %v872
        %v905 = vpack.c.b16 %v873, %v873
        %v906 = vpack.c.b16 %v874, %v874
        %v907 = vpack.c.b16 %v875, %v875
        %v908 = vpack.c.b16 %v876, %v876
        %v909 = vpack.c.b16 %v877, %v877
        %v910 = vpack.c.b16 %v878, %v878
        %v911 = vpack.c.b16 %v879, %v879
        %v912 = vpack.c.b16 %v880, %v880
        %v913 = vpack.c.b16 %v881, %v881
        %v914 = vpack.c.b16 %v882, %v882
        %v915 = vpack.c.b16 %v883, %v883
        %v916 = vpack.c.b16 %v884, %v884
        %v917 = vpack.c.b16 %v885, %v885
        %v918 = vpack.c.b16 %v886, %v886
        %v919 = vpack.c.b16 %v887, %v887
        %v920 = vpack.c.b16 %v888, %v888
        %v921 = vpack.c.b16 %v889, %v889
        %v922 = vpack.c.b16 %v890, %v890
        %v923 = vpack.c.b16 %v891, %v891
        %v924 = vpack.c.b16 %v892, %v892
        %v925 = vpack.c.b16 %v893, %v893
        %958 = vst [vmem:[%s293] sm:$0xf] %v894
        %959 = vst [vmem:[%s293 + $0x4] sm:$0xf] %v895
        %960 = vst [vmem:[%s293 + $0x8] sm:$0xf] %v896
        %961 = vst [vmem:[%s293 + $0xc] sm:$0xf] %v897
        %962 = vst [vmem:[%s293 + $0x10] sm:$0xf] %v898
        %963 = vst [vmem:[%s293 + $0x14] sm:$0xf] %v899
        %964 = vst [vmem:[%s293 + $0x18] sm:$0xf] %v900
        %965 = vst [vmem:[%s293 + $0x1c] sm:$0xf] %v901
        %966 = vst [vmem:[%s293 + $0x20] sm:$0xf] %v902
        %967 = vst [vmem:[%s293 + $0x24] sm:$0xf] %v903
        %968 = vst [vmem:[%s293 + $0x28] sm:$0xf] %v904
        %969 = vst [vmem:[%s293 + $0x2c] sm:$0xf] %v905
        %970 = vst [vmem:[%s293 + $0x30] sm:$0xf] %v906
        %971 = vst [vmem:[%s293 + $0x34] sm:$0xf] %v907
        %972 = vst [vmem:[%s293 + $0x38] sm:$0xf] %v908
        %973 = vst [vmem:[%s293 + $0x3c] sm:$0xf] %v909
        %974 = vst [vmem:[%s293 + $0x40] sm:$0xf] %v910
        %975 = vst [vmem:[%s293 + $0x44] sm:$0xf] %v911
        %976 = vst [vmem:[%s293 + $0x48] sm:$0xf] %v912
        %977 = vst [vmem:[%s293 + $0x4c] sm:$0xf] %v913
        %978 = vst [vmem:[%s293 + $0x50] sm:$0xf] %v914
        %979 = vst [vmem:[%s293 + $0x54] sm:$0xf] %v915
        %980 = vst [vmem:[%s293 + $0x58] sm:$0xf] %v916
        %981 = vst [vmem:[%s293 + $0x5c] sm:$0xf] %v917
        %982 = vst [vmem:[%s293 + $0x60] sm:$0xf] %v918
        %983 = vst [vmem:[%s293 + $0x64] sm:$0xf] %v919
        %984 = vst [vmem:[%s293 + $0x68] sm:$0xf] %v920
        %985 = vst [vmem:[%s293 + $0x6c] sm:$0xf] %v921
        %986 = vst [vmem:[%s293 + $0x70] sm:$0xf] %v922
        %987 = vst [vmem:[%s293 + $0x74] sm:$0xf] %v923
        %988 = vst [vmem:[%s293 + $0x78] sm:$0xf] %v924
        %989 = vst [vmem:[%s293 + $0x7c] sm:$0xf] %v925
        %v990 = vadd.f32 %v798, %v799
        %v991 = vadd.f32 %v990, %v800
        %v992 = vadd.f32 %v991, %v801
        %v993 = vadd.f32 %v992, %v802
        %v994 = vadd.f32 %v993, %v803
        %v995 = vadd.f32 %v994, %v804
        %v996 = vadd.f32 %v995, %v805
        %v997 = vadd.f32 %v996, %v806
        %v998 = vadd.f32 %v997, %v807
        %v999 = vadd.f32 %v998, %v808
        %v1000 = vadd.f32 %v999, %v809
        %v1001 = vadd.f32 %v1000, %v810
        %v1002 = vadd.f32 %v1001, %v811
        %v1003 = vadd.f32 %v1002, %v812
        %v1004 = vadd.f32 %v1003, %v813
        %v1005 = vadd.f32 %v1004, %v814
        %v1006 = vadd.f32 %v1005, %v815
        %v1007 = vadd.f32 %v1006, %v816
        %v1008 = vadd.f32 %v1007, %v817
        %v1009 = vadd.f32 %v1008, %v818
        %v1010 = vadd.f32 %v1009, %v819
        %v1011 = vadd.f32 %v1010, %v820
        %v1012 = vadd.f32 %v1011, %v821
        %v1013 = vadd.f32 %v1012, %v822
        %v1014 = vadd.f32 %v1013, %v823
        %v1015 = vadd.f32 %v1014, %v824
        %v1016 = vadd.f32 %v1015, %v825
        %v1017 = vadd.f32 %v1016, %v826
        %v1018 = vadd.f32 %v1017, %v827
        %v1019 = vadd.f32 %v1018, %v828
        %v1020 = vadd.f32 %v1019, %v829
        %v1021 = vrot.slane %v1020, 4
        %v1022 = vadd.f32 %v1020, %v1021
        %v1023 = vrot.slane %v1022, 2
        %v1024 = vadd.f32 %v1022, %v1023
        %v1025 = vrot.slane %v1024, 1
        %v1026 = vadd.f32 %v1024, %v1025
        %v1027 = vmul.f32 %v798, %v798
        %v1028 = vmul.f32 %v799, %v799
        %v1029 = vmul.f32 %v800, %v800
        %v1030 = vmul.f32 %v801, %v801
        %v1031 = vmul.f32 %v802, %v802
        %v1032 = vmul.f32 %v803, %v803
        %v1033 = vmul.f32 %v804, %v804
        %v1034 = vmul.f32 %v805, %v805
        %v1035 = vmul.f32 %v806, %v806
        %v1036 = vmul.f32 %v807, %v807
        %v1037 = vmul.f32 %v808, %v808
        %v1038 = vmul.f32 %v809, %v809
        %v1039 = vmul.f32 %v810, %v810
        %v1040 = vmul.f32 %v811, %v811
        %v1041 = vmul.f32 %v812, %v812
        %v1042 = vmul.f32 %v813, %v813
        %v1043 = vmul.f32 %v814, %v814
        %v1044 = vmul.f32 %v815, %v815
        %v1045 = vmul.f32 %v816, %v816
        %v1046 = vmul.f32 %v817, %v817
        %v1047 = vmul.f32 %v818, %v818
        %v1048 = vmul.f32 %v819, %v819
        %v1049 = vmul.f32 %v820, %v820
        %v1050 = vmul.f32 %v821, %v821
        %v1051 = vmul.f32 %v822, %v822
        %v1052 = vmul.f32 %v823, %v823
        %v1053 = vmul.f32 %v824, %v824
        %v1054 = vmul.f32 %v825, %v825
        %v1055 = vmul.f32 %v826, %v826
        %v1056 = vmul.f32 %v827, %v827
        %v1057 = vmul.f32 %v828, %v828
        %v1058 = vmul.f32 %v829, %v829
        %v1059 = vadd.f32 %v1027, %v1028
        %v1060 = vadd.f32 %v1059, %v1029
        %v1061 = vadd.f32 %v1060, %v1030
        %v1062 = vadd.f32 %v1061, %v1031
        %v1063 = vadd.f32 %v1062, %v1032
        %v1064 = vadd.f32 %v1063, %v1033
        %v1065 = vadd.f32 %v1064, %v1034
        %v1066 = vadd.f32 %v1065, %v1035
        %v1067 = vadd.f32 %v1066, %v1036
        %v1068 = vadd.f32 %v1067, %v1037
        %v1069 = vadd.f32 %v1068, %v1038
        %v1070 = vadd.f32 %v1069, %v1039
        %v1071 = vadd.f32 %v1070, %v1040
        %v1072 = vadd.f32 %v1071, %v1041
        %v1073 = vadd.f32 %v1072, %v1042
        %v1074 = vadd.f32 %v1073, %v1043
        %v1075 = vadd.f32 %v1074, %v1044
        %v1076 = vadd.f32 %v1075, %v1045
        %v1077 = vadd.f32 %v1076, %v1046
        %v1078 = vadd.f32 %v1077, %v1047
        %v1079 = vadd.f32 %v1078, %v1048
        %v1080 = vadd.f32 %v1079, %v1049
        %v1081 = vadd.f32 %v1080, %v1050
        %v1082 = vadd.f32 %v1081, %v1051
        %v1083 = vadd.f32 %v1082, %v1052
        %v1084 = vadd.f32 %v1083, %v1053
        %v1085 = vadd.f32 %v1084, %v1054
        %v1086 = vadd.f32 %v1085, %v1055
        %v1087 = vadd.f32 %v1086, %v1056
        %v1088 = vadd.f32 %v1087, %v1057
        %v1089 = vadd.f32 %v1088, %v1058
        %v1090 = vrot.slane %v1089, 4
        %v1091 = vadd.f32 %v1089, %v1090
        %v1092 = vrot.slane %v1091, 2
        %v1093 = vadd.f32 %v1091, %v1092
        %v1094 = vrot.slane %v1093, 1
        %v1095 = vadd.f32 %v1093, %v1094
        %1096 = vst [vmem:[%s301] sm:$0xff] %v1026
        %1097 = vst [vmem:[%s308] sm:$0xff] %v1095
      $region36: #{bottleneck_forward.5} parent=27 // pred_fallthru
        _
      %s1098 = smul.u32 32, %s21
      %p1099 = scmp.lt.s32.totalorder %s1098, 63
      %s1100 = scalar_select %p1099, %s1098, 63
      %p1101 = scmp.lt.s32.totalorder %s22, 0
      %s1102 = scalar_select %p1101, %s22, 0
      %s1103 = sadd.s32 %s1102, %s1100
      %s1104 = smul.addr %s1103, 4
      %s1105 = scalar_lea.vmem %s2, %s1104
      %p1106 = scmp.lt.s32.totalorder %s21, 1
      %s1107 = scalar_select %p1106, %s21, 1
      %p1108 = scmp.lt.s32.totalorder %s22, 0
      %s1109 = scalar_select %p1108, %s22, 0
      %s1110 = sadd.s32 %s1109, %s1107
      %s1111 = smul.addr %s1110, 8
      %s1112 = scalar_lea.vmem %s3, %s1111
      %p1113 = scmp.lt.s32.totalorder %s21, 1
      %s1114 = scalar_select %p1113, %s21, 1
      %p1115 = scmp.lt.s32.totalorder %s22, 0
      %s1116 = scalar_select %p1115, %s22, 0
      %s1117 = sadd.s32 %s1116, %s1114
      %s1118 = smul.addr %s1117, 8
      %s1119 = scalar_lea.vmem %s4, %s1118
      // Predicated region
      $region37: #{bottleneck_forward.5} parent=27 // pred_check
        %p1120 = pneg %p111
      $region38: #{bottleneck_forward.5} parent=27 // pred_check_branch
        %1122 = sbr.rel (%p1120) target = $region40
      $region39: #{bottleneck_forward.5} parent=27 // pred_region
        %s1123 = smul.u32 32, %s21
      $region40: #{bottleneck_forward.5} parent=27 // pred_fallthru
        _
      // Predicated region
      $region41: #{bottleneck_forward.5} parent=27 // pred_check
        %p1124 = pneg %p139
      $region42: #{bottleneck_forward.5} parent=27 // pred_check_branch
        %1126 = sbr.rel (%p1124) target = $region44
      $region43: #{bottleneck_forward.5} parent=27 // pred_region
        _
      $region44: #{bottleneck_forward.5} parent=27 // pred_fallthru
        _
      // Predicated region
      $region45: #{bottleneck_forward.5} parent=27 // pred_check
        %p1127 = pneg %p167
      $region46: #{bottleneck_forward.5} parent=27 // pred_check_branch
        %1129 = sbr.rel (%p1127) target = $region48
      $region47: #{bottleneck_forward.5} parent=27 // pred_region
        _
      $region48: #{bottleneck_forward.5} parent=27 // pred_fallthru
        _
    $region28: #{bottleneck_forward.5} parent=5 // pred_fallthru
      _
    %p1130 = scmp.le.s32.totalorder 2, %s11
    // Predicated region
    $region49: #{bottleneck_forward.5} parent=5 // pred_check
      %p1131 = pneg %p1130
    $region50: #{bottleneck_forward.5} parent=5 // pred_check_branch
      %1133 = sbr.rel (%p1131) target = $region52
    $region51: #{bottleneck_forward.5} parent=5 // pred_region
      %s1134 = ssub.s32 %s11, 2
      // Predicated region
      $region53: #{bottleneck_forward.5} parent=51 // pred_check
        %p1135 = pneg %p117
      $region54: #{bottleneck_forward.5} parent=51 // pred_check_branch
        %1137 = sbr.rel (%p1135) target = $region56
      $region55: #{bottleneck_forward.5} parent=51 // pred_region
        %s1138 = smul.u32 32, %s24
        %p1139 = scmp.lt.s32.totalorder %s1138, 63
        %s1140 = scalar_select %p1139, %s1138, 63
        %p1141 = scmp.lt.s32.totalorder %s25, 0
        %s1142 = scalar_select %p1141, %s25, 0
        %s1143 = sadd.s32 %s1142, %s1140
        %s1144 = smul.addr %s1143, 4
        %s1145 = scalar_lea.vmem %s2, %s1144
      $region56: #{bottleneck_forward.5} parent=51 // pred_fallthru
        _
      // Predicated region
      $region57: #{bottleneck_forward.5} parent=51 // pred_check
        %p1146 = pneg %p145
      $region58: #{bottleneck_forward.5} parent=51 // pred_check_branch
        %1148 = sbr.rel (%p1146) target = $region60
      $region59: #{bottleneck_forward.5} parent=51 // pred_region
        %p1149 = scmp.lt.s32.totalorder %s24, 1
        %s1150 = scalar_select %p1149, %s24, 1
        %p1151 = scmp.lt.s32.totalorder %s25, 0
        %s1152 = scalar_select %p1151, %s25, 0
        %s1153 = sadd.s32 %s1152, %s1150
        %s1154 = smul.addr %s1153, 8
        %s1155 = scalar_lea.vmem %s3, %s1154
      $region60: #{bottleneck_forward.5} parent=51 // pred_fallthru
        _
      // Predicated region
      $region61: #{bottleneck_forward.5} parent=51 // pred_check
        %p1156 = pneg %p173
      $region62: #{bottleneck_forward.5} parent=51 // pred_check_branch
        %1158 = sbr.rel (%p1156) target = $region64
      $region63: #{bottleneck_forward.5} parent=51 // pred_region
        %p1159 = scmp.lt.s32.totalorder %s24, 1
        %s1160 = scalar_select %p1159, %s24, 1
        %p1161 = scmp.lt.s32.totalorder %s25, 0
        %s1162 = scalar_select %p1161, %s25, 0
        %s1163 = sadd.s32 %s1162, %s1160
        %s1164 = smul.addr %s1163, 8
        %s1165 = scalar_lea.vmem %s4, %s1164
      $region64: #{bottleneck_forward.5} parent=51 // pred_fallthru
        _
    $region52: #{bottleneck_forward.5} parent=5 // pred_fallthru
      _
  $region6: #{bottleneck_forward.5} parent=0 // loop_footer
    %s15 = sadd.s32 1, %s11
  $region7: #{bottleneck_forward.5} parent=0 // loop_footer_branch
    %10 = sbr.rel target = $region3
  $region8: #{bottleneck_forward.5} parent=0 // loop_exit
    _

// kernel: bottleneck_forward.9
$region0: #{bottleneck_forward.9}
  #allocation0 [shape = 'u32[]', space=smem, size = 0x4, offset = 0x4, fixed_abs, tag = 'smem constant byte address 0x4 - core index']
  #allocation1 [shape = 'u32[144,128]{1,0:T(1,128)}', space=vmem, size = 0x12000, scoped, tag = 'internal scratch']
  %s0 = inlined_call_operand.vmem [shape: bf16[128,128], index: 0, kind: input, shape index: {}]
  %s1 = inlined_call_operand.vmem [shape: bf16[128,128], index: 1, kind: input, shape index: {}]
  %s2 = inlined_call_operand.vmem [shape: f32[1,128], index: 2, kind: input, shape index: {}]
  %s3 = inlined_call_operand.vmem [shape: f32[1,128], index: 3, kind: input, shape index: {}]
  %s4 = inlined_call_operand.vmem [shape: f32[1,128], index: 4, kind: input, shape index: {}]
  %s5 = inlined_call_operand.vmem [shape: f32[1,128], index: 5, kind: input, shape index: {}]
  %s6 = inlined_call_operand.hbm [shape: f32[128,128], index: 6, kind: output, shape index: {}]
  %s7 = sld [smem:[#allocation0]]
  $region34: #{bottleneck_forward.9} parent=0
    _
  %s9 = ssub.s32 1, %s7
  %s10 = scalar_select 0, %s9, %s7
  $region1: #{bottleneck_forward.9} parent=0
    #allocation2 [shape = 'u8[65536]{0}', space=vmem, size = 0x10000, scoped, tag = 'output window, operand 0, single buffered']
    #allocation3 [shape = 's32[1]{0}', space=sflag, size = 0x4, scoped, tag = 'scoped memory for bottleneck_forward.9']
    %11 = vsyncpa [#allocation3], 0
    // Predicated region
    $region2: #{bottleneck_forward.9} parent=1 // pred_check
      _
    $region3: #{bottleneck_forward.9} parent=1 // pred_check_branch
      %13 = sbr.rel (0) target = $region5
    $region4: #{bottleneck_forward.9} parent=1 // pred_region
      _
    $region5: #{bottleneck_forward.9} parent=1 // pred_fallthru
      _
    // Predicated region
    $region6: #{bottleneck_forward.9} parent=1 // pred_check
      _
    $region7: #{bottleneck_forward.9} parent=1 // pred_check_branch
      %15 = sbr.rel (0) target = $region9
    $region8: #{bottleneck_forward.9} parent=1 // pred_region
      _
    $region9: #{bottleneck_forward.9} parent=1 // pred_fallthru
      _
    // Predicated region
    $region10: #{bottleneck_forward.9} parent=1 // pred_check
      _
    $region11: #{bottleneck_forward.9} parent=1 // pred_check_branch
      %17 = sbr.rel (0) target = $region13
    $region12: #{bottleneck_forward.9} parent=1 // pred_region
      _
    $region13: #{bottleneck_forward.9} parent=1 // pred_fallthru
      _
    // Predicated region
    $region14: #{bottleneck_forward.9} parent=1 // pred_check
      _
    $region15: #{bottleneck_forward.9} parent=1 // pred_check_branch
      %19 = sbr.rel (0) target = $region17
    $region16: #{bottleneck_forward.9} parent=1 // pred_region
      _
    $region17: #{bottleneck_forward.9} parent=1 // pred_fallthru
      _
    // Predicated region
    $region18: #{bottleneck_forward.9} parent=1 // pred_check
      _
    $region19: #{bottleneck_forward.9} parent=1 // pred_check_branch
      %21 = sbr.rel (0) target = $region21
    $region20: #{bottleneck_forward.9} parent=1 // pred_region
      _
    $region21: #{bottleneck_forward.9} parent=1 // pred_fallthru
      _
    // Predicated region
    $region22: #{bottleneck_forward.9} parent=1 // pred_check
      _
    $region23: #{bottleneck_forward.9} parent=1 // pred_check_branch
      %23 = sbr.rel (0) target = $region25
    $region24: #{bottleneck_forward.9} parent=1 // pred_region
      _
    $region25: #{bottleneck_forward.9} parent=1 // pred_fallthru
      _
    %v24 = vld [vmem:[%s0] sm:$0xf]
    %v25 = vld [vmem:[%s0 + $0x4] sm:$0xf]
    %v26 = vld [vmem:[%s0 + $0x8] sm:$0xf]
    %v27 = vld [vmem:[%s0 + $0xc] sm:$0xf]
    %v28 = vld [vmem:[%s0 + $0x10] sm:$0xf]
    %v29 = vld [vmem:[%s0 + $0x14] sm:$0xf]
    %v30 = vld [vmem:[%s0 + $0x18] sm:$0xf]
    %v31 = vld [vmem:[%s0 + $0x1c] sm:$0xf]
    %v32 = vld [vmem:[%s0 + $0x20] sm:$0xf]
    %v33 = vld [vmem:[%s0 + $0x24] sm:$0xf]
    %v34 = vld [vmem:[%s0 + $0x28] sm:$0xf]
    %v35 = vld [vmem:[%s0 + $0x2c] sm:$0xf]
    %v36 = vld [vmem:[%s0 + $0x30] sm:$0xf]
    %v37 = vld [vmem:[%s0 + $0x34] sm:$0xf]
    %v38 = vld [vmem:[%s0 + $0x38] sm:$0xf]
    %v39 = vld [vmem:[%s0 + $0x3c] sm:$0xf]
    %v40 = vunpack.c.l.bf16 %v24
    %v41 = vunpack.c.l.bf16 %v25
    %v42 = vunpack.c.l.bf16 %v26
    %v43 = vunpack.c.l.bf16 %v27
    %v44 = vunpack.c.l.bf16 %v28
    %v45 = vunpack.c.l.bf16 %v29
    %v46 = vunpack.c.l.bf16 %v30
    %v47 = vunpack.c.l.bf16 %v31
    %v48 = vunpack.c.l.bf16 %v32
    %v49 = vunpack.c.l.bf16 %v33
    %v50 = vunpack.c.l.bf16 %v34
    %v51 = vunpack.c.l.bf16 %v35
    %v52 = vunpack.c.l.bf16 %v36
    %v53 = vunpack.c.l.bf16 %v37
    %v54 = vunpack.c.l.bf16 %v38
    %v55 = vunpack.c.l.bf16 %v39
    %v56 = vld [vmem:[%s2] sm:$0x1]
    %v58 = vlaneseq
    %v59 = vshrl.u32 %v58, 7
    %v60 = vsub.s32 0, %v59
    %v61 = vrot.slane %v56, %v60
    %v63 = vmul.f32 %v40, %v61
    %v64 = vmul.f32 %v41, %v61
    %v65 = vmul.f32 %v42, %v61
    %v66 = vmul.f32 %v43, %v61
    %v67 = vmul.f32 %v44, %v61
    %v68 = vmul.f32 %v45, %v61
    %v69 = vmul.f32 %v46, %v61
    %v70 = vmul.f32 %v47, %v61
    %v71 = vmul.f32 %v48, %v61
    %v72 = vmul.f32 %v49, %v61
    %v73 = vmul.f32 %v50, %v61
    %v74 = vmul.f32 %v51, %v61
    %v75 = vmul.f32 %v52, %v61
    %v76 = vmul.f32 %v53, %v61
    %v77 = vmul.f32 %v54, %v61
    %v78 = vmul.f32 %v55, %v61
    %v79 = vld [vmem:[%s3] sm:$0x1]
    %v81 = vlaneseq
    %v82 = vshrl.u32 %v81, 7
    %v83 = vsub.s32 0, %v82
    %v84 = vrot.slane %v79, %v83
    %v86 = vadd.f32 %v63, %v84
    %v87 = vadd.f32 %v64, %v84
    %v88 = vadd.f32 %v65, %v84
    %v89 = vadd.f32 %v66, %v84
    %v90 = vadd.f32 %v67, %v84
    %v91 = vadd.f32 %v68, %v84
    %v92 = vadd.f32 %v69, %v84
    %v93 = vadd.f32 %v70, %v84
    %v94 = vadd.f32 %v71, %v84
    %v95 = vadd.f32 %v72, %v84
    %v96 = vadd.f32 %v73, %v84
    %v97 = vadd.f32 %v74, %v84
    %v98 = vadd.f32 %v75, %v84
    %v99 = vadd.f32 %v76, %v84
    %v100 = vadd.f32 %v77, %v84
    %v101 = vadd.f32 %v78, %v84
    %v102 = vld [vmem:[%s1] sm:$0xf]
    %v103 = vld [vmem:[%s1 + $0x4] sm:$0xf]
    %v104 = vld [vmem:[%s1 + $0x8] sm:$0xf]
    %v105 = vld [vmem:[%s1 + $0xc] sm:$0xf]
    %v106 = vld [vmem:[%s1 + $0x10] sm:$0xf]
    %v107 = vld [vmem:[%s1 + $0x14] sm:$0xf]
    %v108 = vld [vmem:[%s1 + $0x18] sm:$0xf]
    %v109 = vld [vmem:[%s1 + $0x1c] sm:$0xf]
    %v110 = vld [vmem:[%s1 + $0x20] sm:$0xf]
    %v111 = vld [vmem:[%s1 + $0x24] sm:$0xf]
    %v112 = vld [vmem:[%s1 + $0x28] sm:$0xf]
    %v113 = vld [vmem:[%s1 + $0x2c] sm:$0xf]
    %v114 = vld [vmem:[%s1 + $0x30] sm:$0xf]
    %v115 = vld [vmem:[%s1 + $0x34] sm:$0xf]
    %v116 = vld [vmem:[%s1 + $0x38] sm:$0xf]
    %v117 = vld [vmem:[%s1 + $0x3c] sm:$0xf]
    %v118 = vunpack.c.l.bf16 %v102
    %v119 = vunpack.c.l.bf16 %v103
    %v120 = vunpack.c.l.bf16 %v104
    %v121 = vunpack.c.l.bf16 %v105
    %v122 = vunpack.c.l.bf16 %v106
    %v123 = vunpack.c.l.bf16 %v107
    %v124 = vunpack.c.l.bf16 %v108
    %v125 = vunpack.c.l.bf16 %v109
    %v126 = vunpack.c.l.bf16 %v110
    %v127 = vunpack.c.l.bf16 %v111
    %v128 = vunpack.c.l.bf16 %v112
    %v129 = vunpack.c.l.bf16 %v113
    %v130 = vunpack.c.l.bf16 %v114
    %v131 = vunpack.c.l.bf16 %v115
    %v132 = vunpack.c.l.bf16 %v116
    %v133 = vunpack.c.l.bf16 %v117
    %v134 = vld [vmem:[%s4] sm:$0x1]
    %v136 = vlaneseq
    %v137 = vshrl.u32 %v136, 7
    %v138 = vsub.s32 0, %v137
    %v139 = vrot.slane %v134, %v138
    %v141 = vmul.f32 %v118, %v139
    %v142 = vmul.f32 %v119, %v139
    %v143 = vmul.f32 %v120, %v139
    %v144 = vmul.f32 %v121, %v139
    %v145 = vmul.f32 %v122, %v139
    %v146 = vmul.f32 %v123, %v139
    %v147 = vmul.f32 %v124, %v139
    %v148 = vmul.f32 %v125, %v139
    %v149 = vmul.f32 %v126, %v139
    %v150 = vmul.f32 %v127, %v139
    %v151 = vmul.f32 %v128, %v139
    %v152 = vmul.f32 %v129, %v139
    %v153 = vmul.f32 %v130, %v139
    %v154 = vmul.f32 %v131, %v139
    %v155 = vmul.f32 %v132, %v139
    %v156 = vmul.f32 %v133, %v139
    %v157 = vld [vmem:[%s5] sm:$0x1]
    %v159 = vlaneseq
    %v160 = vshrl.u32 %v159, 7
    %v161 = vsub.s32 0, %v160
    %v162 = vrot.slane %v157, %v161
    %v164 = vadd.f32 %v141, %v162
    %v165 = vadd.f32 %v142, %v162
    %v166 = vadd.f32 %v143, %v162
    %v167 = vadd.f32 %v144, %v162
    %v168 = vadd.f32 %v145, %v162
    %v169 = vadd.f32 %v146, %v162
    %v170 = vadd.f32 %v147, %v162
    %v171 = vadd.f32 %v148, %v162
    %v172 = vadd.f32 %v149, %v162
    %v173 = vadd.f32 %v150, %v162
    %v174 = vadd.f32 %v151, %v162
    %v175 = vadd.f32 %v152, %v162
    %v176 = vadd.f32 %v153, %v162
    %v177 = vadd.f32 %v154, %v162
    %v178 = vadd.f32 %v155, %v162
    %v179 = vadd.f32 %v156, %v162
    %v180 = vadd.f32 %v86, %v164
    %v181 = vadd.f32 %v87, %v165
    %v182 = vadd.f32 %v88, %v166
    %v183 = vadd.f32 %v89, %v167
    %v184 = vadd.f32 %v90, %v168
    %v185 = vadd.f32 %v91, %v169
    %v186 = vadd.f32 %v92, %v170
    %v187 = vadd.f32 %v93, %v171
    %v188 = vadd.f32 %v94, %v172
    %v189 = vadd.f32 %v95, %v173
    %v190 = vadd.f32 %v96, %v174
    %v191 = vadd.f32 %v97, %v175
    %v192 = vadd.f32 %v98, %v176
    %v193 = vadd.f32 %v99, %v177
    %v194 = vadd.f32 %v100, %v178
    %v195 = vadd.f32 %v101, %v179
    %v196 = vmax.f32 %v180, 0.0
    %v197 = vmax.f32 %v181, 0.0
    %v198 = vmax.f32 %v182, 0.0
    %v199 = vmax.f32 %v183, 0.0
    %v200 = vmax.f32 %v184, 0.0
    %v201 = vmax.f32 %v185, 0.0
    %v202 = vmax.f32 %v186, 0.0
    %v203 = vmax.f32 %v187, 0.0
    %v204 = vmax.f32 %v188, 0.0
    %v205 = vmax.f32 %v189, 0.0
    %v206 = vmax.f32 %v190, 0.0
    %v207 = vmax.f32 %v191, 0.0
    %v208 = vmax.f32 %v192, 0.0
    %v209 = vmax.f32 %v193, 0.0
    %v210 = vmax.f32 %v194, 0.0
    %v211 = vmax.f32 %v195, 0.0
    %212 = vst [vmem:[#allocation2] sm:$0xff] %v196
    %213 = vst [vmem:[#allocation2 + $0x8] sm:$0xff] %v197
    %214 = vst [vmem:[#allocation2 + $0x10] sm:$0xff] %v198
    %215 = vst [vmem:[#allocation2 + $0x18] sm:$0xff] %v199
    %216 = vst [vmem:[#allocation2 + $0x20] sm:$0xff] %v200
    %217 = vst [vmem:[#allocation2 + $0x28] sm:$0xff] %v201
    %218 = vst [vmem:[#allocation2 + $0x30] sm:$0xff] %v202
    %219 = vst [vmem:[#allocation2 + $0x38] sm:$0xff] %v203
    %220 = vst [vmem:[#allocation2 + $0x40] sm:$0xff] %v204
    %221 = vst [vmem:[#allocation2 + $0x48] sm:$0xff] %v205
    %222 = vst [vmem:[#allocation2 + $0x50] sm:$0xff] %v206
    %223 = vst [vmem:[#allocation2 + $0x58] sm:$0xff] %v207
    %224 = vst [vmem:[#allocation2 + $0x60] sm:$0xff] %v208
    %225 = vst [vmem:[#allocation2 + $0x68] sm:$0xff] %v209
    %226 = vst [vmem:[#allocation2 + $0x70] sm:$0xff] %v210
    %227 = vst [vmem:[#allocation2 + $0x78] sm:$0xff] %v211
    // Predicated region
    $region26: #{bottleneck_forward.9} parent=1 // pred_check
      _
    $region27: #{bottleneck_forward.9} parent=1 // pred_check_branch
      %229 = sbr.rel (0) target = $region29
    $region28: #{bottleneck_forward.9} parent=1 // pred_region
      %s231 = ssub.s32 2048, 2048
      %232 = vsyncadd [#allocation3], %s231
      %s233 = sshll.u32 [#allocation2], 4
      %s234 = int_to_ptr.vmem [resolvable:$true] %s233
      %239 = dma.vmem_to_hbm [thread:$0]  %s234, 2048, %s6, [#allocation3], 128, 128, 8
    $region29: #{bottleneck_forward.9} parent=1 // pred_fallthru
      _
    // Predicated region
    $region30: #{bottleneck_forward.9} parent=1 // pred_check
      _
    $region31: #{bottleneck_forward.9} parent=1 // pred_check_branch
      %241 = sbr.rel (0) target = $region33
    $region32: #{bottleneck_forward.9} parent=1 // pred_region
      %242 = dma.done [#allocation3], 2048
    $region33: #{bottleneck_forward.9} parent=1 // pred_fallthru
      _
    %243 = vsyncpa [#allocation3], 1

// kernel: bottleneck_forward.6
$region0: #{bottleneck_forward.6}
  #allocation0 [shape = 'u32[]', space=smem, size = 0x4, offset = 0x4, fixed_abs, tag = 'smem constant byte address 0x4 - core index']
  #allocation1 [shape = 'u32[144,128]{1,0:T(1,128)}', space=vmem, size = 0x12000, scoped, tag = 'internal scratch']
  #allocation2 [shape = 'f32[128,128]{1,0:T(8,128)}', space=vmem, size = 0x10000, scoped, tag = 'scratch operand']
  %s0 = inlined_call_operand.vmem [shape: bf16[128,1152], index: 0, kind: input, shape index: {}]
  %s1 = inlined_call_operand.vmem [shape: bf16[1152,128], index: 1, kind: input, shape index: {}]
  %s2 = inlined_call_operand.vmem [shape: bf16[128,128], index: 2, kind: output, shape index: {0}]
  %s3 = inlined_call_operand.vmem [shape: f32[8,128], index: 3, kind: output, shape index: {1}]
  %s4 = inlined_call_operand.vmem [shape: f32[8,128], index: 4, kind: output, shape index: {2}]
  %5 = xla_tuple %s2, %s3, %s4
  %s6 = sld [smem:[#allocation0]]
  $region106: #{bottleneck_forward.6} parent=0
    _
  %s8 = ssub.s32 1, %s6
  %s9 = scalar_select 0, %s8, %s6
  $region1: #{bottleneck_forward.6} parent=0
    #allocation3 [shape = 'u8[65536]{0}', space=vmem, size = 0x10000, scoped, tag = 'input window, operand 0']
    loop: start=0, step=1, limit=11
    $region2: #{bottleneck_forward.6} parent=1 // loop_pre_header
      _
    $region3: #{bottleneck_forward.6} parent=1 // loop_header
      %s11 = sphi 0, %s15
      %p12 = scmp.ge.s32.totalorder %s11, 11
      %s18 = sphi 0, %s37
      %s19 = sphi 0, %s33
      %s20 = sphi 0, %s29
      %s21 = sphi 0, %s18
      %s22 = sphi 0, %s19
      %s23 = sphi 0, %s20
      %s24 = sphi 0, %s21
      %s25 = sphi 0, %s22
      %s26 = sphi 0, %s23
      %s42 = sphi 0, %s44
      %s45 = sphi 0, %s42
      %s46 = sphi 0, %s45
      %s62 = sphi 0, %s46
      %s70 = sphi 0, %s72
      %s73 = sphi 0, %s70
      %s74 = sphi 0, %s73
      %s90 = sphi 0, %s74
      %s98 = sphi 0, %s100
      %s101 = sphi 0, %s98
      %s102 = sphi 0, %s101
      %s118 = sphi 0, %s102
      %s126 = sphi 0, %s128
      %s129 = sphi 0, %s126
      %s130 = sphi 0, %s129
      %s146 = sphi 0, %s130
      %s154 = sphi 0, %s156
      %s157 = sphi 0, %s154
      %s158 = sphi 0, %s157
      %s174 = sphi 0, %s158
    $region4: #{bottleneck_forward.6} parent=1 // loop_header_branch
      %14 = sbr.rel (%p12) target = $region8
    $region5: #{bottleneck_forward.6} parent=1 // loop_body
      %s16 = ssub.s32 %s11, 1
      %s17 = ssub.s32 %s11, 2
      %s27 = sadd.s32 1, %s20
      %p28 = scmp.ge.s32.totalorder %s27, 9
      %s29 = scalar_select %p28, 0, %s27
      %s30 = sadd.s32 1, %s19
      %s31 = scalar_select %p28, %s30, %s19
      %p32 = scmp.ge.s32.totalorder %s31, 1
      %s33 = scalar_select %p32, 0, %s31
      %s34 = sadd.s32 1, %s18
      %s35 = scalar_select %p32, %s34, %s18
      %p36 = scmp.ge.s32.totalorder %s35, 1
      %s37 = scalar_select %p36, 0, %s35
      %s38 = ssub.s32 %s18, %s37
      %s39 = ssub.s32 %s20, %s29
      %s40 = sor.u32 %s38, %s39
      %p41 = scmp.eq.s32.totalorder %s40, 0
      %s43 = sadd.s32 %s42, 1
      %s44 = scalar_select %p41, %s42, %s43
      %p47 = pneg %p41
      %p48 = scmp.eq.s32.totalorder %s11, 8
      %p49 = por %p47, %p48
      %p50 = scmp.ne.s32.totalorder %s42, %s45
      %p51 = scmp.eq.s32.totalorder %s11, 0
      %p52 = por %p50, %p51
      %p53 = scmp.ne.s32.totalorder %s42, %s45
      %p54 = scmp.eq.s32.totalorder %s16, 8
      %p55 = por %p53, %p54
      %p56 = scmp.ne.s32.totalorder %s45, %s46
      %p57 = scmp.eq.s32.totalorder %s16, 0
      %p58 = por %p56, %p57
      %p59 = scmp.ne.s32.totalorder %s45, %s46
      %p60 = scmp.eq.s32.totalorder %s17, 8
      %p61 = por %p59, %p60
      %p63 = scmp.ne.s32.totalorder %s46, %s62
      %p64 = scmp.eq.s32.totalorder %s17, 0
      %p65 = por %p63, %p64
      %s66 = ssub.s32 %s20, %s29
      %s67 = ssub.s32 %s19, %s33
      %s68 = sor.u32 %s66, %s67
      %p69 = scmp.eq.s32.totalorder %s68, 0
      %s71 = sadd.s32 %s70, 1
      %s72 = scalar_select %p69, %s70, %s71
      %p75 = pneg %p69
      %p76 = scmp.eq.s32.totalorder %s11, 8
      %p77 = por %p75, %p76
      %p78 = scmp.ne.s32.totalorder %s70, %s73
      %p79 = scmp.eq.s32.totalorder %s11, 0
      %p80 = por %p78, %p79
      %p81 = scmp.ne.s32.totalorder %s70, %s73
      %p82 = scmp.eq.s32.totalorder %s16, 8
      %p83 = por %p81, %p82
      %p84 = scmp.ne.s32.totalorder %s73, %s74
      %p85 = scmp.eq.s32.totalorder %s16, 0
      %p86 = por %p84, %p85
      %p87 = scmp.ne.s32.totalorder %s73, %s74
      %p88 = scmp.eq.s32.totalorder %s17, 8
      %p89 = por %p87, %p88
      %p91 = scmp.ne.s32.totalorder %s74, %s90
      %p92 = scmp.eq.s32.totalorder %s17, 0
      %p93 = por %p91, %p92
      %s94 = ssub.s32 %s18, %s37
      %s95 = ssub.s32 %s19, %s33
      %s96 = sor.u32 %s94, %s95
      %p97 = scmp.eq.s32.totalorder %s96, 0
      %s99 = sadd.s32 %s98, 1
      %s100 = scalar_select %p97, %s98, %s99
      %p103 = pneg %p97
      %p104 = scmp.eq.s32.totalorder %s11, 8
      %p105 = por %p103, %p104
      %p106 = scmp.ne.s32.totalorder %s98, %s101
      %p107 = scmp.eq.s32.totalorder %s11, 0
      %p108 = por %p106, %p107
      %p109 = scmp.ne.s32.totalorder %s98, %s101
      %p110 = scmp.eq.s32.totalorder %s16, 8
      %p111 = por %p109, %p110
      %p112 = scmp.ne.s32.totalorder %s101, %s102
      %p113 = scmp.eq.s32.totalorder %s16, 0
      %p114 = por %p112, %p113
      %p115 = scmp.ne.s32.totalorder %s101, %s102
      %p116 = scmp.eq.s32.totalorder %s17, 8
      %p117 = por %p115, %p116
      %p119 = scmp.ne.s32.totalorder %s102, %s118
      %p120 = scmp.eq.s32.totalorder %s17, 0
      %p121 = por %p119, %p120
      %s122 = ssub.s32 %s18, %s37
      %s123 = ssub.s32 %s19, %s33
      %s124 = sor.u32 %s122, %s123
      %p125 = scmp.eq.s32.totalorder %s124, 0
      %s127 = sadd.s32 %s126, 1
      %s128 = scalar_select %p125, %s126, %s127
      %p131 = pneg %p125
      %p132 = scmp.eq.s32.totalorder %s11, 8
      %p133 = por %p131, %p132
      %p134 = scmp.ne.s32.totalorder %s126, %s129
      %p135 = scmp.eq.s32.totalorder %s11, 0
      %p136 = por %p134, %p135
      %p137 = scmp.ne.s32.totalorder %s126, %s129
      %p138 = scmp.eq.s32.totalorder %s16, 8
      %p139 = por %p137, %p138
      %p140 = scmp.ne.s32.totalorder %s129, %s130
      %p141 = scmp.eq.s32.totalorder %s16, 0
      %p142 = por %p140, %p141
      %p143 = scmp.ne.s32.totalorder %s129, %s130
      %p144 = scmp.eq.s32.totalorder %s17, 8
      %p145 = por %p143, %p144
      %p147 = scmp.ne.s32.totalorder %s130, %s146
      %p148 = scmp.eq.s32.totalorder %s17, 0
      %p149 = por %p147, %p148
      %s150 = ssub.s32 %s18, %s37
      %s151 = ssub.s32 %s19, %s33
      %s152 = sor.u32 %s150, %s151
      %p153 = scmp.eq.s32.totalorder %s152, 0
      %s155 = sadd.s32 %s154, 1
      %s156 = scalar_select %p153, %s154, %s155
      %p159 = pneg %p153
      %p160 = scmp.eq.s32.totalorder %s11, 8
      %p161 = por %p159, %p160
      %p162 = scmp.ne.s32.totalorder %s154, %s157
      %p163 = scmp.eq.s32.totalorder %s11, 0
      %p164 = por %p162, %p163
      %p165 = scmp.ne.s32.totalorder %s154, %s157
      %p166 = scmp.eq.s32.totalorder %s16, 8
      %p167 = por %p165, %p166
      %p168 = scmp.ne.s32.totalorder %s157, %s158
      %p169 = scmp.eq.s32.totalorder %s16, 0
      %p170 = por %p168, %p169
      %p171 = scmp.ne.s32.totalorder %s157, %s158
      %p172 = scmp.eq.s32.totalorder %s17, 8
      %p173 = por %p171, %p172
      %p175 = scmp.ne.s32.totalorder %s158, %s174
      %p176 = scmp.eq.s32.totalorder %s17, 0
      %p177 = por %p175, %p176
      %p178 = scmp.le.s32.totalorder 1, %s11
      %p179 = scmp.lt.s32.totalorder %s11, 10
      %p180 = pnand %p178, %p179
      %p181 = pneg %p180
      // Predicated region
      $region9: #{bottleneck_forward.6} parent=5 // pred_check
        _
      $region10: #{bottleneck_forward.6} parent=5 // pred_check_branch
        %183 = sbr.rel (%p180) target = $region12
      $region11: #{bottleneck_forward.6} parent=5 // pred_region
        %s184 = ssub.s32 %s11, 1
      $region12: #{bottleneck_forward.6} parent=5 // pred_fallthru
        _
      %p185 = scmp.lt.s32.totalorder %s11, 9
      // Predicated region
      $region13: #{bottleneck_forward.6} parent=5 // pred_check
        %p186 = pneg %p185
      $region14: #{bottleneck_forward.6} parent=5 // pred_check_branch
        %188 = sbr.rel (%p186) target = $region16
      $region15: #{bottleneck_forward.6} parent=5 // pred_region
        // Predicated region
        $region17: #{bottleneck_forward.6} parent=15 // pred_check
          %p189 = pneg %p52
        $region18: #{bottleneck_forward.6} parent=15 // pred_check_branch
          %191 = sbr.rel (%p189) target = $region20
        $region19: #{bottleneck_forward.6} parent=15 // pred_region
          %s192 = sand.u32 %s42, 1
          %s193 = sand.u32 %s42, 1
          %s194 = smul.addr %s193, 64
          %s195 = scalar_lea.vmem [#allocation3], %s194
          %s196 = smul.u32 16, %s18
          %s197 = smul.addr %s196, 9
          %s198 = sadd.s32 %s20, %s197
          %s199 = smul.addr %s198, 4
          %s200 = scalar_lea.vmem %s0, %s199
          // Predicated region
          $region21: #{bottleneck_forward.6} parent=19 // pred_check
            _
          $region22: #{bottleneck_forward.6} parent=19 // pred_check_branch
            %202 = sbr.rel (0) target = $region24
          $region23: #{bottleneck_forward.6} parent=19 // pred_region
            // Predicated region
            $region25: #{bottleneck_forward.6} parent=23 // pred_check
              _
            $region26: #{bottleneck_forward.6} parent=23 // pred_check_branch
              %204 = sbr.rel target = $region28
            $region27: #{bottleneck_forward.6} parent=23 // pred_region
              // Predicated region
              $region40: #{bottleneck_forward.6} parent=27 // pred_check
                _
              $region41: #{bottleneck_forward.6} parent=27 // pred_check_branch
                %249 = sbr.rel (0) target = $region43
              $region42: #{bottleneck_forward.6} parent=27 // pred_region
                loop: start=0, step=1, limit=1
                $region44: #{bottleneck_forward.6} parent=42 // loop_pre_header
                  _
                $region45: #{bottleneck_forward.6} parent=42 // loop_header
                  %s251 = sphi 0, %s255
                  %p252 = scmp.ge.s32.totalorder %s251, 1
                  %s256 = sphi %s200, %s200
                  %s257 = sphi %s195, %s195
                $region46: #{bottleneck_forward.6} parent=42 // loop_header_branch
                  %254 = sbr.rel (%p252) target = $region50
                $region47: #{bottleneck_forward.6} parent=42 // loop_body
                  _
                $region48: #{bottleneck_forward.6} parent=42 // loop_footer
                  %s255 = sadd.s32 1, %s251
                $region49: #{bottleneck_forward.6} parent=42 // loop_footer_branch
                  %250 = sbr.rel target = $region45
                $region50: #{bottleneck_forward.6} parent=42 // loop_exit
                  _
                loop: start=0, step=1, limit=1
                $region51: #{bottleneck_forward.6} parent=42 // loop_pre_header
                  _
                $region52: #{bottleneck_forward.6} parent=42 // loop_header
                  %s260 = sphi 0, %s264
                  %p261 = scmp.ge.s32.totalorder %s260, 1
                  %s265 = sphi %s200, %s200
                  %s266 = sphi %s195, %s195
                $region53: #{bottleneck_forward.6} parent=42 // loop_header_branch
                  %263 = sbr.rel (%p261) target = $region57
                $region54: #{bottleneck_forward.6} parent=42 // loop_body
                  %v267 = vld [vmem:[%s265] sm:$0xf]
                  %268 = vst [vmem:[%s266] sm:$0xf] %v267
                  %v269 = vld [vmem:[%s265 + $0x24] sm:$0xf]
                  %270 = vst [vmem:[%s266 + $0x4] sm:$0xf] %v269
                  %v271 = vld [vmem:[%s265 + $0x48] sm:$0xf]
                  %272 = vst [vmem:[%s266 + $0x8] sm:$0xf] %v271
                  %v273 = vld [vmem:[%s265 + $0x6c] sm:$0xf]
                  %274 = vst [vmem:[%s266 + $0xc] sm:$0xf] %v273
                  %v275 = vld [vmem:[%s265 + $0x90] sm:$0xf]
                  %276 = vst [vmem:[%s266 + $0x10] sm:$0xf] %v275
                  %v277 = vld [vmem:[%s265 + $0xb4] sm:$0xf]
                  %278 = vst [vmem:[%s266 + $0x14] sm:$0xf] %v277
                  %v279 = vld [vmem:[%s265 + $0xd8] sm:$0xf]
                  %280 = vst [vmem:[%s266 + $0x18] sm:$0xf] %v279
                  %v281 = vld [vmem:[%s265 + $0xfc] sm:$0xf]
                  %282 = vst [vmem:[%s266 + $0x1c] sm:$0xf] %v281
                  %v283 = vld [vmem:[%s265 + $0x120] sm:$0xf]
                  %284 = vst [vmem:[%s266 + $0x20] sm:$0xf] %v283
                  %v285 = vld [vmem:[%s265 + $0x144] sm:$0xf]
                  %286 = vst [vmem:[%s266 + $0x24] sm:$0xf] %v285
                  %v287 = vld [vmem:[%s265 + $0x168] sm:$0xf]
                  %288 = vst [vmem:[%s266 + $0x28] sm:$0xf] %v287
                  %v289 = vld [vmem:[%s265 + $0x18c] sm:$0xf]
                  %290 = vst [vmem:[%s266 + $0x2c] sm:$0xf] %v289
                  %v291 = vld [vmem:[%s265 + $0x1b0] sm:$0xf]
                  %292 = vst [vmem:[%s266 + $0x30] sm:$0xf] %v291
                  %v293 = vld [vmem:[%s265 + $0x1d4] sm:$0xf]
                  %294 = vst [vmem:[%s266 + $0x34] sm:$0xf] %v293
                  %v295 = vld [vmem:[%s265 + $0x1f8] sm:$0xf]
                  %296 = vst [vmem:[%s266 + $0x38] sm:$0xf] %v295
                  %v297 = vld [vmem:[%s265 + $0x21c] sm:$0xf]
                  %298 = vst [vmem:[%s266 + $0x3c] sm:$0xf] %v297
                $region55: #{bottleneck_forward.6} parent=42 // loop_footer
                  %s264 = sadd.s32 1, %s260
                $region56: #{bottleneck_forward.6} parent=42 // loop_footer_branch
                  %259 = sbr.rel target = $region52
                $region57: #{bottleneck_forward.6} parent=42 // loop_exit
                  _
              $region43: #{bottleneck_forward.6} parent=27 // pred_fallthru
                _
            $region28: #{bottleneck_forward.6} parent=23 // pred_fallthru
              _
            // Predicated region
            $region29: #{bottleneck_forward.6} parent=23 // pred_check
              _
            $region30: #{bottleneck_forward.6} parent=23 // pred_check_branch
              %206 = sbr.rel (0) target = $region32
            $region31: #{bottleneck_forward.6} parent=23 // pred_region
              loop: start=0, step=1, limit=1
              $region33: #{bottleneck_forward.6} parent=31 // loop_pre_header
                _
              $region34: #{bottleneck_forward.6} parent=31 // loop_header
                %s209 = sphi 0, %s213
                %p210 = scmp.ge.s32.totalorder %s209, 1
                %s214 = sphi %s200, %s200
                %s215 = sphi %s195, %s195
              $region35: #{bottleneck_forward.6} parent=31 // loop_header_branch
                %212 = sbr.rel (%p210) target = $region39
              $region36: #{bottleneck_forward.6} parent=31 // loop_body
                %v216 = vld [vmem:[%s214] sm:$0xf]
                %217 = vst [vmem:[%s215] sm:$0xf] %v216
                %v218 = vld [vmem:[%s214 + $0x24] sm:$0xf]
                %219 = vst [vmem:[%s215 + $0x4] sm:$0xf] %v218
                %v220 = vld [vmem:[%s214 + $0x48] sm:$0xf]
                %221 = vst [vmem:[%s215 + $0x8] sm:$0xf] %v220
                %v222 = vld [vmem:[%s214 + $0x6c] sm:$0xf]
                %223 = vst [vmem:[%s215 + $0xc] sm:$0xf] %v222
                %v224 = vld [vmem:[%s214 + $0x90] sm:$0xf]
                %225 = vst [vmem:[%s215 + $0x10] sm:$0xf] %v224
                %v226 = vld [vmem:[%s214 + $0xb4] sm:$0xf]
                %227 = vst [vmem:[%s215 + $0x14] sm:$0xf] %v226
                %v228 = vld [vmem:[%s214 + $0xd8] sm:$0xf]
                %229 = vst [vmem:[%s215 + $0x18] sm:$0xf] %v228
                %v230 = vld [vmem:[%s214 + $0xfc] sm:$0xf]
                %231 = vst [vmem:[%s215 + $0x1c] sm:$0xf] %v230
                %v232 = vld [vmem:[%s214 + $0x120] sm:$0xf]
                %233 = vst [vmem:[%s215 + $0x20] sm:$0xf] %v232
                %v234 = vld [vmem:[%s214 + $0x144] sm:$0xf]
                %235 = vst [vmem:[%s215 + $0x24] sm:$0xf] %v234
                %v236 = vld [vmem:[%s214 + $0x168] sm:$0xf]
                %237 = vst [vmem:[%s215 + $0x28] sm:$0xf] %v236
                %v238 = vld [vmem:[%s214 + $0x18c] sm:$0xf]
                %239 = vst [vmem:[%s215 + $0x2c] sm:$0xf] %v238
                %v240 = vld [vmem:[%s214 + $0x1b0] sm:$0xf]
                %241 = vst [vmem:[%s215 + $0x30] sm:$0xf] %v240
                %v242 = vld [vmem:[%s214 + $0x1d4] sm:$0xf]
                %243 = vst [vmem:[%s215 + $0x34] sm:$0xf] %v242
                %v244 = vld [vmem:[%s214 + $0x1f8] sm:$0xf]
                %245 = vst [vmem:[%s215 + $0x38] sm:$0xf] %v244
                %v246 = vld [vmem:[%s214 + $0x21c] sm:$0xf]
                %247 = vst [vmem:[%s215 + $0x3c] sm:$0xf] %v246
              $region37: #{bottleneck_forward.6} parent=31 // loop_footer
                %s213 = sadd.s32 1, %s209
              $region38: #{bottleneck_forward.6} parent=31 // loop_footer_branch
                %208 = sbr.rel target = $region34
              $region39: #{bottleneck_forward.6} parent=31 // loop_exit
                _
            $region32: #{bottleneck_forward.6} parent=23 // pred_fallthru
              _
          $region24: #{bottleneck_forward.6} parent=19 // pred_fallthru
            _
          %299 = vnop
        $region20: #{bottleneck_forward.6} parent=15 // pred_fallthru
          _
        // Predicated region
        $region58: #{bottleneck_forward.6} parent=15 // pred_check
          %p300 = pneg %p80
        $region59: #{bottleneck_forward.6} parent=15 // pred_check_branch
          %302 = sbr.rel (%p300) target = $region61
        $region60: #{bottleneck_forward.6} parent=15 // pred_region
          %s303 = smul.u32 16, %s20
          %p304 = scmp.lt.s32.totalorder %s303, 143
          %s305 = scalar_select %p304, %s303, 143
          %p306 = scmp.lt.s32.totalorder %s19, 0
          %s307 = scalar_select %p306, %s19, 0
          %s308 = sadd.s32 %s307, %s305
          %s309 = smul.addr %s308, 4
          %s310 = scalar_lea.vmem %s1, %s309
          %s311 = smul.u32 16, %s20
        $region61: #{bottleneck_forward.6} parent=15 // pred_fallthru
          _
      $region16: #{bottleneck_forward.6} parent=5 // pred_fallthru
        _
      %p312 = scmp.le.s32.totalorder 1, %s11
      %p313 = scmp.lt.s32.totalorder %s11, 10
      %p314 = pnand %p312, %p313
      %p315 = pneg %p314
      // Predicated region
      $region62: #{bottleneck_forward.6} parent=5 // pred_check
        _
      $region63: #{bottleneck_forward.6} parent=5 // pred_check_branch
        %317 = sbr.rel (%p314) target = $region65
      $region64: #{bottleneck_forward.6} parent=5 // pred_region
        %s318 = ssub.s32 %s11, 1
        %s319 = sand.u32 %s45, 1
        %s320 = sand.u32 %s45, 1
        %s321 = smul.addr %s320, 64
        %s322 = scalar_lea.vmem [#allocation3], %s321
        // Predicated region
        $region66: #{bottleneck_forward.6} parent=64 // pred_check
          %p323 = pneg %p58
        $region67: #{bottleneck_forward.6} parent=64 // pred_check_branch
          %325 = sbr.rel (%p323) target = $region69
        $region68: #{bottleneck_forward.6} parent=64 // pred_region
          _
        $region69: #{bottleneck_forward.6} parent=64 // pred_fallthru
          _
        %s326 = sand.u32 %s45, 1
        %s327 = sand.u32 %s45, 1
        %s328 = smul.addr %s327, 64
        %s329 = scalar_lea.vmem [#allocation3], %s328
        %p330 = pneg %p58
        %p331 = pneg %p55
        %s332 = smul.u32 16, %s23
        %p333 = scmp.lt.s32.totalorder %s332, 143
        %s334 = scalar_select %p333, %s332, 143
        %p335 = scmp.lt.s32.totalorder %s22, 0
        %s336 = scalar_select %p335, %s22, 0
        %s337 = sadd.s32 %s336, %s334
        %s338 = smul.addr %s337, 4
        %s339 = scalar_lea.vmem %s1, %s338
        %p340 = pneg %p86
        %p341 = pneg %p83
        %p342 = pneg %p114
        %p343 = pneg %p111
        %s344 = smul.u32 16, %s21
        %p345 = scmp.lt.s32.totalorder %s344, 15
        %s346 = scalar_select %p345, %s344, 15
        %p347 = scmp.lt.s32.totalorder %s22, 0
        %s348 = scalar_select %p347, %s22, 0
        %s349 = sadd.s32 %s348, %s346
        %s350 = smul.addr %s349, 4
        %s351 = scalar_lea.vmem %s2, %s350
        %p352 = pneg %p142
        %p353 = pneg %p139
        %p354 = scmp.lt.s32.totalorder %s21, 0
        %s355 = scalar_select %p354, %s21, 0
        %p356 = scmp.lt.s32.totalorder %s22, 0
        %s357 = scalar_select %p356, %s22, 0
        %s358 = sadd.s32 %s357, %s355
        %s359 = smul.addr %s358, 8
        %s360 = scalar_lea.vmem %s3, %s359
        %p361 = pneg %p170
        %p362 = pneg %p167
        %p363 = scmp.lt.s32.totalorder %s21, 0
        %s364 = scalar_select %p363, %s21, 0
        %p365 = scmp.lt.s32.totalorder %s22, 0
        %s366 = scalar_select %p365, %s22, 0
        %s367 = sadd.s32 %s366, %s364
        %s368 = smul.addr %s367, 8
        %s369 = scalar_lea.vmem %s4, %s368
        %s370 = smul.u32 16, %s21
        %s371 = smul.u32 16, %s23
        %p372 = scmp.lt.s32.totalorder %s371, 143
        %s373 = scalar_select %p372, %s371, 143
        %p374 = scmp.lt.s32.totalorder %s22, 0
        %s375 = scalar_select %p374, %s22, 0
        %s376 = sadd.s32 %s375, %s373
        %s377 = smul.addr %s376, 4
        %s378 = scalar_lea.vmem %s1, %s377
        %s379 = smul.u32 16, %s23
        %s380 = smul.u32 16, %s21
        %p381 = scmp.lt.s32.totalorder %s380, 15
        %s382 = scalar_select %p381, %s380, 15
        %p383 = scmp.lt.s32.totalorder %s22, 0
        %s384 = scalar_select %p383, %s22, 0
        %s385 = sadd.s32 %s384, %s382
        %s386 = smul.addr %s385, 4
        %s387 = scalar_lea.vmem %s2, %s386
        %s388 = smul.u32 16, %s21
        %p389 = scmp.lt.s32.totalorder %s21, 0
        %s390 = scalar_select %p389, %s21, 0
        %p391 = scmp.lt.s32.totalorder %s22, 0
        %s392 = scalar_select %p391, %s22, 0
        %s393 = sadd.s32 %s392, %s390
        %s394 = smul.addr %s393, 8
        %s395 = scalar_lea.vmem %s3, %s394
        %p396 = scmp.lt.s32.totalorder %s21, 0
        %s397 = scalar_select %p396, %s21, 0
        %p398 = scmp.lt.s32.totalorder %s22, 0
        %s399 = scalar_select %p398, %s22, 0
        %s400 = sadd.s32 %s399, %s397
        %s401 = smul.addr %s400, 8
        %s402 = scalar_lea.vmem %s4, %s401
        %p404 = scmp.eq.s32.totalorder %s23, 0
        // Predicated region
        $region70: #{bottleneck_forward.6} parent=64 // pred_check
          %p405 = pneg %p404
        $region71: #{bottleneck_forward.6} parent=64 // pred_check_branch
          %407 = sbr.rel (%p405) target = $region73
        $region72: #{bottleneck_forward.6} parent=64 // pred_region
          %408 = vst [vmem:[#allocation2] sm:$0xff] 0.0
          %409 = vst [vmem:[#allocation2 + $0x8] sm:$0xff] 0.0
          %410 = vst [vmem:[#allocation2 + $0x10] sm:$0xff] 0.0
          %411 = vst [vmem:[#allocation2 + $0x18] sm:$0xff] 0.0
          %412 = vst [vmem:[#allocation2 + $0x20] sm:$0xff] 0.0
          %413 = vst [vmem:[#allocation2 + $0x28] sm:$0xff] 0.0
          %414 = vst [vmem:[#allocation2 + $0x30] sm:$0xff] 0.0
          %415 = vst [vmem:[#allocation2 + $0x38] sm:$0xff] 0.0
          %416 = vst [vmem:[#allocation2 + $0x40] sm:$0xff] 0.0
          %417 = vst [vmem:[#allocation2 + $0x48] sm:$0xff] 0.0
          %418 = vst [vmem:[#allocation2 + $0x50] sm:$0xff] 0.0
          %419 = vst [vmem:[#allocation2 + $0x58] sm:$0xff] 0.0
          %420 = vst [vmem:[#allocation2 + $0x60] sm:$0xff] 0.0
          %421 = vst [vmem:[#allocation2 + $0x68] sm:$0xff] 0.0
          %422 = vst [vmem:[#allocation2 + $0x70] sm:$0xff] 0.0
          %423 = vst [vmem:[#allocation2 + $0x78] sm:$0xff] 0.0
        $region73: #{bottleneck_forward.6} parent=64 // pred_fallthru
          _
        %v424 = vld [vmem:[%s322] sm:$0xf]
        %v425 = vld [vmem:[%s322 + $0x4] sm:$0xf]
        %v426 = vld [vmem:[%s322 + $0x8] sm:$0xf]
        %v427 = vld [vmem:[%s322 + $0xc] sm:$0xf]
        %v428 = vld [vmem:[%s322 + $0x10] sm:$0xf]
        %v429 = vld [vmem:[%s322 + $0x14] sm:$0xf]
        %v430 = vld [vmem:[%s322 + $0x18] sm:$0xf]
        %v431 = vld [vmem:[%s322 + $0x1c] sm:$0xf]
        %v432 = vld [vmem:[%s322 + $0x20] sm:$0xf]
        %v433 = vld [vmem:[%s322 + $0x24] sm:$0xf]
        %v434 = vld [vmem:[%s322 + $0x28] sm:$0xf]
        %v435 = vld [vmem:[%s322 + $0x2c] sm:$0xf]
        %v436 = vld [vmem:[%s322 + $0x30] sm:$0xf]
        %v437 = vld [vmem:[%s322 + $0x34] sm:$0xf]
        %v438 = vld [vmem:[%s322 + $0x38] sm:$0xf]
        %v439 = vld [vmem:[%s322 + $0x3c] sm:$0xf]
        %v440 = vld [vmem:[#allocation2] sm:$0xff]
        %v441 = vld [vmem:[#allocation2 + $0x8] sm:$0xff]
        %v442 = vld [vmem:[#allocation2 + $0x10] sm:$0xff]
        %v443 = vld [vmem:[#allocation2 + $0x18] sm:$0xff]
        %v444 = vld [vmem:[#allocation2 + $0x20] sm:$0xff]
        %v445 = vld [vmem:[#allocation2 + $0x28] sm:$0xff]
        %v446 = vld [vmem:[#allocation2 + $0x30] sm:$0xff]
        %v447 = vld [vmem:[#allocation2 + $0x38] sm:$0xff]
        %v448 = vld [vmem:[#allocation2 + $0x40] sm:$0xff]
        %v449 = vld [vmem:[#allocation2 + $0x48] sm:$0xff]
        %v450 = vld [vmem:[#allocation2 + $0x50] sm:$0xff]
        %v451 = vld [vmem:[#allocation2 + $0x58] sm:$0xff]
        %v452 = vld [vmem:[#allocation2 + $0x60] sm:$0xff]
        %v453 = vld [vmem:[#allocation2 + $0x68] sm:$0xff]
        %v454 = vld [vmem:[#allocation2 + $0x70] sm:$0xff]
        %v455 = vld [vmem:[#allocation2 + $0x78] sm:$0xff]
        %v456 = vld [vmem:[%s378] sm:$0xf]
        %v457 = vld [vmem:[%s378 + $0x4] sm:$0xf]
        %v458 = vld [vmem:[%s378 + $0x8] sm:$0xf]
        %v459 = vld [vmem:[%s378 + $0xc] sm:$0xf]
        %v460 = vld [vmem:[%s378 + $0x10] sm:$0xf]
        %v461 = vld [vmem:[%s378 + $0x14] sm:$0xf]
        %v462 = vld [vmem:[%s378 + $0x18] sm:$0xf]
        %v463 = vld [vmem:[%s378 + $0x1c] sm:$0xf]
        %v464 = vld [vmem:[%s378 + $0x20] sm:$0xf]
        %v465 = vld [vmem:[%s378 + $0x24] sm:$0xf]
        %v466 = vld [vmem:[%s378 + $0x28] sm:$0xf]
        %v467 = vld [vmem:[%s378 + $0x2c] sm:$0xf]
        %v468 = vld [vmem:[%s378 + $0x30] sm:$0xf]
        %v469 = vld [vmem:[%s378 + $0x34] sm:$0xf]
        %v470 = vld [vmem:[%s378 + $0x38] sm:$0xf]
        %v471 = vld [vmem:[%s378 + $0x3c] sm:$0xf]
        %v488 = vunpack.c.l.b16 %v424
        %v489 = vunpack.c.l.b16 %v425
        %v490 = vunpack.c.l.b16 %v426
        %v491 = vunpack.c.l.b16 %v427
        %v492 = vunpack.c.l.b16 %v428
        %v493 = vunpack.c.l.b16 %v429
        %v494 = vunpack.c.l.b16 %v430
        %v495 = vunpack.c.l.b16 %v431
        %v496 = vunpack.c.l.b16 %v432
        %v497 = vunpack.c.l.b16 %v433
        %v498 = vunpack.c.l.b16 %v434
        %v499 = vunpack.c.l.b16 %v435
        %v500 = vunpack.c.l.b16 %v436
        %v501 = vunpack.c.l.b16 %v437
        %v502 = vunpack.c.l.b16 %v438
        %v503 = vunpack.c.l.b16 %v439
        %v504 = vpack.c.b16 %v489, %v488
        %v505 = vpack.c.b16 %v491, %v490
        %v506 = vpack.c.b16 %v493, %v492
        %v507 = vpack.c.b16 %v495, %v494
        %v508 = vpack.c.b16 %v497, %v496
        %v509 = vpack.c.b16 %v499, %v498
        %v510 = vpack.c.b16 %v501, %v500
        %v511 = vpack.c.b16 %v503, %v502
        %v536 = vunpack.c.l.b16 %v456
        %v537 = vunpack.c.l.b16 %v457
        %v538 = vunpack.c.l.b16 %v458
        %v539 = vunpack.c.l.b16 %v459
        %v540 = vunpack.c.l.b16 %v460
        %v541 = vunpack.c.l.b16 %v461
        %v542 = vunpack.c.l.b16 %v462
        %v543 = vunpack.c.l.b16 %v463
        %v544 = vunpack.c.l.b16 %v464
        %v545 = vunpack.c.l.b16 %v465
        %v546 = vunpack.c.l.b16 %v466
        %v547 = vunpack.c.l.b16 %v467
        %v548 = vunpack.c.l.b16 %v468
        %v549 = vunpack.c.l.b16 %v469
        %v550 = vunpack.c.l.b16 %v470
        %v551 = vunpack.c.l.b16 %v471
        %v552 = vpack.c.b16 %v537, %v536
        %v553 = vpack.c.b16 %v539, %v538
        %v554 = vpack.c.b16 %v541, %v540
        %v555 = vpack.c.b16 %v543, %v542
        %v556 = vpack.c.b16 %v545, %v544
        %v557 = vpack.c.b16 %v547, %v546
        %v558 = vpack.c.b16 %v549, %v548
        %v559 = vpack.c.b16 %v551, %v550
        %568 = vmatprep.subr.bf16.mxu0 0
        %569 = vmatpush1.bf16.msra.mxu0 %v552
        %570 = vmatprep.subr.bf16.mxu0 0
        %571 = vmatpush1.bf16.msra.mxu0 %v553
        %572 = vmatprep.subr.bf16.mxu0 0
        %573 = vmatpush1.bf16.msra.mxu0 %v554
        %574 = vmatprep.subr.bf16.mxu0 0
        %575 = vmatpush1.bf16.msra.mxu0 %v555
        %576 = vmatprep.subr.bf16.mxu0 0
        %577 = vmatpush1.bf16.msra.mxu0 %v556
        %578 = vmatprep.subr.bf16.mxu0 0
        %579 = vmatpush1.bf16.msra.mxu0 %v557
        %580 = vmatprep.subr.bf16.mxu0 0
        %581 = vmatpush1.bf16.msra.mxu0 %v558
        %582 = vmatprep.subr.bf16.mxu0 0
        %583 = vmatpush1.bf16.msra.mxu0 %v559
        %584 = vmatprep.subr.bf16.mxu0 0
        %585 = vmatpush1.bf16.msra.mxu0 0
        %586 = vmatprep.subr.bf16.mxu0 0
        %587 = vmatpush1.bf16.msra.mxu0 0
        %588 = vmatprep.subr.bf16.mxu0 0
        %589 = vmatpush1.bf16.msra.mxu0 0
        %590 = vmatprep.subr.bf16.mxu0 0
        %591 = vmatpush1.bf16.msra.mxu0 0
        %592 = vmatprep.subr.bf16.mxu0 0
        %593 = vmatpush1.bf16.msra.mxu0 0
        %594 = vmatprep.subr.bf16.mxu0 0
        %595 = vmatpush1.bf16.msra.mxu0 0
        %596 = vmatprep.subr.bf16.mxu0 0
        %597 = vmatpush1.bf16.msra.mxu0 0
        %598 = vmatprep.subr.bf16.mxu0 0
        %599 = vmatpush1.bf16.msra.mxu0 0
        %600 = vmatprep.mubr.bf16.mxu0 0
        %601 = vmatmul.mubr.bf16.gmra.mrb[0].mxu0 %v504
        %v602 = vpop.f32.mrb[0].mxu0
        %v603 = vadd.f32 0.0, %v602
        %v604 = vpop.f32.mrb[0].mxu0
        %v605 = vpop.f32.mrb[0].mxu0
        %v606 = vadd.f32 0.0, %v605
        %v607 = vpop.f32.mrb[0].mxu0
        %608 = vmatprep.mubr.bf16.mxu0 0
        %609 = vmatmul.mubr.bf16.gmra.mrb[0].mxu0 %v505
        %v610 = vpop.f32.mrb[0].mxu0
        %v611 = vadd.f32 0.0, %v610
        %v612 = vpop.f32.mrb[0].mxu0
        %v613 = vpop.f32.mrb[0].mxu0
        %v614 = vadd.f32 0.0, %v613
        %v615 = vpop.f32.mrb[0].mxu0
        %616 = vmatprep.mubr.bf16.mxu0 0
        %617 = vmatmul.mubr.bf16.gmra.mrb[0].mxu0 %v506
        %v618 = vpop.f32.mrb[0].mxu0
        %v619 = vadd.f32 0.0, %v618
        %v620 = vpop.f32.mrb[0].mxu0
        %v621 = vpop.f32.mrb[0].mxu0
        %v622 = vadd.f32 0.0, %v621
        %v623 = vpop.f32.mrb[0].mxu0
        %624 = vmatprep.mubr.bf16.mxu0 0
        %625 = vmatmul.mubr.bf16.gmra.mrb[0].mxu0 %v507
        %v626 = vpop.f32.mrb[0].mxu0
        %v627 = vadd.f32 0.0, %v626
        %v628 = vpop.f32.mrb[0].mxu0
        %v629 = vpop.f32.mrb[0].mxu0
        %v630 = vadd.f32 0.0, %v629
        %v631 = vpop.f32.mrb[0].mxu0
        %632 = vmatprep.mubr.bf16.mxu0 0
        %633 = vmatmul.mubr.bf16.gmra.mrb[0].mxu0 %v508
        %v634 = vpop.f32.mrb[0].mxu0
        %v635 = vadd.f32 0.0, %v634
        %v636 = vpop.f32.mrb[0].mxu0
        %v637 = vpop.f32.mrb[0].mxu0
        %v638 = vadd.f32 0.0, %v637
        %v639 = vpop.f32.mrb[0].mxu0
        %640 = vmatprep.mubr.bf16.mxu0 0
        %641 = vmatmul.mubr.bf16.gmra.mrb[0].mxu0 %v509
        %v642 = vpop.f32.mrb[0].mxu0
        %v643 = vadd.f32 0.0, %v642
        %v644 = vpop.f32.mrb[0].mxu0
        %v645 = vpop.f32.mrb[0].mxu0
        %v646 = vadd.f32 0.0, %v645
        %v647 = vpop.f32.mrb[0].mxu0
        %648 = vmatprep.mubr.bf16.mxu0 0
        %649 = vmatmul.mubr.bf16.gmra.mrb[0].mxu0 %v510
        %v650 = vpop.f32.mrb[0].mxu0
        %v651 = vadd.f32 0.0, %v650
        %v652 = vpop.f32.mrb[0].mxu0
        %v653 = vpop.f32.mrb[0].mxu0
        %v654 = vadd.f32 0.0, %v653
        %v655 = vpop.f32.mrb[0].mxu0
        %656 = vmatprep.mubr.bf16.mxu0 0
        %657 = vmatmul.mubr.bf16.gmra.mrb[0].mxu0 %v511
        %v658 = vpop.f32.mrb[0].mxu0
        %v659 = vadd.f32 0.0, %v658
        %v660 = vpop.f32.mrb[0].mxu0
        %v661 = vpop.f32.mrb[0].mxu0
        %v662 = vadd.f32 0.0, %v661
        %v663 = vpop.f32.mrb[0].mxu0
        %664 = vdwg.mxu0
        %v665 = vadd.f32 %v440, %v603
        %v666 = vadd.f32 %v441, %v606
        %v667 = vadd.f32 %v442, %v611
        %v668 = vadd.f32 %v443, %v614
        %v669 = vadd.f32 %v444, %v619
        %v670 = vadd.f32 %v445, %v622
        %v671 = vadd.f32 %v446, %v627
        %v672 = vadd.f32 %v447, %v630
        %v673 = vadd.f32 %v448, %v635
        %v674 = vadd.f32 %v449, %v638
        %v675 = vadd.f32 %v450, %v643
        %v676 = vadd.f32 %v451, %v646
        %v677 = vadd.f32 %v452, %v651
        %v678 = vadd.f32 %v453, %v654
        %v679 = vadd.f32 %v454, %v659
        %v680 = vadd.f32 %v455, %v662
        %681 = vst [vmem:[#allocation2] sm:$0xff] %v665
        %682 = vst [vmem:[#allocation2 + $0x8] sm:$0xff] %v666
        %683 = vst [vmem:[#allocation2 + $0x10] sm:$0xff] %v667
        %684 = vst [vmem:[#allocation2 + $0x18] sm:$0xff] %v668
        %685 = vst [vmem:[#allocation2 + $0x20] sm:$0xff] %v669
        %686 = vst [vmem:[#allocation2 + $0x28] sm:$0xff] %v670
        %687 = vst [vmem:[#allocation2 + $0x30] sm:$0xff] %v671
        %688 = vst [vmem:[#allocation2 + $0x38] sm:$0xff] %v672
        %689 = vst [vmem:[#allocation2 + $0x40] sm:$0xff] %v673
        %690 = vst [vmem:[#allocation2 + $0x48] sm:$0xff] %v674
        %691 = vst [vmem:[#allocation2 + $0x50] sm:$0xff] %v675
        %692 = vst [vmem:[#allocation2 + $0x58] sm:$0xff] %v676
        %693 = vst [vmem:[#allocation2 + $0x60] sm:$0xff] %v677
        %694 = vst [vmem:[#allocation2 + $0x68] sm:$0xff] %v678
        %695 = vst [vmem:[#allocation2 + $0x70] sm:$0xff] %v679
        %696 = vst [vmem:[#allocation2 + $0x78] sm:$0xff] %v680
        %p697 = scmp.eq.s32.totalorder %s23, 8
        // Predicated region
        $region74: #{bottleneck_forward.6} parent=64 // pred_check
          %p698 = pneg %p697
        $region75: #{bottleneck_forward.6} parent=64 // pred_check_branch
          %700 = sbr.rel (%p698) target = $region77
        $region76: #{bottleneck_forward.6} parent=64 // pred_region
          %v701 = vld [vmem:[#allocation2] sm:$0xff]
          %v702 = vld [vmem:[#allocation2 + $0x8] sm:$0xff]
          %v703 = vld [vmem:[#allocation2 + $0x10] sm:$0xff]
          %v704 = vld [vmem:[#allocation2 + $0x18] sm:$0xff]
          %v705 = vld [vmem:[#allocation2 + $0x20] sm:$0xff]
          %v706 = vld [vmem:[#allocation2 + $0x28] sm:$0xff]
          %v707 = vld [vmem:[#allocation2 + $0x30] sm:$0xff]
          %v708 = vld [vmem:[#allocation2 + $0x38] sm:$0xff]
          %v709 = vld [vmem:[#allocation2 + $0x40] sm:$0xff]
          %v710 = vld [vmem:[#allocation2 + $0x48] sm:$0xff]
          %v711 = vld [vmem:[#allocation2 + $0x50] sm:$0xff]
          %v712 = vld [vmem:[#allocation2 + $0x58] sm:$0xff]
          %v713 = vld [vmem:[#allocation2 + $0x60] sm:$0xff]
          %v714 = vld [vmem:[#allocation2 + $0x68] sm:$0xff]
          %v715 = vld [vmem:[#allocation2 + $0x70] sm:$0xff]
          %v716 = vld [vmem:[#allocation2 + $0x78] sm:$0xff]
          %v717 = vpack.c.bf16 %v702, %v701
          %v718 = vpack.c.bf16 %v704, %v703
          %v719 = vpack.c.bf16 %v706, %v705
          %v720 = vpack.c.bf16 %v708, %v707
          %v721 = vpack.c.bf16 %v710, %v709
          %v722 = vpack.c.bf16 %v712, %v711
          %v723 = vpack.c.bf16 %v714, %v713
          %v724 = vpack.c.bf16 %v716, %v715
          %v733 = vunpack.c.l.b16 %v717
          %v734 = vunpack.c.h.b16 %v717
          %v735 = vunpack.c.l.b16 %v718
          %v736 = vunpack.c.h.b16 %v718
          %v737 = vunpack.c.l.b16 %v719
          %v738 = vunpack.c.h.b16 %v719
          %v739 = vunpack.c.l.b16 %v720
          %v740 = vunpack.c.h.b16 %v720
          %v741 = vunpack.c.l.b16 %v721
          %v742 = vunpack.c.h.b16 %v721
          %v743 = vunpack.c.l.b16 %v722
          %v744 = vunpack.c.h.b16 %v722
          %v745 = vunpack.c.l.b16 %v723
          %v746 = vunpack.c.h.b16 %v723
          %v747 = vunpack.c.l.b16 %v724
          %v748 = vunpack.c.h.b16 %v724
          %v749 = vpack.c.b16 %v733, %v733
          %v750 = vpack.c.b16 %v734, %v734
          %v751 = vpack.c.b16 %v735, %v735
          %v752 = vpack.c.b16 %v736, %v736
          %v753 = vpack.c.b16 %v737, %v737
          %v754 = vpack.c.b16 %v738, %v738
          %v755 = vpack.c.b16 %v739, %v739
          %v756 = vpack.c.b16 %v740, %v740
          %v757 = vpack.c.b16 %v741, %v741
          %v758 = vpack.c.b16 %v742, %v742
          %v759 = vpack.c.b16 %v743, %v743
          %v760 = vpack.c.b16 %v744, %v744
          %v761 = vpack.c.b16 %v745, %v745
          %v762 = vpack.c.b16 %v746, %v746
          %v763 = vpack.c.b16 %v747, %v747
          %v764 = vpack.c.b16 %v748, %v748
          %781 = vst [vmem:[%s387] sm:$0xf] %v749
          %782 = vst [vmem:[%s387 + $0x4] sm:$0xf] %v750
          %783 = vst [vmem:[%s387 + $0x8] sm:$0xf] %v751
          %784 = vst [vmem:[%s387 + $0xc] sm:$0xf] %v752
          %785 = vst [vmem:[%s387 + $0x10] sm:$0xf] %v753
          %786 = vst [vmem:[%s387 + $0x14] sm:$0xf] %v754
          %787 = vst [vmem:[%s387 + $0x18] sm:$0xf] %v755
          %788 = vst [vmem:[%s387 + $0x1c] sm:$0xf] %v756
          %789 = vst [vmem:[%s387 + $0x20] sm:$0xf] %v757
          %790 = vst [vmem:[%s387 + $0x24] sm:$0xf] %v758
          %791 = vst [vmem:[%s387 + $0x28] sm:$0xf] %v759
          %792 = vst [vmem:[%s387 + $0x2c] sm:$0xf] %v760
          %793 = vst [vmem:[%s387 + $0x30] sm:$0xf] %v761
          %794 = vst [vmem:[%s387 + $0x34] sm:$0xf] %v762
          %795 = vst [vmem:[%s387 + $0x38] sm:$0xf] %v763
          %796 = vst [vmem:[%s387 + $0x3c] sm:$0xf] %v764
          %v797 = vadd.f32 %v701, %v702
          %v798 = vadd.f32 %v797, %v703
          %v799 = vadd.f32 %v798, %v704
          %v800 = vadd.f32 %v799, %v705
          %v801 = vadd.f32 %v800, %v706
          %v802 = vadd.f32 %v801, %v707
          %v803 = vadd.f32 %v802, %v708
          %v804 = vadd.f32 %v803, %v709
          %v805 = vadd.f32 %v804, %v710
          %v806 = vadd.f32 %v805, %v711
          %v807 = vadd.f32 %v806, %v712
          %v808 = vadd.f32 %v807, %v713
          %v809 = vadd.f32 %v808, %v714
          %v810 = vadd.f32 %v809, %v715
          %v811 = vadd.f32 %v810, %v716
          %v812 = vrot.slane %v811, 4
          %v813 = vadd.f32 %v811, %v812
          %v814 = vrot.slane %v813, 2
          %v815 = vadd.f32 %v813, %v814
          %v816 = vrot.slane %v815, 1
          %v817 = vadd.f32 %v815, %v816
          %v818 = vmul.f32 %v701, %v701
          %v819 = vmul.f32 %v702, %v702
          %v820 = vmul.f32 %v703, %v703
          %v821 = vmul.f32 %v704, %v704
          %v822 = vmul.f32 %v705, %v705
          %v823 = vmul.f32 %v706, %v706
          %v824 = vmul.f32 %v707, %v707
          %v825 = vmul.f32 %v708, %v708
          %v826 = vmul.f32 %v709, %v709
          %v827 = vmul.f32 %v710, %v710
          %v828 = vmul.f32 %v711, %v711
          %v829 = vmul.f32 %v712, %v712
          %v830 = vmul.f32 %v713, %v713
          %v831 = vmul.f32 %v714, %v714
          %v832 = vmul.f32 %v715, %v715
          %v833 = vmul.f32 %v716, %v716
          %v834 = vadd.f32 %v818, %v819
          %v835 = vadd.f32 %v834, %v820
          %v836 = vadd.f32 %v835, %v821
          %v837 = vadd.f32 %v836, %v822
          %v838 = vadd.f32 %v837, %v823
          %v839 = vadd.f32 %v838, %v824
          %v840 = vadd.f32 %v839, %v825
          %v841 = vadd.f32 %v840, %v826
          %v842 = vadd.f32 %v841, %v827
          %v843 = vadd.f32 %v842, %v828
          %v844 = vadd.f32 %v843, %v829
          %v845 = vadd.f32 %v844, %v830
          %v846 = vadd.f32 %v845, %v831
          %v847 = vadd.f32 %v846, %v832
          %v848 = vadd.f32 %v847, %v833
          %v849 = vrot.slane %v848, 4
          %v850 = vadd.f32 %v848, %v849
          %v851 = vrot.slane %v850, 2
          %v852 = vadd.f32 %v850, %v851
          %v853 = vrot.slane %v852, 1
          %v854 = vadd.f32 %v852, %v853
          %855 = vst [vmem:[%s395] sm:$0xff] %v817
          %856 = vst [vmem:[%s402] sm:$0xff] %v854
        $region77: #{bottleneck_forward.6} parent=64 // pred_fallthru
          _
        %s857 = smul.u32 16, %s21
        %p858 = scmp.lt.s32.totalorder %s857, 15
        %s859 = scalar_select %p858, %s857, 15
        %p860 = scmp.lt.s32.totalorder %s22, 0
        %s861 = scalar_select %p860, %s22, 0
        %s862 = sadd.s32 %s861, %s859
        %s863 = smul.addr %s862, 4
        %s864 = scalar_lea.vmem %s2, %s863
        %p865 = scmp.lt.s32.totalorder %s21, 0
        %s866 = scalar_select %p865, %s21, 0
        %p867 = scmp.lt.s32.totalorder %s22, 0
        %s868 = scalar_select %p867, %s22, 0
        %s869 = sadd.s32 %s868, %s866
        %s870 = smul.addr %s869, 8
        %s871 = scalar_lea.vmem %s3, %s870
        %p872 = scmp.lt.s32.totalorder %s21, 0
        %s873 = scalar_select %p872, %s21, 0
        %p874 = scmp.lt.s32.totalorder %s22, 0
        %s875 = scalar_select %p874, %s22, 0
        %s876 = sadd.s32 %s875, %s873
        %s877 = smul.addr %s876, 8
        %s878 = scalar_lea.vmem %s4, %s877
        // Predicated region
        $region78: #{bottleneck_forward.6} parent=64 // pred_check
          %p879 = pneg %p111
        $region79: #{bottleneck_forward.6} parent=64 // pred_check_branch
          %881 = sbr.rel (%p879) target = $region81
        $region80: #{bottleneck_forward.6} parent=64 // pred_region
          %s882 = smul.u32 16, %s21
        $region81: #{bottleneck_forward.6} parent=64 // pred_fallthru
          _
        // Predicated region
        $region82: #{bottleneck_forward.6} parent=64 // pred_check
          %p883 = pneg %p139
        $region83: #{bottleneck_forward.6} parent=64 // pred_check_branch
          %885 = sbr.rel (%p883) target = $region85
        $region84: #{bottleneck_forward.6} parent=64 // pred_region
          _
        $region85: #{bottleneck_forward.6} parent=64 // pred_fallthru
          _
        // Predicated region
        $region86: #{bottleneck_forward.6} parent=64 // pred_check
          %p886 = pneg %p167
        $region87: #{bottleneck_forward.6} parent=64 // pred_check_branch
          %888 = sbr.rel (%p886) target = $region89
        $region88: #{bottleneck_forward.6} parent=64 // pred_region
          _
        $region89: #{bottleneck_forward.6} parent=64 // pred_fallthru
          _
        // Predicated region
        $region90: #{bottleneck_forward.6} parent=64 // pred_check
          %p889 = pneg %p111
        $region91: #{bottleneck_forward.6} parent=64 // pred_check_branch
          %891 = sbr.rel (%p889) target = $region93
        $region92: #{bottleneck_forward.6} parent=64 // pred_region
          %s892 = smul.u32 16, %s21
          %p893 = scmp.lt.s32.totalorder %s892, 15
          %s894 = scalar_select %p893, %s892, 15
          %p895 = scmp.lt.s32.totalorder %s22, 0
          %s896 = scalar_select %p895, %s22, 0
          %s897 = sadd.s32 %s896, %s894
          %s898 = smul.addr %s897, 4
          %s899 = scalar_lea.vmem %s2, %s898
        $region93: #{bottleneck_forward.6} parent=64 // pred_fallthru
          _
        // Predicated region
        $region94: #{bottleneck_forward.6} parent=64 // pred_check
          %p900 = pneg %p139
        $region95: #{bottleneck_forward.6} parent=64 // pred_check_branch
          %902 = sbr.rel (%p900) target = $region97
        $region96: #{bottleneck_forward.6} parent=64 // pred_region
          %p903 = scmp.lt.s32.totalorder %s21, 0
          %s904 = scalar_select %p903, %s21, 0
          %p905 = scmp.lt.s32.totalorder %s22, 0
          %s906 = scalar_select %p905, %s22, 0
          %s907 = sadd.s32 %s906, %s904
          %s908 = smul.addr %s907, 8
          %s909 = scalar_lea.vmem %s3, %s908
        $region97: #{bottleneck_forward.6} parent=64 // pred_fallthru
          _
        // Predicated region
        $region98: #{bottleneck_forward.6} parent=64 // pred_check
          %p910 = pneg %p167
        $region99: #{bottleneck_forward.6} parent=64 // pred_check_branch
          %912 = sbr.rel (%p910) target = $region101
        $region100: #{bottleneck_forward.6} parent=64 // pred_region
          %p913 = scmp.lt.s32.totalorder %s21, 0
          %s914 = scalar_select %p913, %s21, 0
          %p915 = scmp.lt.s32.totalorder %s22, 0
          %s916 = scalar_select %p915, %s22, 0
          %s917 = sadd.s32 %s916, %s914
          %s918 = smul.addr %s917, 8
          %s919 = scalar_lea.vmem %s4, %s918
        $region101: #{bottleneck_forward.6} parent=64 // pred_fallthru
          _
      $region65: #{bottleneck_forward.6} parent=5 // pred_fallthru
        _
      %p920 = scmp.le.s32.totalorder 2, %s11
      // Predicated region
      $region102: #{bottleneck_forward.6} parent=5 // pred_check
        %p921 = pneg %p920
      $region103: #{bottleneck_forward.6} parent=5 // pred_check_branch
        %923 = sbr.rel (%p921) target = $region105
      $region104: #{bottleneck_forward.6} parent=5 // pred_region
        %s924 = ssub.s32 %s11, 2
      $region105: #{bottleneck_forward.6} parent=5 // pred_fallthru
        _
    $region6: #{bottleneck_forward.6} parent=1 // loop_footer
      %s15 = sadd.s32 1, %s11
    $region7: #{bottleneck_forward.6} parent=1 // loop_footer_branch
      %10 = sbr.rel target = $region3
    $region8: #{bottleneck_forward.6} parent=1 // loop_exit
      _

// kernel: bottleneck_forward.7
$region0: #{bottleneck_forward.7}
  #allocation0 [shape = 'u32[]', space=smem, size = 0x4, offset = 0x4, fixed_abs, tag = 'smem constant byte address 0x4 - core index']
  #allocation1 [shape = 'u32[144,128]{1,0:T(1,128)}', space=vmem, size = 0x12000, scoped, tag = 'internal scratch']
  #allocation2 [shape = 'f32[128,128]{1,0:T(8,128)}', space=vmem, size = 0x10000, scoped, tag = 'scratch operand']
  %s0 = inlined_call_operand.vmem [shape: bf16[128,128], index: 0, kind: input, shape index: {}]
  %s1 = inlined_call_operand.vmem [shape: bf16[128,128], index: 1, kind: input, shape index: {}]
  %s2 = inlined_call_operand.vmem [shape: f32[1,128], index: 2, kind: input, shape index: {}]
  %s3 = inlined_call_operand.vmem [shape: f32[1,128], index: 3, kind: input, shape index: {}]
  %s4 = inlined_call_operand.vmem [shape: bf16[128,128], index: 4, kind: output, shape index: {0}]
  %s5 = inlined_call_operand.vmem [shape: f32[8,128], index: 5, kind: output, shape index: {1}]
  %s6 = inlined_call_operand.vmem [shape: f32[8,128], index: 6, kind: output, shape index: {2}]
  %7 = xla_tuple %s4, %s5, %s6
  %s8 = sld [smem:[#allocation0]]
  $region50: #{bottleneck_forward.7} parent=0
    _
  %s10 = ssub.s32 1, %s8
  %s11 = scalar_select 0, %s10, %s8
  // Predicated region
  $region2: #{bottleneck_forward.7} parent=0 // pred_check
    _
  $region3: #{bottleneck_forward.7} parent=0 // pred_check_branch
    %13 = sbr.rel (0) target = $region5
  $region4: #{bottleneck_forward.7} parent=0 // pred_region
    _
  $region5: #{bottleneck_forward.7} parent=0 // pred_fallthru
    _
  // Predicated region
  $region6: #{bottleneck_forward.7} parent=0 // pred_check
    _
  $region7: #{bottleneck_forward.7} parent=0 // pred_check_branch
    %15 = sbr.rel (0) target = $region9
  $region8: #{bottleneck_forward.7} parent=0 // pred_region
    _
  $region9: #{bottleneck_forward.7} parent=0 // pred_fallthru
    _
  // Predicated region
  $region10: #{bottleneck_forward.7} parent=0 // pred_check
    _
  $region11: #{bottleneck_forward.7} parent=0 // pred_check_branch
    %17 = sbr.rel (0) target = $region13
  $region12: #{bottleneck_forward.7} parent=0 // pred_region
    _
  $region13: #{bottleneck_forward.7} parent=0 // pred_fallthru
    _
  // Predicated region
  $region14: #{bottleneck_forward.7} parent=0 // pred_check
    _
  $region15: #{bottleneck_forward.7} parent=0 // pred_check_branch
    %19 = sbr.rel (0) target = $region17
  $region16: #{bottleneck_forward.7} parent=0 // pred_region
    _
  $region17: #{bottleneck_forward.7} parent=0 // pred_fallthru
    _
  %p21 = scmp.eq.s32.totalorder 0, 0
  // Predicated region
  $region18: #{bottleneck_forward.7} parent=0 // pred_check
    %p22 = pneg %p21
  $region19: #{bottleneck_forward.7} parent=0 // pred_check_branch
    %24 = sbr.rel (%p22) target = $region21
  $region20: #{bottleneck_forward.7} parent=0 // pred_region
    %25 = vst [vmem:[#allocation2] sm:$0xff] 0.0
    %26 = vst [vmem:[#allocation2 + $0x8] sm:$0xff] 0.0
    %27 = vst [vmem:[#allocation2 + $0x10] sm:$0xff] 0.0
    %28 = vst [vmem:[#allocation2 + $0x18] sm:$0xff] 0.0
    %29 = vst [vmem:[#allocation2 + $0x20] sm:$0xff] 0.0
    %30 = vst [vmem:[#allocation2 + $0x28] sm:$0xff] 0.0
    %31 = vst [vmem:[#allocation2 + $0x30] sm:$0xff] 0.0
    %32 = vst [vmem:[#allocation2 + $0x38] sm:$0xff] 0.0
    %33 = vst [vmem:[#allocation2 + $0x40] sm:$0xff] 0.0
    %34 = vst [vmem:[#allocation2 + $0x48] sm:$0xff] 0.0
    %35 = vst [vmem:[#allocation2 + $0x50] sm:$0xff] 0.0
    %36 = vst [vmem:[#allocation2 + $0x58] sm:$0xff] 0.0
    %37 = vst [vmem:[#allocation2 + $0x60] sm:$0xff] 0.0
    %38 = vst [vmem:[#allocation2 + $0x68] sm:$0xff] 0.0
    %39 = vst [vmem:[#allocation2 + $0x70] sm:$0xff] 0.0
    %40 = vst [vmem:[#allocation2 + $0x78] sm:$0xff] 0.0
  $region21: #{bottleneck_forward.7} parent=0 // pred_fallthru
    _
  %v41 = vld [vmem:[%s0] sm:$0xf]
  %v42 = vld [vmem:[%s0 + $0x4] sm:$0xf]
  %v43 = vld [vmem:[%s0 + $0x8] sm:$0xf]
  %v44 = vld [vmem:[%s0 + $0xc] sm:$0xf]
  %v45 = vld [vmem:[%s0 + $0x10] sm:$0xf]
  %v46 = vld [vmem:[%s0 + $0x14] sm:$0xf]
  %v47 = vld [vmem:[%s0 + $0x18] sm:$0xf]
  %v48 = vld [vmem:[%s0 + $0x1c] sm:$0xf]
  %v49 = vld [vmem:[%s0 + $0x20] sm:$0xf]
  %v50 = vld [vmem:[%s0 + $0x24] sm:$0xf]
  %v51 = vld [vmem:[%s0 + $0x28] sm:$0xf]
  %v52 = vld [vmem:[%s0 + $0x2c] sm:$0xf]
  %v53 = vld [vmem:[%s0 + $0x30] sm:$0xf]
  %v54 = vld [vmem:[%s0 + $0x34] sm:$0xf]
  %v55 = vld [vmem:[%s0 + $0x38] sm:$0xf]
  %v56 = vld [vmem:[%s0 + $0x3c] sm:$0xf]
  %v57 = vunpack.c.l.bf16 %v41
  %v58 = vunpack.c.l.bf16 %v42
  %v59 = vunpack.c.l.bf16 %v43
  %v60 = vunpack.c.l.bf16 %v44
  %v61 = vunpack.c.l.bf16 %v45
  %v62 = vunpack.c.l.bf16 %v46
  %v63 = vunpack.c.l.bf16 %v47
  %v64 = vunpack.c.l.bf16 %v48
  %v65 = vunpack.c.l.bf16 %v49
  %v66 = vunpack.c.l.bf16 %v50
  %v67 = vunpack.c.l.bf16 %v51
  %v68 = vunpack.c.l.bf16 %v52
  %v69 = vunpack.c.l.bf16 %v53
  %v70 = vunpack.c.l.bf16 %v54
  %v71 = vunpack.c.l.bf16 %v55
  %v72 = vunpack.c.l.bf16 %v56
  %v73 = vld [vmem:[%s2] sm:$0x1]
  %v75 = vlaneseq
  %v76 = vshrl.u32 %v75, 7
  %v77 = vsub.s32 0, %v76
  %v78 = vrot.slane %v73, %v77
  %v80 = vmul.f32 %v57, %v78
  %v81 = vmul.f32 %v58, %v78
  %v82 = vmul.f32 %v59, %v78
  %v83 = vmul.f32 %v60, %v78
  %v84 = vmul.f32 %v61, %v78
  %v85 = vmul.f32 %v62, %v78
  %v86 = vmul.f32 %v63, %v78
  %v87 = vmul.f32 %v64, %v78
  %v88 = vmul.f32 %v65, %v78
  %v89 = vmul.f32 %v66, %v78
  %v90 = vmul.f32 %v67, %v78
  %v91 = vmul.f32 %v68, %v78
  %v92 = vmul.f32 %v69, %v78
  %v93 = vmul.f32 %v70, %v78
  %v94 = vmul.f32 %v71, %v78
  %v95 = vmul.f32 %v72, %v78
  %v96 = vld [vmem:[%s3] sm:$0x1]
  %v98 = vlaneseq
  %v99 = vshrl.u32 %v98, 7
  %v100 = vsub.s32 0, %v99
  %v101 = vrot.slane %v96, %v100
  %v103 = vadd.f32 %v80, %v101
  %v104 = vadd.f32 %v81, %v101
  %v105 = vadd.f32 %v82, %v101
  %v106 = vadd.f32 %v83, %v101
  %v107 = vadd.f32 %v84, %v101
  %v108 = vadd.f32 %v85, %v101
  %v109 = vadd.f32 %v86, %v101
  %v110 = vadd.f32 %v87, %v101
  %v111 = vadd.f32 %v88, %v101
  %v112 = vadd.f32 %v89, %v101
  %v113 = vadd.f32 %v90, %v101
  %v114 = vadd.f32 %v91, %v101
  %v115 = vadd.f32 %v92, %v101
  %v116 = vadd.f32 %v93, %v101
  %v117 = vadd.f32 %v94, %v101
  %v118 = vadd.f32 %v95, %v101
  %v119 = vmax.f32 %v103, 0.0
  %v120 = vmax.f32 %v104, 0.0
  %v121 = vmax.f32 %v105, 0.0
  %v122 = vmax.f32 %v106, 0.0
  %v123 = vmax.f32 %v107, 0.0
  %v124 = vmax.f32 %v108, 0.0
  %v125 = vmax.f32 %v109, 0.0
  %v126 = vmax.f32 %v110, 0.0
  %v127 = vmax.f32 %v111, 0.0
  %v128 = vmax.f32 %v112, 0.0
  %v129 = vmax.f32 %v113, 0.0
  %v130 = vmax.f32 %v114, 0.0
  %v131 = vmax.f32 %v115, 0.0
  %v132 = vmax.f32 %v116, 0.0
  %v133 = vmax.f32 %v117, 0.0
  %v134 = vmax.f32 %v118, 0.0
  %v135 = vlaneseq
  %v136 = vshrl.u32 %v135, 7
  %v137 = vadd.s32 %v136, 8
  %v138 = vadd.s32 %v136, 16
  %v139 = vadd.s32 %v136, 24
  %v140 = vadd.s32 %v136, 32
  %v141 = vadd.s32 %v136, 40
  %v142 = vadd.s32 %v136, 48
  %v143 = vadd.s32 %v136, 56
  %v144 = vadd.s32 %v136, 64
  %v145 = vadd.s32 %v136, 72
  %v146 = vadd.s32 %v136, 80
  %v147 = vadd.s32 %v136, 88
  %v148 = vadd.s32 %v136, 96
  %v149 = vadd.s32 %v136, 104
  %v150 = vadd.s32 %v136, 112
  %v151 = vadd.s32 %v136, 120
  %s152 = smul.u32 0, 128
  %v153 = vstv %s152
  %v154 = vadd.s32 %v136, %v153
  %v155 = vadd.s32 %v137, %v153
  %v156 = vadd.s32 %v138, %v153
  %v157 = vadd.s32 %v139, %v153
  %v158 = vadd.s32 %v140, %v153
  %v159 = vadd.s32 %v141, %v153
  %v160 = vadd.s32 %v142, %v153
  %v161 = vadd.s32 %v143, %v153
  %v162 = vadd.s32 %v144, %v153
  %v163 = vadd.s32 %v145, %v153
  %v164 = vadd.s32 %v146, %v153
  %v165 = vadd.s32 %v147, %v153
  %v166 = vadd.s32 %v148, %v153
  %v167 = vadd.s32 %v149, %v153
  %v168 = vadd.s32 %v150, %v153
  %v169 = vadd.s32 %v151, %v153
  %vm170 = vcmp.lt.s32.totalorder %v154, 128
  %vm171 = vcmp.lt.s32.totalorder %v155, 128
  %vm172 = vcmp.lt.s32.totalorder %v156, 128
  %vm173 = vcmp.lt.s32.totalorder %v157, 128
  %vm174 = vcmp.lt.s32.totalorder %v158, 128
  %vm175 = vcmp.lt.s32.totalorder %v159, 128
  %vm176 = vcmp.lt.s32.totalorder %v160, 128
  %vm177 = vcmp.lt.s32.totalorder %v161, 128
  %vm178 = vcmp.lt.s32.totalorder %v162, 128
  %vm179 = vcmp.lt.s32.totalorder %v163, 128
  %vm180 = vcmp.lt.s32.totalorder %v164, 128
  %vm181 = vcmp.lt.s32.totalorder %v165, 128
  %vm182 = vcmp.lt.s32.totalorder %v166, 128
  %vm183 = vcmp.lt.s32.totalorder %v167, 128
  %vm184 = vcmp.lt.s32.totalorder %v168, 128
  %vm185 = vcmp.lt.s32.totalorder %v169, 128
  %v186 = vsel %vm170, %v119, 0.0
  %v187 = vsel %vm171, %v120, 0.0
  %v188 = vsel %vm172, %v121, 0.0
  %v189 = vsel %vm173, %v122, 0.0
  %v190 = vsel %vm174, %v123, 0.0
  %v191 = vsel %vm175, %v124, 0.0
  %v192 = vsel %vm176, %v125, 0.0
  %v193 = vsel %vm177, %v126, 0.0
  %v194 = vsel %vm178, %v127, 0.0
  %v195 = vsel %vm179, %v128, 0.0
  %v196 = vsel %vm180, %v129, 0.0
  %v197 = vsel %vm181, %v130, 0.0
  %v198 = vsel %vm182, %v131, 0.0
  %v199 = vsel %vm183, %v132, 0.0
  %v200 = vsel %vm184, %v133, 0.0
  %v201 = vsel %vm185, %v134, 0.0
  %v202 = vpack.c.bf16 %v187, %v186
  %v203 = vpack.c.bf16 %v189, %v188
  %v204 = vpack.c.bf16 %v191, %v190
  %v205 = vpack.c.bf16 %v193, %v192
  %v206 = vpack.c.bf16 %v195, %v194
  %v207 = vpack.c.bf16 %v197, %v196
  %v208 = vpack.c.bf16 %v199, %v198
  %v209 = vpack.c.bf16 %v201, %v200
  %v210 = vld [vmem:[#allocation2] sm:$0xff]
  %v211 = vld [vmem:[#allocation2 + $0x8] sm:$0xff]
  %v212 = vld [vmem:[#allocation2 + $0x10] sm:$0xff]
  %v213 = vld [vmem:[#allocation2 + $0x18] sm:$0xff]
  %v214 = vld [vmem:[#allocation2 + $0x20] sm:$0xff]
  %v215 = vld [vmem:[#allocation2 + $0x28] sm:$0xff]
  %v216 = vld [vmem:[#allocation2 + $0x30] sm:$0xff]
  %v217 = vld [vmem:[#allocation2 + $0x38] sm:$0xff]
  %v218 = vld [vmem:[#allocation2 + $0x40] sm:$0xff]
  %v219 = vld [vmem:[#allocation2 + $0x48] sm:$0xff]
  %v220 = vld [vmem:[#allocation2 + $0x50] sm:$0xff]
  %v221 = vld [vmem:[#allocation2 + $0x58] sm:$0xff]
  %v222 = vld [vmem:[#allocation2 + $0x60] sm:$0xff]
  %v223 = vld [vmem:[#allocation2 + $0x68] sm:$0xff]
  %v224 = vld [vmem:[#allocation2 + $0x70] sm:$0xff]
  %v225 = vld [vmem:[#allocation2 + $0x78] sm:$0xff]
  %v226 = vld [vmem:[%s1] sm:$0xf]
  %v227 = vld [vmem:[%s1 + $0x4] sm:$0xf]
  %v228 = vld [vmem:[%s1 + $0x8] sm:$0xf]
  %v229 = vld [vmem:[%s1 + $0xc] sm:$0xf]
  %v230 = vld [vmem:[%s1 + $0x10] sm:$0xf]
  %v231 = vld [vmem:[%s1 + $0x14] sm:$0xf]
  %v232 = vld [vmem:[%s1 + $0x18] sm:$0xf]
  %v233 = vld [vmem:[%s1 + $0x1c] sm:$0xf]
  %v234 = vld [vmem:[%s1 + $0x20] sm:$0xf]
  %v235 = vld [vmem:[%s1 + $0x24] sm:$0xf]
  %v236 = vld [vmem:[%s1 + $0x28] sm:$0xf]
  %v237 = vld [vmem:[%s1 + $0x2c] sm:$0xf]
  %v238 = vld [vmem:[%s1 + $0x30] sm:$0xf]
  %v239 = vld [vmem:[%s1 + $0x34] sm:$0xf]
  %v240 = vld [vmem:[%s1 + $0x38] sm:$0xf]
  %v241 = vld [vmem:[%s1 + $0x3c] sm:$0xf]
  %v258 = vunpack.c.l.b16 %v226
  %v259 = vunpack.c.l.b16 %v227
  %v260 = vunpack.c.l.b16 %v228
  %v261 = vunpack.c.l.b16 %v229
  %v262 = vunpack.c.l.b16 %v230
  %v263 = vunpack.c.l.b16 %v231
  %v264 = vunpack.c.l.b16 %v232
  %v265 = vunpack.c.l.b16 %v233
  %v266 = vunpack.c.l.b16 %v234
  %v267 = vunpack.c.l.b16 %v235
  %v268 = vunpack.c.l.b16 %v236
  %v269 = vunpack.c.l.b16 %v237
  %v270 = vunpack.c.l.b16 %v238
  %v271 = vunpack.c.l.b16 %v239
  %v272 = vunpack.c.l.b16 %v240
  %v273 = vunpack.c.l.b16 %v241
  %v274 = vpack.c.b16 %v259, %v258
  %v275 = vpack.c.b16 %v261, %v260
  %v276 = vpack.c.b16 %v263, %v262
  %v277 = vpack.c.b16 %v265, %v264
  %v278 = vpack.c.b16 %v267, %v266
  %v279 = vpack.c.b16 %v269, %v268
  %v280 = vpack.c.b16 %v271, %v270
  %v281 = vpack.c.b16 %v273, %v272
  %290 = vmatprep.subr.bf16.mxu0 0
  %291 = vmatpush1.bf16.msra.mxu0 %v274
  %292 = vmatprep.subr.bf16.mxu0 0
  %293 = vmatpush1.bf16.msra.mxu0 %v275
  %294 = vmatprep.subr.bf16.mxu0 0
  %295 = vmatpush1.bf16.msra.mxu0 %v276
  %296 = vmatprep.subr.bf16.mxu0 0
  %297 = vmatpush1.bf16.msra.mxu0 %v277
  %298 = vmatprep.subr.bf16.mxu0 0
  %299 = vmatpush1.bf16.msra.mxu0 %v278
  %300 = vmatprep.subr.bf16.mxu0 0
  %301 = vmatpush1.bf16.msra.mxu0 %v279
  %302 = vmatprep.subr.bf16.mxu0 0
  %303 = vmatpush1.bf16.msra.mxu0 %v280
  %304 = vmatprep.subr.bf16.mxu0 0
  %305 = vmatpush1.bf16.msra.mxu0 %v281
  %306 = vmatprep.subr.bf16.mxu0 0
  %307 = vmatpush1.bf16.msra.mxu0 0
  %308 = vmatprep.subr.bf16.mxu0 0
  %309 = vmatpush1.bf16.msra.mxu0 0
  %310 = vmatprep.subr.bf16.mxu0 0
  %311 = vmatpush1.bf16.msra.mxu0 0
  %312 = vmatprep.subr.bf16.mxu0 0
  %313 = vmatpush1.bf16.msra.mxu0 0
  %314 = vmatprep.subr.bf16.mxu0 0
  %315 = vmatpush1.bf16.msra.mxu0 0
  %316 = vmatprep.subr.bf16.mxu0 0
  %317 = vmatpush1.bf16.msra.mxu0 0
  %318 = vmatprep.subr.bf16.mxu0 0
  %319 = vmatpush1.bf16.msra.mxu0 0
  %320 = vmatprep.subr.bf16.mxu0 0
  %321 = vmatpush1.bf16.msra.mxu0 0
  %322 = vmatprep.mubr.bf16.mxu0 0
  %323 = vmatmul.mubr.bf16.gmra.mrb[0].mxu0 %v202
  %v324 = vpop.f32.mrb[0].mxu0
  %v325 = vadd.f32 0.0, %v324
  %v326 = vpop.f32.mrb[0].mxu0
  %v327 = vpop.f32.mrb[0].mxu0
  %v328 = vadd.f32 0.0, %v327
  %v329 = vpop.f32.mrb[0].mxu0
  %330 = vmatprep.mubr.bf16.mxu0 0
  %331 = vmatmul.mubr.bf16.gmra.mrb[0].mxu0 %v203
  %v332 = vpop.f32.mrb[0].mxu0
  %v333 = vadd.f32 0.0, %v332
  %v334 = vpop.f32.mrb[0].mxu0
  %v335 = vpop.f32.mrb[0].mxu0
  %v336 = vadd.f32 0.0, %v335
  %v337 = vpop.f32.mrb[0].mxu0
  %338 = vmatprep.mubr.bf16.mxu0 0
  %339 = vmatmul.mubr.bf16.gmra.mrb[0].mxu0 %v204
  %v340 = vpop.f32.mrb[0].mxu0
  %v341 = vadd.f32 0.0, %v340
  %v342 = vpop.f32.mrb[0].mxu0
  %v343 = vpop.f32.mrb[0].mxu0
  %v344 = vadd.f32 0.0, %v343
  %v345 = vpop.f32.mrb[0].mxu0
  %346 = vmatprep.mubr.bf16.mxu0 0
  %347 = vmatmul.mubr.bf16.gmra.mrb[0].mxu0 %v205
  %v348 = vpop.f32.mrb[0].mxu0
  %v349 = vadd.f32 0.0, %v348
  %v350 = vpop.f32.mrb[0].mxu0
  %v351 = vpop.f32.mrb[0].mxu0
  %v352 = vadd.f32 0.0, %v351
  %v353 = vpop.f32.mrb[0].mxu0
  %354 = vmatprep.mubr.bf16.mxu0 0
  %355 = vmatmul.mubr.bf16.gmra.mrb[0].mxu0 %v206
  %v356 = vpop.f32.mrb[0].mxu0
  %v357 = vadd.f32 0.0, %v356
  %v358 = vpop.f32.mrb[0].mxu0
  %v359 = vpop.f32.mrb[0].mxu0
  %v360 = vadd.f32 0.0, %v359
  %v361 = vpop.f32.mrb[0].mxu0
  %362 = vmatprep.mubr.bf16.mxu0 0
  %363 = vmatmul.mubr.bf16.gmra.mrb[0].mxu0 %v207
  %v364 = vpop.f32.mrb[0].mxu0
  %v365 = vadd.f32 0.0, %v364
  %v366 = vpop.f32.mrb[0].mxu0
  %v367 = vpop.f32.mrb[0].mxu0
  %v368 = vadd.f32 0.0, %v367
  %v369 = vpop.f32.mrb[0].mxu0
  %370 = vmatprep.mubr.bf16.mxu0 0
  %371 = vmatmul.mubr.bf16.gmra.mrb[0].mxu0 %v208
  %v372 = vpop.f32.mrb[0].mxu0
  %v373 = vadd.f32 0.0, %v372
  %v374 = vpop.f32.mrb[0].mxu0
  %v375 = vpop.f32.mrb[0].mxu0
  %v376 = vadd.f32 0.0, %v375
  %v377 = vpop.f32.mrb[0].mxu0
  %378 = vmatprep.mubr.bf16.mxu0 0
  %379 = vmatmul.mubr.bf16.gmra.mrb[0].mxu0 %v209
  %v380 = vpop.f32.mrb[0].mxu0
  %v381 = vadd.f32 0.0, %v380
  %v382 = vpop.f32.mrb[0].mxu0
  %v383 = vpop.f32.mrb[0].mxu0
  %v384 = vadd.f32 0.0, %v383
  %v385 = vpop.f32.mrb[0].mxu0
  %386 = vdwg.mxu0
  %v387 = vadd.f32 %v210, %v325
  %v388 = vadd.f32 %v211, %v328
  %v389 = vadd.f32 %v212, %v333
  %v390 = vadd.f32 %v213, %v336
  %v391 = vadd.f32 %v214, %v341
  %v392 = vadd.f32 %v215, %v344
  %v393 = vadd.f32 %v216, %v349
  %v394 = vadd.f32 %v217, %v352
  %v395 = vadd.f32 %v218, %v357
  %v396 = vadd.f32 %v219, %v360
  %v397 = vadd.f32 %v220, %v365
  %v398 = vadd.f32 %v221, %v368
  %v399 = vadd.f32 %v222, %v373
  %v400 = vadd.f32 %v223, %v376
  %v401 = vadd.f32 %v224, %v381
  %v402 = vadd.f32 %v225, %v384
  %403 = vst [vmem:[#allocation2] sm:$0xff] %v387
  %404 = vst [vmem:[#allocation2 + $0x8] sm:$0xff] %v388
  %405 = vst [vmem:[#allocation2 + $0x10] sm:$0xff] %v389
  %406 = vst [vmem:[#allocation2 + $0x18] sm:$0xff] %v390
  %407 = vst [vmem:[#allocation2 + $0x20] sm:$0xff] %v391
  %408 = vst [vmem:[#allocation2 + $0x28] sm:$0xff] %v392
  %409 = vst [vmem:[#allocation2 + $0x30] sm:$0xff] %v393
  %410 = vst [vmem:[#allocation2 + $0x38] sm:$0xff] %v394
  %411 = vst [vmem:[#allocation2 + $0x40] sm:$0xff] %v395
  %412 = vst [vmem:[#allocation2 + $0x48] sm:$0xff] %v396
  %413 = vst [vmem:[#allocation2 + $0x50] sm:$0xff] %v397
  %414 = vst [vmem:[#allocation2 + $0x58] sm:$0xff] %v398
  %415 = vst [vmem:[#allocation2 + $0x60] sm:$0xff] %v399
  %416 = vst [vmem:[#allocation2 + $0x68] sm:$0xff] %v400
  %417 = vst [vmem:[#allocation2 + $0x70] sm:$0xff] %v401
  %418 = vst [vmem:[#allocation2 + $0x78] sm:$0xff] %v402
  // Predicated region
  $region22: #{bottleneck_forward.7} parent=0 // pred_check
    %p419 = pneg %p21
  $region23: #{bottleneck_forward.7} parent=0 // pred_check_branch
    %421 = sbr.rel (%p419) target = $region25
  $region24: #{bottleneck_forward.7} parent=0 // pred_region
    %v422 = vld [vmem:[#allocation2] sm:$0xff]
    %v423 = vld [vmem:[#allocation2 + $0x8] sm:$0xff]
    %v424 = vld [vmem:[#allocation2 + $0x10] sm:$0xff]
    %v425 = vld [vmem:[#allocation2 + $0x18] sm:$0xff]
    %v426 = vld [vmem:[#allocation2 + $0x20] sm:$0xff]
    %v427 = vld [vmem:[#allocation2 + $0x28] sm:$0xff]
    %v428 = vld [vmem:[#allocation2 + $0x30] sm:$0xff]
    %v429 = vld [vmem:[#allocation2 + $0x38] sm:$0xff]
    %v430 = vld [vmem:[#allocation2 + $0x40] sm:$0xff]
    %v431 = vld [vmem:[#allocation2 + $0x48] sm:$0xff]
    %v432 = vld [vmem:[#allocation2 + $0x50] sm:$0xff]
    %v433 = vld [vmem:[#allocation2 + $0x58] sm:$0xff]
    %v434 = vld [vmem:[#allocation2 + $0x60] sm:$0xff]
    %v435 = vld [vmem:[#allocation2 + $0x68] sm:$0xff]
    %v436 = vld [vmem:[#allocation2 + $0x70] sm:$0xff]
    %v437 = vld [vmem:[#allocation2 + $0x78] sm:$0xff]
    %v438 = vpack.c.bf16 %v423, %v422
    %v439 = vpack.c.bf16 %v425, %v424
    %v440 = vpack.c.bf16 %v427, %v426
    %v441 = vpack.c.bf16 %v429, %v428
    %v442 = vpack.c.bf16 %v431, %v430
    %v443 = vpack.c.bf16 %v433, %v432
    %v444 = vpack.c.bf16 %v435, %v434
    %v445 = vpack.c.bf16 %v437, %v436
    %v454 = vunpack.c.l.b16 %v438
    %v455 = vunpack.c.h.b16 %v438
    %v456 = vunpack.c.l.b16 %v439
    %v457 = vunpack.c.h.b16 %v439
    %v458 = vunpack.c.l.b16 %v440
    %v459 = vunpack.c.h.b16 %v440
    %v460 = vunpack.c.l.b16 %v441
    %v461 = vunpack.c.h.b16 %v441
    %v462 = vunpack.c.l.b16 %v442
    %v463 = vunpack.c.h.b16 %v442
    %v464 = vunpack.c.l.b16 %v443
    %v465 = vunpack.c.h.b16 %v443
    %v466 = vunpack.c.l.b16 %v444
    %v467 = vunpack.c.h.b16 %v444
    %v468 = vunpack.c.l.b16 %v445
    %v469 = vunpack.c.h.b16 %v445
    %v470 = vpack.c.b16 %v454, %v454
    %v471 = vpack.c.b16 %v455, %v455
    %v472 = vpack.c.b16 %v456, %v456
    %v473 = vpack.c.b16 %v457, %v457
    %v474 = vpack.c.b16 %v458, %v458
    %v475 = vpack.c.b16 %v459, %v459
    %v476 = vpack.c.b16 %v460, %v460
    %v477 = vpack.c.b16 %v461, %v461
    %v478 = vpack.c.b16 %v462, %v462
    %v479 = vpack.c.b16 %v463, %v463
    %v480 = vpack.c.b16 %v464, %v464
    %v481 = vpack.c.b16 %v465, %v465
    %v482 = vpack.c.b16 %v466, %v466
    %v483 = vpack.c.b16 %v467, %v467
    %v484 = vpack.c.b16 %v468, %v468
    %v485 = vpack.c.b16 %v469, %v469
    %502 = vst [vmem:[%s4] sm:$0xf] %v470
    %503 = vst [vmem:[%s4 + $0x4] sm:$0xf] %v471
    %504 = vst [vmem:[%s4 + $0x8] sm:$0xf] %v472
    %505 = vst [vmem:[%s4 + $0xc] sm:$0xf] %v473
    %506 = vst [vmem:[%s4 + $0x10] sm:$0xf] %v474
    %507 = vst [vmem:[%s4 + $0x14] sm:$0xf] %v475
    %508 = vst [vmem:[%s4 + $0x18] sm:$0xf] %v476
    %509 = vst [vmem:[%s4 + $0x1c] sm:$0xf] %v477
    %510 = vst [vmem:[%s4 + $0x20] sm:$0xf] %v478
    %511 = vst [vmem:[%s4 + $0x24] sm:$0xf] %v479
    %512 = vst [vmem:[%s4 + $0x28] sm:$0xf] %v480
    %513 = vst [vmem:[%s4 + $0x2c] sm:$0xf] %v481
    %514 = vst [vmem:[%s4 + $0x30] sm:$0xf] %v482
    %515 = vst [vmem:[%s4 + $0x34] sm:$0xf] %v483
    %516 = vst [vmem:[%s4 + $0x38] sm:$0xf] %v484
    %517 = vst [vmem:[%s4 + $0x3c] sm:$0xf] %v485
    %v518 = vadd.f32 %v422, %v423
    %v519 = vadd.f32 %v518, %v424
    %v520 = vadd.f32 %v519, %v425
    %v521 = vadd.f32 %v520, %v426
    %v522 = vadd.f32 %v521, %v427
    %v523 = vadd.f32 %v522, %v428
    %v524 = vadd.f32 %v523, %v429
    %v525 = vadd.f32 %v524, %v430
    %v526 = vadd.f32 %v525, %v431
    %v527 = vadd.f32 %v526, %v432
    %v528 = vadd.f32 %v527, %v433
    %v529 = vadd.f32 %v528, %v434
    %v530 = vadd.f32 %v529, %v435
    %v531 = vadd.f32 %v530, %v436
    %v532 = vadd.f32 %v531, %v437
    %v533 = vrot.slane %v532, 4
    %v534 = vadd.f32 %v532, %v533
    %v535 = vrot.slane %v534, 2
    %v536 = vadd.f32 %v534, %v535
    %v537 = vrot.slane %v536, 1
    %v538 = vadd.f32 %v536, %v537
    %v539 = vmul.f32 %v422, %v422
    %v540 = vmul.f32 %v423, %v423
    %v541 = vmul.f32 %v424, %v424
    %v542 = vmul.f32 %v425, %v425
    %v543 = vmul.f32 %v426, %v426
    %v544 = vmul.f32 %v427, %v427
    %v545 = vmul.f32 %v428, %v428
    %v546 = vmul.f32 %v429, %v429
    %v547 = vmul.f32 %v430, %v430
    %v548 = vmul.f32 %v431, %v431
    %v549 = vmul.f32 %v432, %v432
    %v550 = vmul.f32 %v433, %v433
    %v551 = vmul.f32 %v434, %v434
    %v552 = vmul.f32 %v435, %v435
    %v553 = vmul.f32 %v436, %v436
    %v554 = vmul.f32 %v437, %v437
    %v555 = vadd.f32 %v539, %v540
    %v556 = vadd.f32 %v555, %v541
    %v557 = vadd.f32 %v556, %v542
    %v558 = vadd.f32 %v557, %v543
    %v559 = vadd.f32 %v558, %v544
    %v560 = vadd.f32 %v559, %v545
    %v561 = vadd.f32 %v560, %v546
    %v562 = vadd.f32 %v561, %v547
    %v563 = vadd.f32 %v562, %v548
    %v564 = vadd.f32 %v563, %v549
    %v565 = vadd.f32 %v564, %v550
    %v566 = vadd.f32 %v565, %v551
    %v567 = vadd.f32 %v566, %v552
    %v568 = vadd.f32 %v567, %v553
    %v569 = vadd.f32 %v568, %v554
    %v570 = vrot.slane %v569, 4
    %v571 = vadd.f32 %v569, %v570
    %v572 = vrot.slane %v571, 2
    %v573 = vadd.f32 %v571, %v572
    %v574 = vrot.slane %v573, 1
    %v575 = vadd.f32 %v573, %v574
    %576 = vst [vmem:[%s5] sm:$0xff] %v538
    %577 = vst [vmem:[%s6] sm:$0xff] %v575
  $region25: #{bottleneck_forward.7} parent=0 // pred_fallthru
    _
  // Predicated region
  $region26: #{bottleneck_forward.7} parent=0 // pred_check
    _
  $region27: #{bottleneck_forward.7} parent=0 // pred_check_branch
    %579 = sbr.rel (0) target = $region29
  $region28: #{bottleneck_forward.7} parent=0 // pred_region
    _
  $region29: #{bottleneck_forward.7} parent=0 // pred_fallthru
    _
  // Predicated region
  $region30: #{bottleneck_forward.7} parent=0 // pred_check
    _
  $region31: #{bottleneck_forward.7} parent=0 // pred_check_branch
    %581 = sbr.rel (0) target = $region33
  $region32: #{bottleneck_forward.7} parent=0 // pred_region
    _
  $region33: #{bottleneck_forward.7} parent=0 // pred_fallthru
    _
  // Predicated region
  $region34: #{bottleneck_forward.7} parent=0 // pred_check
    _
  $region35: #{bottleneck_forward.7} parent=0 // pred_check_branch
    %583 = sbr.rel (0) target = $region37
  $region36: #{bottleneck_forward.7} parent=0 // pred_region
    _
  $region37: #{bottleneck_forward.7} parent=0 // pred_fallthru
    _
  // Predicated region
  $region38: #{bottleneck_forward.7} parent=0 // pred_check
    _
  $region39: #{bottleneck_forward.7} parent=0 // pred_check_branch
    %585 = sbr.rel (0) target = $region41
  $region40: #{bottleneck_forward.7} parent=0 // pred_region
    _
  $region41: #{bottleneck_forward.7} parent=0 // pred_fallthru
    _
  // Predicated region
  $region42: #{bottleneck_forward.7} parent=0 // pred_check
    _
  $region43: #{bottleneck_forward.7} parent=0 // pred_check_branch
    %587 = sbr.rel (0) target = $region45
  $region44: #{bottleneck_forward.7} parent=0 // pred_region
    _
  $region45: #{bottleneck_forward.7} parent=0 // pred_fallthru
    _
  // Predicated region
  $region46: #{bottleneck_forward.7} parent=0 // pred_check
    _
  $region47: #{bottleneck_forward.7} parent=0 // pred_check_branch
    %589 = sbr.rel (0) target = $region49
  $region48: #{bottleneck_forward.7} parent=0 // pred_region
    _
  $region49: #{bottleneck_forward.7} parent=0 // pred_fallthru
    _

</llo_original>
